<compile_context>
chip_gen: v6e
topology: v6e:2x2x1
jax: 0.10.0
libtpu: 0.0.40
codegen_flags: <defaults>
</compile_context>

<pallas_src>
import jax
import jax.numpy as jnp
import numpy as np
from jax.experimental import pallas as pl
from jax.experimental.pallas import tpu as pltpu


def _encoder_gru_kernel(x_ref, lens_ref,
                        wih_ref, bih_ref,
                        whh_f_ref, bhh_f_ref,
                        whh_b_ref, bhh_b_ref,
                        out_ref, hid_ref,
                        gi_scr):
    """Bidirectional masked GRU, fully VMEM-resident.

    x_ref    : (T*Bp, Hp)   embedded inputs, time-major, batch flattened in
    lens_ref : (Bp, 1)      int32 sequence lengths (0 for padded batch rows)
    wih_ref  : (Hp, 6*Hp)   [Wih_f^T | Wih_b^T], per-gate lane-aligned
    bih_ref  : (1, 6*Hp)
    whh_*    : (Hp, 3*Hp)   per-direction recurrent weights (transposed)
    bhh_*    : (1, 3*Hp)
    out_ref  : (T, Bp, Hp)  fwd + bwd outputs, padded steps are zeros
    hid_ref  : (2, Bp, Hp)  final hidden states [fwd, bwd]
    gi_scr   : (T*Bp, 6*Hp) precomputed input projections (scratch)
    """
    T, Bp, Hp = out_ref.shape
    G = 3 * Hp

    # ---- Hoisted input projection: one big MXU matmul for all timesteps and
    # ---- both directions (independent of h, so off the serial chain).
    gi_scr[...] = (
        jnp.dot(x_ref[...], wih_ref[...], preferred_element_type=jnp.float32)
        + bih_ref[...])

    # ---- Hoist weight / bias / length loads out of the recurrence.
    whh_f = whh_f_ref[...]
    whh_b = whh_b_ref[...]
    bhh_f = bhh_f_ref[...]
    bhh_b = bhh_b_ref[...]
    lens = lens_ref[...]                      # (Bp, 1) int32

    def gru_cell(gi, h, whhT, bhh):
        # PyTorch gate order r, z, n; gate slices are lane-tile aligned views.
        gh = jnp.dot(h, whhT, preferred_element_type=jnp.float32) + bhh
        r = jax.nn.sigmoid(gi[:, 0:Hp] + gh[:, 0:Hp])
        z = jax.nn.sigmoid(gi[:, Hp:2 * Hp] + gh[:, Hp:2 * Hp])
        n = jnp.tanh(gi[:, 2 * Hp:3 * Hp] + r * gh[:, 2 * Hp:3 * Hp])
        return n + z * (h - n)                # == (1-z)*n + z*h, fewer VPU ops

    h_f = jnp.zeros((Bp, Hp), jnp.float32)    # hidden=None -> zero init
    h_b = jnp.zeros((Bp, Hp), jnp.float32)

    # ---- Fused fwd/bwd recurrence, fully unrolled (T is static & small).
    # Step i handles forward position tf=i and backward position tb=T-1-i so
    # the two independent chains hide each other's MXU/EUP latency.
    for i in range(T):
        tf = i
        tb = T - 1 - i

        gi_f = gi_scr[pl.ds(tf * Bp, Bp), pl.ds(0, G)]
        hf_new = gru_cell(gi_f, h_f, whh_f, bhh_f)
        m_f = lens > tf                                   # (Bp, 1) bool
        o_f = jnp.where(m_f, hf_new, 0.0)
        h_f = jnp.where(m_f, hf_new, h_f)

        gi_b = gi_scr[pl.ds(tb * Bp, Bp), pl.ds(G, G)]
        hb_new = gru_cell(gi_b, h_b, whh_b, bhh_b)
        m_b = lens > tb
        o_b = jnp.where(m_b, hb_new, 0.0)
        h_b = jnp.where(m_b, hb_new, h_b)

        # Sum of the two directions with no second full pass over the output.
        if tf < tb:            # first half: both positions get a fresh write
            out_ref[tf] = o_f
            out_ref[tb] = o_b
        elif tf > tb:          # second half: accumulate onto the other dir
            out_ref[tf] = out_ref[tf] + o_f
            out_ref[tb] = out_ref[tb] + o_b
        else:                  # odd-T midpoint: single combined store
            out_ref[tf] = o_f + o_b

    hid_ref[0] = h_f
    hid_ref[1] = h_b


def _prep_gate_weight(w, H, Hp):
    """(3H, H) PyTorch weight -> (Hp, 3Hp) transposed, zero-padded PER GATE so
    each gate occupies a lane-aligned [g*Hp:(g+1)*Hp] column block."""
    w3 = w.reshape(3, H, H)                                   # (gate, out, in)
    w3 = jnp.pad(w3, ((0, 0), (0, Hp - H), (0, Hp - H)))      # (gate, Hp, Hp)
    return jnp.transpose(w3, (2, 0, 1)).reshape(Hp, 3 * Hp)   # (in, gate*out)


def _prep_gate_bias(b, H, Hp):
    b3 = jnp.pad(b.reshape(3, H), ((0, 0), (0, Hp - H)))
    return b3.reshape(1, 3 * Hp)


def encoder_rnn_forward(input_seq, input_lengths, params):
    """EncoderRNN.forward(input_seq, input_lengths, hidden=None)."""
    # Glue: embedding lookup (gather) stays in plain JAX.
    # TODO(synk): at production sizes fuse the gather into the kernel via
    # scalar-prefetched token ids (pl.Element row gather) to avoid writing and
    # re-reading the (T, B, H) embedded tensor through HBM.
    embedded = jnp.take(params["embedding"], input_seq, axis=0)   # (T, B, H)
    T, B, H = embedded.shape

    # Pad to TPU-friendly tiles: batch -> sublane multiple, hidden -> lane mult.
    Bp = max(8, ((B + 7) // 8) * 8)
    Hp = max(128, ((H + 127) // 128) * 128)

    x = jnp.pad(embedded.astype(jnp.float32),
                ((0, 0), (0, Bp - B), (0, Hp - H))).reshape(T * Bp, Hp)
    lens = jnp.pad(input_lengths.astype(jnp.int32), (0, Bp - B)).reshape(Bp, 1)

    # Combined input-projection weight for both directions -> one big matmul.
    wih = jnp.concatenate([_prep_gate_weight(params["wih_f"], H, Hp),
                           _prep_gate_weight(params["wih_b"], H, Hp)], axis=1)
    bih = jnp.concatenate([_prep_gate_bias(params["bih_f"], H, Hp),
                           _prep_gate_bias(params["bih_b"], H, Hp)], axis=1)
    whh_f = _prep_gate_weight(params["whh_f"], H, Hp)
    bhh_f = _prep_gate_bias(params["bhh_f"], H, Hp)
    whh_b = _prep_gate_weight(params["whh_b"], H, Hp)
    bhh_b = _prep_gate_bias(params["bhh_b"], H, Hp)

    # Kept in f32 for close parity with the f32 reference; on v6e/v7x the
    # matmul operands (x / wih / whh) could be cast to bf16 for ~2x MXU rate.
    args = (x, lens, wih, bih, whh_f, bhh_f, whh_b, bhh_b)

    vmem = pl.BlockSpec(memory_space=pltpu.MemorySpace.VMEM)
    outputs_p, hidden_p = pl.pallas_call(
        _encoder_gru_kernel,
        out_shape=(jax.ShapeDtypeStruct((T, Bp, Hp), jnp.float32),
                   jax.ShapeDtypeStruct((2, Bp, Hp), jnp.float32)),
        in_specs=[vmem] * len(args),
        out_specs=(vmem, vmem),
        scratch_shapes=[pltpu.VMEM((T * Bp, 6 * Hp), jnp.float32)],
        compiler_params=pltpu.CompilerParams(
            vmem_limit_bytes=32 * 1024 * 1024),
    )(*args)
    # TODO(synk): for production T/B/H add a batch grid axis
    # (dimension_semantics=("parallel",)) so v7x's two TensorCores split the
    # batch and the VMEM-resident footprint stays under the 64 MiB cap.

    return outputs_p[:, :B, :H], hidden_p[:, :B, :H]


def init_params(key, vocab_size, hidden_size):
    ks = jax.random.split(key, 9)
    s = 1.0 / np.sqrt(hidden_size)

    def u(k, shape):
        return jax.random.uniform(k, shape, jnp.float32, -s, s)

    return dict(
        embedding=jax.random.normal(ks[0], (vocab_size, hidden_size), jnp.float32),
        wih_f=u(ks[1], (3 * hidden_size, hidden_size)),
        whh_f=u(ks[2], (3 * hidden_size, hidden_size)),
        bih_f=u(ks[3], (3 * hidden_size,)),
        bhh_f=u(ks[4], (3 * hidden_size,)),
        wih_b=u(ks[5], (3 * hidden_size, hidden_size)),
        whh_b=u(ks[6], (3 * hidden_size, hidden_size)),
        bih_b=u(ks[7], (3 * hidden_size,)),
        bhh_b=u(ks[8], (3 * hidden_size,)),
    )


def reference_forward(input_seq, input_lengths, params):
    """Pure-JAX reference of the masked bidirectional GRU (for validation)."""
    emb = jnp.take(params["embedding"], input_seq, axis=0)
    T, B, H = emb.shape

    def cell(x, h, wih, whh, bih, bhh):
        gi = x @ wih.T + bih
        gh = h @ whh.T + bhh
        r = jax.nn.sigmoid(gi[:, :H] + gh[:, :H])
        z = jax.nn.sigmoid(gi[:, H:2 * H] + gh[:, H:2 * H])
        n = jnp.tanh(gi[:, 2 * H:] + r * gh[:, 2 * H:])
        return (1.0 - z) * n + z * h

    mask = (jnp.arange(T)[:, None] < input_lengths[None, :]).astype(jnp.float32)
    mask = mask[:, :, None]
    hf = jnp.zeros((B, H), jnp.float32)
    hb = jnp.zeros((B, H), jnp.float32)
    out_f = [None] * T
    out_b = [None] * T
    for t in range(T):
        hn = cell(emb[t], hf, params["wih_f"], params["whh_f"],
                  params["bih_f"], params["bhh_f"])
        hf = mask[t] * hn + (1.0 - mask[t]) * hf
        out_f[t] = mask[t] * hn
    for t in range(T - 1, -1, -1):
        hn = cell(emb[t], hb, params["wih_b"], params["whh_b"],
                  params["bih_b"], params["bhh_b"])
        hb = mask[t] * hn + (1.0 - mask[t]) * hb
        out_b[t] = mask[t] * hn
    return jnp.stack(out_f) + jnp.stack(out_b), jnp.stack([hf, hb])


if __name__ == "__main__":
    T, B, H, V = 8, 2, 32, 16          # seq_len, batch, hidden_size, vocab
    key = jax.random.PRNGKey(0)
    kp, kt = jax.random.split(key)

    params = init_params(kp, V, H)

    # Lengths sorted descending (pack_padded_sequence contract).
    lengths_np = np.array([8, 5], dtype=np.int32)
    # np.array (copy, not asarray) so the buffer is writable for PAD masking.
    tokens = np.array(
        jax.random.randint(kt, (T, B), minval=3, maxval=V, dtype=jnp.int32))
    for b in range(B):
        tokens[lengths_np[b]:, b] = 0          # PAD token 0 past each length
    input_seq = jnp.asarray(tokens, dtype=jnp.int32)
    input_lengths = jnp.asarray(lengths_np)

    outputs, hidden = encoder_rnn_forward(input_seq, input_lengths, params)
    jax.block_until_ready((outputs, hidden))

    ref_out, ref_hid = reference_forward(input_seq, input_lengths, params)
    # Tolerances account for MXU matmul rounding differences vs. the XLA ref.
    np.testing.assert_allclose(np.asarray(outputs), np.asarray(ref_out),
                               rtol=2e-3, atol=1e-3)
    np.testing.assert_allclose(np.asarray(hidden), np.asarray(ref_hid),
                               rtol=2e-3, atol=1e-3)

    print("KERNEL_OK")
</pallas_src>

<mosaic_0001>
module attributes {stable_mosaic.version = 11 : i64} {
  func.func @_encoder_gru_kernel(%arg0: memref<64x128xf32, #tpu.memory_space<vmem>>, %arg1: memref<8x1xi32, #tpu.memory_space<vmem>>, %arg2: memref<128x768xf32, #tpu.memory_space<vmem>>, %arg3: memref<1x768xf32, #tpu.memory_space<vmem>>, %arg4: memref<128x384xf32, #tpu.memory_space<vmem>>, %arg5: memref<1x384xf32, #tpu.memory_space<vmem>>, %arg6: memref<128x384xf32, #tpu.memory_space<vmem>>, %arg7: memref<1x384xf32, #tpu.memory_space<vmem>>, %arg8: memref<8x8x128xf32, #tpu.memory_space<vmem>>, %arg9: memref<2x8x128xf32, #tpu.memory_space<vmem>>, %arg10: memref<64x768xf32, #tpu.memory_space<vmem>>) attributes {dimension_semantics = [], scalar_prefetch = 0 : i64, scratch_operands = 1 : i64, tpu.core_type = #tpu.core_type<tc>} {
    %c0 = arith.constant 0 : index
    %c0_0 = arith.constant 0 : index
    %0 = vector.load %arg0[%c0, %c0_0] : memref<64x128xf32, #tpu.memory_space<vmem>>, vector<64x128xf32>
    %c0_1 = arith.constant 0 : index
    %c0_2 = arith.constant 0 : index
    %1 = vector.load %arg2[%c0_1, %c0_2] : memref<128x768xf32, #tpu.memory_space<vmem>>, vector<128x768xf32>
    %cst = arith.constant dense<0.000000e+00> : vector<64x768xf32>
    %2 = tpu.matmul %0, %1, %cst {dimension_numbers = #tpu.dot_dimension_numbers<[1], [0], [0], [1], [0, 0, 1, 1], [], []>} : vector<64x128xf32>, vector<128x768xf32>, vector<64x768xf32> -> vector<64x768xf32>
    %c0_3 = arith.constant 0 : index
    %c0_4 = arith.constant 0 : index
    %3 = vector.load %arg3[%c0_3, %c0_4] : memref<1x768xf32, #tpu.memory_space<vmem>>, vector<1x768xf32>
    %4 = vector.broadcast %3 : vector<1x768xf32> to vector<64x768xf32>
    %5 = arith.addf %2, %4 : vector<64x768xf32>
    %c0_5 = arith.constant 0 : index
    %c0_6 = arith.constant 0 : index
    %6 = vector.load %arg10[%c0_5, %c0_6] : memref<64x768xf32, #tpu.memory_space<vmem>>, vector<64x768xf32>
    tpu.vector_store %arg10[%c0_5, %c0_6], %5 {strides = array<i32>} : memref<64x768xf32, #tpu.memory_space<vmem>>, vector<64x768xf32>,
    %c0_7 = arith.constant 0 : index
    %c0_8 = arith.constant 0 : index
    %7 = vector.load %arg4[%c0_7, %c0_8] : memref<128x384xf32, #tpu.memory_space<vmem>>, vector<128x384xf32>
    %c0_9 = arith.constant 0 : index
    %c0_10 = arith.constant 0 : index
    %8 = vector.load %arg6[%c0_9, %c0_10] : memref<128x384xf32, #tpu.memory_space<vmem>>, vector<128x384xf32>
    %c0_11 = arith.constant 0 : index
    %c0_12 = arith.constant 0 : index
    %9 = vector.load %arg5[%c0_11, %c0_12] : memref<1x384xf32, #tpu.memory_space<vmem>>, vector<1x384xf32>
    %c0_13 = arith.constant 0 : index
    %c0_14 = arith.constant 0 : index
    %10 = vector.load %arg7[%c0_13, %c0_14] : memref<1x384xf32, #tpu.memory_space<vmem>>, vector<1x384xf32>
    %c0_15 = arith.constant 0 : index
    %c0_16 = arith.constant 0 : index
    %11 = vector.load %arg1[%c0_15, %c0_16] : memref<8x1xi32, #tpu.memory_space<vmem>>, vector<8x1xi32>
    %cst_17 = arith.constant 0.000000e+00 : f32
    %12 = vector.broadcast %cst_17 : f32 to vector<8x128xf32>
    %cst_18 = arith.constant 0.000000e+00 : f32
    %13 = vector.broadcast %cst_18 : f32 to vector<8x128xf32>
    %c0_19 = arith.constant 0 : index
    %c0_20 = arith.constant 0 : index
    %14 = vector.load %arg10[%c0_19, %c0_20] : memref<64x768xf32, #tpu.memory_space<vmem>>, vector<8x384xf32>
    %cst_21 = arith.constant dense<0.000000e+00> : vector<8x384xf32>
    %15 = tpu.matmul %12, %7, %cst_21 {dimension_numbers = #tpu.dot_dimension_numbers<[1], [0], [0], [1], [0, 0, 1, 1], [], []>} : vector<8x128xf32>, vector<128x384xf32>, vector<8x384xf32> -> vector<8x384xf32>
    %16 = vector.broadcast %9 : vector<1x384xf32> to vector<8x384xf32>
    %17 = arith.addf %15, %16 : vector<8x384xf32>
    %18 = vector.extract_strided_slice %14 {offsets = [0, 0], sizes = [8, 128], strides = [1, 1]} : vector<8x384xf32> to vector<8x128xf32>
    %19 = vector.extract_strided_slice %17 {offsets = [0, 0], sizes = [8, 128], strides = [1, 1]} : vector<8x384xf32> to vector<8x128xf32>
    %20 = arith.addf %18, %19 : vector<8x128xf32>
    %21 = arith.negf %20 : vector<8x128xf32>
    %22 = math.exp %21 : vector<8x128xf32>
    %cst_22 = arith.constant 1.000000e+00 : f32
    %23 = vector.broadcast %cst_22 : f32 to vector<8x128xf32>
    %24 = arith.addf %23, %22 : vector<8x128xf32>
    %25 = arith.divf %23, %24 : vector<8x128xf32>
    %26 = vector.extract_strided_slice %14 {offsets = [0, 128], sizes = [8, 128], strides = [1, 1]} : vector<8x384xf32> to vector<8x128xf32>
    %27 = vector.extract_strided_slice %17 {offsets = [0, 128], sizes = [8, 128], strides = [1, 1]} : vector<8x384xf32> to vector<8x128xf32>
    %28 = arith.addf %26, %27 : vector<8x128xf32>
    %29 = arith.negf %28 : vector<8x128xf32>
    %30 = math.exp %29 : vector<8x128xf32>
    %cst_23 = arith.constant 1.000000e+00 : f32
    %31 = vector.broadcast %cst_23 : f32 to vector<8x128xf32>
    %32 = arith.addf %31, %30 : vector<8x128xf32>
    %33 = arith.divf %31, %32 : vector<8x128xf32>
    %34 = vector.extract_strided_slice %14 {offsets = [0, 256], sizes = [8, 128], strides = [1, 1]} : vector<8x384xf32> to vector<8x128xf32>
    %35 = vector.extract_strided_slice %17 {offsets = [0, 256], sizes = [8, 128], strides = [1, 1]} : vector<8x384xf32> to vector<8x128xf32>
    %36 = arith.mulf %25, %35 : vector<8x128xf32>
    %37 = arith.addf %34, %36 : vector<8x128xf32>
    %38 = math.tanh %37 : vector<8x128xf32>
    %39 = arith.subf %12, %38 : vector<8x128xf32>
    %40 = arith.mulf %33, %39 : vector<8x128xf32>
    %41 = arith.addf %38, %40 : vector<8x128xf32>
    %c0_i32 = arith.constant 0 : i32
    %42 = vector.broadcast %c0_i32 : i32 to vector<8x1xi32>
    %43 = arith.cmpi sgt, %11, %42 : vector<8x1xi32>
    %cst_24 = arith.constant 0.000000e+00 : f32
    %44 = vector.shape_cast %43 : vector<8x1xi1> to vector<8x1xi1>
    %45 = vector.broadcast %44 : vector<8x1xi1> to vector<8x128xi1>
    %46 = vector.broadcast %cst_24 : f32 to vector<8x128xf32>
    %47 = arith.select %45, %41, %46 : vector<8x128xi1>, vector<8x128xf32>
    %48 = vector.shape_cast %43 : vector<8x1xi1> to vector<8x1xi1>
    %49 = vector.broadcast %48 : vector<8x1xi1> to vector<8x128xi1>
    %50 = arith.select %49, %41, %12 : vector<8x128xi1>, vector<8x128xf32>
    %c56 = arith.constant 56 : index
    %c384 = arith.constant 384 : index
    %51 = vector.load %arg10[%c56, %c384] : memref<64x768xf32, #tpu.memory_space<vmem>>, vector<8x384xf32>
    %cst_25 = arith.constant dense<0.000000e+00> : vector<8x384xf32>
    %52 = tpu.matmul %13, %8, %cst_25 {dimension_numbers = #tpu.dot_dimension_numbers<[1], [0], [0], [1], [0, 0, 1, 1], [], []>} : vector<8x128xf32>, vector<128x384xf32>, vector<8x384xf32> -> vector<8x384xf32>
    %53 = vector.broadcast %10 : vector<1x384xf32> to vector<8x384xf32>
    %54 = arith.addf %52, %53 : vector<8x384xf32>
    %55 = vector.extract_strided_slice %51 {offsets = [0, 0], sizes = [8, 128], strides = [1, 1]} : vector<8x384xf32> to vector<8x128xf32>
    %56 = vector.extract_strided_slice %54 {offsets = [0, 0], sizes = [8, 128], strides = [1, 1]} : vector<8x384xf32> to vector<8x128xf32>
    %57 = arith.addf %55, %56 : vector<8x128xf32>
    %58 = arith.negf %57 : vector<8x128xf32>
    %59 = math.exp %58 : vector<8x128xf32>
    %cst_26 = arith.constant 1.000000e+00 : f32
    %60 = vector.broadcast %cst_26 : f32 to vector<8x128xf32>
    %61 = arith.addf %60, %59 : vector<8x128xf32>
    %62 = arith.divf %60, %61 : vector<8x128xf32>
    %63 = vector.extract_strided_slice %51 {offsets = [0, 128], sizes = [8, 128], strides = [1, 1]} : vector<8x384xf32> to vector<8x128xf32>
    %64 = vector.extract_strided_slice %54 {offsets = [0, 128], sizes = [8, 128], strides = [1, 1]} : vector<8x384xf32> to vector<8x128xf32>
    %65 = arith.addf %63, %64 : vector<8x128xf32>
    %66 = arith.negf %65 : vector<8x128xf32>
    %67 = math.exp %66 : vector<8x128xf32>
    %cst_27 = arith.constant 1.000000e+00 : f32
    %68 = vector.broadcast %cst_27 : f32 to vector<8x128xf32>
    %69 = arith.addf %68, %67 : vector<8x128xf32>
    %70 = arith.divf %68, %69 : vector<8x128xf32>
    %71 = vector.extract_strided_slice %51 {offsets = [0, 256], sizes = [8, 128], strides = [1, 1]} : vector<8x384xf32> to vector<8x128xf32>
    %72 = vector.extract_strided_slice %54 {offsets = [0, 256], sizes = [8, 128], strides = [1, 1]} : vector<8x384xf32> to vector<8x128xf32>
    %73 = arith.mulf %62, %72 : vector<8x128xf32>
    %74 = arith.addf %71, %73 : vector<8x128xf32>
    %75 = math.tanh %74 : vector<8x128xf32>
    %76 = arith.subf %13, %75 : vector<8x128xf32>
    %77 = arith.mulf %70, %76 : vector<8x128xf32>
    %78 = arith.addf %75, %77 : vector<8x128xf32>
    %c7_i32 = arith.constant 7 : i32
    %79 = vector.broadcast %c7_i32 : i32 to vector<8x1xi32>
    %80 = arith.cmpi sgt, %11, %79 : vector<8x1xi32>
    %cst_28 = arith.constant 0.000000e+00 : f32
    %81 = vector.shape_cast %80 : vector<8x1xi1> to vector<8x1xi1>
    %82 = vector.broadcast %81 : vector<8x1xi1> to vector<8x128xi1>
    %83 = vector.broadcast %cst_28 : f32 to vector<8x128xf32>
    %84 = arith.select %82, %78, %83 : vector<8x128xi1>, vector<8x128xf32>
    %85 = vector.shape_cast %80 : vector<8x1xi1> to vector<8x1xi1>
    %86 = vector.broadcast %85 : vector<8x1xi1> to vector<8x128xi1>
    %87 = arith.select %86, %78, %13 : vector<8x128xi1>, vector<8x128xf32>
    %c0_29 = arith.constant 0 : index
    %c0_30 = arith.constant 0 : index
    %c0_31 = arith.constant 0 : index
    %88 = vector.load %arg8[%c0_29, %c0_30, %c0_31] : memref<8x8x128xf32, #tpu.memory_space<vmem>>, vector<1x8x128xf32>
    %89 = vector.shape_cast %88 : vector<1x8x128xf32> to vector<8x128xf32>
    %90 = vector.shape_cast %47 : vector<8x128xf32> to vector<1x8x128xf32>
    tpu.vector_store %arg8[%c0_29, %c0_30, %c0_31], %90 {strides = array<i32>} : memref<8x8x128xf32, #tpu.memory_space<vmem>>, vector<1x8x128xf32>,
    %c7 = arith.constant 7 : index
    %c0_32 = arith.constant 0 : index
    %c0_33 = arith.constant 0 : index
    %91 = vector.load %arg8[%c7, %c0_32, %c0_33] : memref<8x8x128xf32, #tpu.memory_space<vmem>>, vector<1x8x128xf32>
    %92 = vector.shape_cast %91 : vector<1x8x128xf32> to vector<8x128xf32>
    %93 = vector.shape_cast %84 : vector<8x128xf32> to vector<1x8x128xf32>
    tpu.vector_store %arg8[%c7, %c0_32, %c0_33], %93 {strides = array<i32>} : memref<8x8x128xf32, #tpu.memory_space<vmem>>, vector<1x8x128xf32>,
    %c8 = arith.constant 8 : index
    %c0_34 = arith.constant 0 : index
    %94 = vector.load %arg10[%c8, %c0_34] : memref<64x768xf32, #tpu.memory_space<vmem>>, vector<8x384xf32>
    %cst_35 = arith.constant dense<0.000000e+00> : vector<8x384xf32>
    %95 = tpu.matmul %50, %7, %cst_35 {dimension_numbers = #tpu.dot_dimension_numbers<[1], [0], [0], [1], [0, 0, 1, 1], [], []>} : vector<8x128xf32>, vector<128x384xf32>, vector<8x384xf32> -> vector<8x384xf32>
    %96 = vector.broadcast %9 : vector<1x384xf32> to vector<8x384xf32>
    %97 = arith.addf %95, %96 : vector<8x384xf32>
    %98 = vector.extract_strided_slice %94 {offsets = [0, 0], sizes = [8, 128], strides = [1, 1]} : vector<8x384xf32> to vector<8x128xf32>
    %99 = vector.extract_strided_slice %97 {offsets = [0, 0], sizes = [8, 128], strides = [1, 1]} : vector<8x384xf32> to vector<8x128xf32>
    %100 = arith.addf %98, %99 : vector<8x128xf32>
    %101 = arith.negf %100 : vector<8x128xf32>
    %102 = math.exp %101 : vector<8x128xf32>
    %cst_36 = arith.constant 1.000000e+00 : f32
    %103 = vector.broadcast %cst_36 : f32 to vector<8x128xf32>
    %104 = arith.addf %103, %102 : vector<8x128xf32>
    %105 = arith.divf %103, %104 : vector<8x128xf32>
    %106 = vector.extract_strided_slice %94 {offsets = [0, 128], sizes = [8, 128], strides = [1, 1]} : vector<8x384xf32> to vector<8x128xf32>
    %107 = vector.extract_strided_slice %97 {offsets = [0, 128], sizes = [8, 128], strides = [1, 1]} : vector<8x384xf32> to vector<8x128xf32>
    %108 = arith.addf %106, %107 : vector<8x128xf32>
    %109 = arith.negf %108 : vector<8x128xf32>
    %110 = math.exp %109 : vector<8x128xf32>
    %cst_37 = arith.constant 1.000000e+00 : f32
    %111 = vector.broadcast %cst_37 : f32 to vector<8x128xf32>
    %112 = arith.addf %111, %110 : vector<8x128xf32>
    %113 = arith.divf %111, %112 : vector<8x128xf32>
    %114 = vector.extract_strided_slice %94 {offsets = [0, 256], sizes = [8, 128], strides = [1, 1]} : vector<8x384xf32> to vector<8x128xf32>
    %115 = vector.extract_strided_slice %97 {offsets = [0, 256], sizes = [8, 128], strides = [1, 1]} : vector<8x384xf32> to vector<8x128xf32>
    %116 = arith.mulf %105, %115 : vector<8x128xf32>
    %117 = arith.addf %114, %116 : vector<8x128xf32>
    %118 = math.tanh %117 : vector<8x128xf32>
    %119 = arith.subf %50, %118 : vector<8x128xf32>
    %120 = arith.mulf %113, %119 : vector<8x128xf32>
    %121 = arith.addf %118, %120 : vector<8x128xf32>
    %c1_i32 = arith.constant 1 : i32
    %122 = vector.broadcast %c1_i32 : i32 to vector<8x1xi32>
    %123 = arith.cmpi sgt, %11, %122 : vector<8x1xi32>
    %cst_38 = arith.constant 0.000000e+00 : f32
    %124 = vector.shape_cast %123 : vector<8x1xi1> to vector<8x1xi1>
    %125 = vector.broadcast %124 : vector<8x1xi1> to vector<8x128xi1>
    %126 = vector.broadcast %cst_38 : f32 to vector<8x128xf32>
    %127 = arith.select %125, %121, %126 : vector<8x128xi1>, vector<8x128xf32>
    %128 = vector.shape_cast %123 : vector<8x1xi1> to vector<8x1xi1>
    %129 = vector.broadcast %128 : vector<8x1xi1> to vector<8x128xi1>
    %130 = arith.select %129, %121, %50 : vector<8x128xi1>, vector<8x128xf32>
    %c48 = arith.constant 48 : index
    %c384_39 = arith.constant 384 : index
    %131 = vector.load %arg10[%c48, %c384_39] : memref<64x768xf32, #tpu.memory_space<vmem>>, vector<8x384xf32>
    %cst_40 = arith.constant dense<0.000000e+00> : vector<8x384xf32>
    %132 = tpu.matmul %87, %8, %cst_40 {dimension_numbers = #tpu.dot_dimension_numbers<[1], [0], [0], [1], [0, 0, 1, 1], [], []>} : vector<8x128xf32>, vector<128x384xf32>, vector<8x384xf32> -> vector<8x384xf32>
    %133 = vector.broadcast %10 : vector<1x384xf32> to vector<8x384xf32>
    %134 = arith.addf %132, %133 : vector<8x384xf32>
    %135 = vector.extract_strided_slice %131 {offsets = [0, 0], sizes = [8, 128], strides = [1, 1]} : vector<8x384xf32> to vector<8x128xf32>
    %136 = vector.extract_strided_slice %134 {offsets = [0, 0], sizes = [8, 128], strides = [1, 1]} : vector<8x384xf32> to vector<8x128xf32>
    %137 = arith.addf %135, %136 : vector<8x128xf32>
    %138 = arith.negf %137 : vector<8x128xf32>
    %139 = math.exp %138 : vector<8x128xf32>
    %cst_41 = arith.constant 1.000000e+00 : f32
    %140 = vector.broadcast %cst_41 : f32 to vector<8x128xf32>
    %141 = arith.addf %140, %139 : vector<8x128xf32>
    %142 = arith.divf %140, %141 : vector<8x128xf32>
    %143 = vector.extract_strided_slice %131 {offsets = [0, 128], sizes = [8, 128], strides = [1, 1]} : vector<8x384xf32> to vector<8x128xf32>
    %144 = vector.extract_strided_slice %134 {offsets = [0, 128], sizes = [8, 128], strides = [1, 1]} : vector<8x384xf32> to vector<8x128xf32>
    %145 = arith.addf %143, %144 : vector<8x128xf32>
    %146 = arith.negf %145 : vector<8x128xf32>
    %147 = math.exp %146 : vector<8x128xf32>
    %cst_42 = arith.constant 1.000000e+00 : f32
    %148 = vector.broadcast %cst_42 : f32 to vector<8x128xf32>
    %149 = arith.addf %148, %147 : vector<8x128xf32>
    %150 = arith.divf %148, %149 : vector<8x128xf32>
    %151 = vector.extract_strided_slice %131 {offsets = [0, 256], sizes = [8, 128], strides = [1, 1]} : vector<8x384xf32> to vector<8x128xf32>
    %152 = vector.extract_strided_slice %134 {offsets = [0, 256], sizes = [8, 128], strides = [1, 1]} : vector<8x384xf32> to vector<8x128xf32>
    %153 = arith.mulf %142, %152 : vector<8x128xf32>
    %154 = arith.addf %151, %153 : vector<8x128xf32>
    %155 = math.tanh %154 : vector<8x128xf32>
    %156 = arith.subf %87, %155 : vector<8x128xf32>
    %157 = arith.mulf %150, %156 : vector<8x128xf32>
    %158 = arith.addf %155, %157 : vector<8x128xf32>
    %c6_i32 = arith.constant 6 : i32
    %159 = vector.broadcast %c6_i32 : i32 to vector<8x1xi32>
    %160 = arith.cmpi sgt, %11, %159 : vector<8x1xi32>
    %cst_43 = arith.constant 0.000000e+00 : f32
    %161 = vector.shape_cast %160 : vector<8x1xi1> to vector<8x1xi1>
    %162 = vector.broadcast %161 : vector<8x1xi1> to vector<8x128xi1>
    %163 = vector.broadcast %cst_43 : f32 to vector<8x128xf32>
    %164 = arith.select %162, %158, %163 : vector<8x128xi1>, vector<8x128xf32>
    %165 = vector.shape_cast %160 : vector<8x1xi1> to vector<8x1xi1>
    %166 = vector.broadcast %165 : vector<8x1xi1> to vector<8x128xi1>
    %167 = arith.select %166, %158, %87 : vector<8x128xi1>, vector<8x128xf32>
    %c1 = arith.constant 1 : index
    %c0_44 = arith.constant 0 : index
    %c0_45 = arith.constant 0 : index
    %168 = vector.load %arg8[%c1, %c0_44, %c0_45] : memref<8x8x128xf32, #tpu.memory_space<vmem>>, vector<1x8x128xf32>
    %169 = vector.shape_cast %168 : vector<1x8x128xf32> to vector<8x128xf32>
    %170 = vector.shape_cast %127 : vector<8x128xf32> to vector<1x8x128xf32>
    tpu.vector_store %arg8[%c1, %c0_44, %c0_45], %170 {strides = array<i32>} : memref<8x8x128xf32, #tpu.memory_space<vmem>>, vector<1x8x128xf32>,
    %c6 = arith.constant 6 : index
    %c0_46 = arith.constant 0 : index
    %c0_47 = arith.constant 0 : index
    %171 = vector.load %arg8[%c6, %c0_46, %c0_47] : memref<8x8x128xf32, #tpu.memory_space<vmem>>, vector<1x8x128xf32>
    %172 = vector.shape_cast %171 : vector<1x8x128xf32> to vector<8x128xf32>
    %173 = vector.shape_cast %164 : vector<8x128xf32> to vector<1x8x128xf32>
    tpu.vector_store %arg8[%c6, %c0_46, %c0_47], %173 {strides = array<i32>} : memref<8x8x128xf32, #tpu.memory_space<vmem>>, vector<1x8x128xf32>,
    %c16 = arith.constant 16 : index
    %c0_48 = arith.constant 0 : index
    %174 = vector.load %arg10[%c16, %c0_48] : memref<64x768xf32, #tpu.memory_space<vmem>>, vector<8x384xf32>
    %cst_49 = arith.constant dense<0.000000e+00> : vector<8x384xf32>
    %175 = tpu.matmul %130, %7, %cst_49 {dimension_numbers = #tpu.dot_dimension_numbers<[1], [0], [0], [1], [0, 0, 1, 1], [], []>} : vector<8x128xf32>, vector<128x384xf32>, vector<8x384xf32> -> vector<8x384xf32>
    %176 = vector.broadcast %9 : vector<1x384xf32> to vector<8x384xf32>
    %177 = arith.addf %175, %176 : vector<8x384xf32>
    %178 = vector.extract_strided_slice %174 {offsets = [0, 0], sizes = [8, 128], strides = [1, 1]} : vector<8x384xf32> to vector<8x128xf32>
    %179 = vector.extract_strided_slice %177 {offsets = [0, 0], sizes = [8, 128], strides = [1, 1]} : vector<8x384xf32> to vector<8x128xf32>
    %180 = arith.addf %178, %179 : vector<8x128xf32>
    %181 = arith.negf %180 : vector<8x128xf32>
    %182 = math.exp %181 : vector<8x128xf32>
    %cst_50 = arith.constant 1.000000e+00 : f32
    %183 = vector.broadcast %cst_50 : f32 to vector<8x128xf32>
    %184 = arith.addf %183, %182 : vector<8x128xf32>
    %185 = arith.divf %183, %184 : vector<8x128xf32>
    %186 = vector.extract_strided_slice %174 {offsets = [0, 128], sizes = [8, 128], strides = [1, 1]} : vector<8x384xf32> to vector<8x128xf32>
    %187 = vector.extract_strided_slice %177 {offsets = [0, 128], sizes = [8, 128], strides = [1, 1]} : vector<8x384xf32> to vector<8x128xf32>
    %188 = arith.addf %186, %187 : vector<8x128xf32>
    %189 = arith.negf %188 : vector<8x128xf32>
    %190 = math.exp %189 : vector<8x128xf32>
    %cst_51 = arith.constant 1.000000e+00 : f32
    %191 = vector.broadcast %cst_51 : f32 to vector<8x128xf32>
    %192 = arith.addf %191, %190 : vector<8x128xf32>
    %193 = arith.divf %191, %192 : vector<8x128xf32>
    %194 = vector.extract_strided_slice %174 {offsets = [0, 256], sizes = [8, 128], strides = [1, 1]} : vector<8x384xf32> to vector<8x128xf32>
    %195 = vector.extract_strided_slice %177 {offsets = [0, 256], sizes = [8, 128], strides = [1, 1]} : vector<8x384xf32> to vector<8x128xf32>
    %196 = arith.mulf %185, %195 : vector<8x128xf32>
    %197 = arith.addf %194, %196 : vector<8x128xf32>
    %198 = math.tanh %197 : vector<8x128xf32>
    %199 = arith.subf %130, %198 : vector<8x128xf32>
    %200 = arith.mulf %193, %199 : vector<8x128xf32>
    %201 = arith.addf %198, %200 : vector<8x128xf32>
    %c2_i32 = arith.constant 2 : i32
    %202 = vector.broadcast %c2_i32 : i32 to vector<8x1xi32>
    %203 = arith.cmpi sgt, %11, %202 : vector<8x1xi32>
    %cst_52 = arith.constant 0.000000e+00 : f32
    %204 = vector.shape_cast %203 : vector<8x1xi1> to vector<8x1xi1>
    %205 = vector.broadcast %204 : vector<8x1xi1> to vector<8x128xi1>
    %206 = vector.broadcast %cst_52 : f32 to vector<8x128xf32>
    %207 = arith.select %205, %201, %206 : vector<8x128xi1>, vector<8x128xf32>
    %208 = vector.shape_cast %203 : vector<8x1xi1> to vector<8x1xi1>
    %209 = vector.broadcast %208 : vector<8x1xi1> to vector<8x128xi1>
    %210 = arith.select %209, %201, %130 : vector<8x128xi1>, vector<8x128xf32>
    %c40 = arith.constant 40 : index
    %c384_53 = arith.constant 384 : index
    %211 = vector.load %arg10[%c40, %c384_53] : memref<64x768xf32, #tpu.memory_space<vmem>>, vector<8x384xf32>
    %cst_54 = arith.constant dense<0.000000e+00> : vector<8x384xf32>
    %212 = tpu.matmul %167, %8, %cst_54 {dimension_numbers = #tpu.dot_dimension_numbers<[1], [0], [0], [1], [0, 0, 1, 1], [], []>} : vector<8x128xf32>, vector<128x384xf32>, vector<8x384xf32> -> vector<8x384xf32>
    %213 = vector.broadcast %10 : vector<1x384xf32> to vector<8x384xf32>
    %214 = arith.addf %212, %213 : vector<8x384xf32>
    %215 = vector.extract_strided_slice %211 {offsets = [0, 0], sizes = [8, 128], strides = [1, 1]} : vector<8x384xf32> to vector<8x128xf32>
    %216 = vector.extract_strided_slice %214 {offsets = [0, 0], sizes = [8, 128], strides = [1, 1]} : vector<8x384xf32> to vector<8x128xf32>
    %217 = arith.addf %215, %216 : vector<8x128xf32>
    %218 = arith.negf %217 : vector<8x128xf32>
    %219 = math.exp %218 : vector<8x128xf32>
    %cst_55 = arith.constant 1.000000e+00 : f32
    %220 = vector.broadcast %cst_55 : f32 to vector<8x128xf32>
    %221 = arith.addf %220, %219 : vector<8x128xf32>
    %222 = arith.divf %220, %221 : vector<8x128xf32>
    %223 = vector.extract_strided_slice %211 {offsets = [0, 128], sizes = [8, 128], strides = [1, 1]} : vector<8x384xf32> to vector<8x128xf32>
    %224 = vector.extract_strided_slice %214 {offsets = [0, 128], sizes = [8, 128], strides = [1, 1]} : vector<8x384xf32> to vector<8x128xf32>
    %225 = arith.addf %223, %224 : vector<8x128xf32>
    %226 = arith.negf %225 : vector<8x128xf32>
    %227 = math.exp %226 : vector<8x128xf32>
    %cst_56 = arith.constant 1.000000e+00 : f32
    %228 = vector.broadcast %cst_56 : f32 to vector<8x128xf32>
    %229 = arith.addf %228, %227 : vector<8x128xf32>
    %230 = arith.divf %228, %229 : vector<8x128xf32>
    %231 = vector.extract_strided_slice %211 {offsets = [0, 256], sizes = [8, 128], strides = [1, 1]} : vector<8x384xf32> to vector<8x128xf32>
    %232 = vector.extract_strided_slice %214 {offsets = [0, 256], sizes = [8, 128], strides = [1, 1]} : vector<8x384xf32> to vector<8x128xf32>
    %233 = arith.mulf %222, %232 : vector<8x128xf32>
    %234 = arith.addf %231, %233 : vector<8x128xf32>
    %235 = math.tanh %234 : vector<8x128xf32>
    %236 = arith.subf %167, %235 : vector<8x128xf32>
    %237 = arith.mulf %230, %236 : vector<8x128xf32>
    %238 = arith.addf %235, %237 : vector<8x128xf32>
    %c5_i32 = arith.constant 5 : i32
    %239 = vector.broadcast %c5_i32 : i32 to vector<8x1xi32>
    %240 = arith.cmpi sgt, %11, %239 : vector<8x1xi32>
    %cst_57 = arith.constant 0.000000e+00 : f32
    %241 = vector.shape_cast %240 : vector<8x1xi1> to vector<8x1xi1>
    %242 = vector.broadcast %241 : vector<8x1xi1> to vector<8x128xi1>
    %243 = vector.broadcast %cst_57 : f32 to vector<8x128xf32>
    %244 = arith.select %242, %238, %243 : vector<8x128xi1>, vector<8x128xf32>
    %245 = vector.shape_cast %240 : vector<8x1xi1> to vector<8x1xi1>
    %246 = vector.broadcast %245 : vector<8x1xi1> to vector<8x128xi1>
    %247 = arith.select %246, %238, %167 : vector<8x128xi1>, vector<8x128xf32>
    %c2 = arith.constant 2 : index
    %c0_58 = arith.constant 0 : index
    %c0_59 = arith.constant 0 : index
    %248 = vector.load %arg8[%c2, %c0_58, %c0_59] : memref<8x8x128xf32, #tpu.memory_space<vmem>>, vector<1x8x128xf32>
    %249 = vector.shape_cast %248 : vector<1x8x128xf32> to vector<8x128xf32>
    %250 = vector.shape_cast %207 : vector<8x128xf32> to vector<1x8x128xf32>
    tpu.vector_store %arg8[%c2, %c0_58, %c0_59], %250 {strides = array<i32>} : memref<8x8x128xf32, #tpu.memory_space<vmem>>, vector<1x8x128xf32>,
    %c5 = arith.constant 5 : index
    %c0_60 = arith.constant 0 : index
    %c0_61 = arith.constant 0 : index
    %251 = vector.load %arg8[%c5, %c0_60, %c0_61] : memref<8x8x128xf32, #tpu.memory_space<vmem>>, vector<1x8x128xf32>
    %252 = vector.shape_cast %251 : vector<1x8x128xf32> to vector<8x128xf32>
    %253 = vector.shape_cast %244 : vector<8x128xf32> to vector<1x8x128xf32>
    tpu.vector_store %arg8[%c5, %c0_60, %c0_61], %253 {strides = array<i32>} : memref<8x8x128xf32, #tpu.memory_space<vmem>>, vector<1x8x128xf32>,
    %c24 = arith.constant 24 : index
    %c0_62 = arith.constant 0 : index
    %254 = vector.load %arg10[%c24, %c0_62] : memref<64x768xf32, #tpu.memory_space<vmem>>, vector<8x384xf32>
    %cst_63 = arith.constant dense<0.000000e+00> : vector<8x384xf32>
    %255 = tpu.matmul %210, %7, %cst_63 {dimension_numbers = #tpu.dot_dimension_numbers<[1], [0], [0], [1], [0, 0, 1, 1], [], []>} : vector<8x128xf32>, vector<128x384xf32>, vector<8x384xf32> -> vector<8x384xf32>
    %256 = vector.broadcast %9 : vector<1x384xf32> to vector<8x384xf32>
    %257 = arith.addf %255, %256 : vector<8x384xf32>
    %258 = vector.extract_strided_slice %254 {offsets = [0, 0], sizes = [8, 128], strides = [1, 1]} : vector<8x384xf32> to vector<8x128xf32>
    %259 = vector.extract_strided_slice %257 {offsets = [0, 0], sizes = [8, 128], strides = [1, 1]} : vector<8x384xf32> to vector<8x128xf32>
    %260 = arith.addf %258, %259 : vector<8x128xf32>
    %261 = arith.negf %260 : vector<8x128xf32>
    %262 = math.exp %261 : vector<8x128xf32>
    %cst_64 = arith.constant 1.000000e+00 : f32
    %263 = vector.broadcast %cst_64 : f32 to vector<8x128xf32>
    %264 = arith.addf %263, %262 : vector<8x128xf32>
    %265 = arith.divf %263, %264 : vector<8x128xf32>
    %266 = vector.extract_strided_slice %254 {offsets = [0, 128], sizes = [8, 128], strides = [1, 1]} : vector<8x384xf32> to vector<8x128xf32>
    %267 = vector.extract_strided_slice %257 {offsets = [0, 128], sizes = [8, 128], strides = [1, 1]} : vector<8x384xf32> to vector<8x128xf32>
    %268 = arith.addf %266, %267 : vector<8x128xf32>
    %269 = arith.negf %268 : vector<8x128xf32>
    %270 = math.exp %269 : vector<8x128xf32>
    %cst_65 = arith.constant 1.000000e+00 : f32
    %271 = vector.broadcast %cst_65 : f32 to vector<8x128xf32>
    %272 = arith.addf %271, %270 : vector<8x128xf32>
    %273 = arith.divf %271, %272 : vector<8x128xf32>
    %274 = vector.extract_strided_slice %254 {offsets = [0, 256], sizes = [8, 128], strides = [1, 1]} : vector<8x384xf32> to vector<8x128xf32>
    %275 = vector.extract_strided_slice %257 {offsets = [0, 256], sizes = [8, 128], strides = [1, 1]} : vector<8x384xf32> to vector<8x128xf32>
    %276 = arith.mulf %265, %275 : vector<8x128xf32>
    %277 = arith.addf %274, %276 : vector<8x128xf32>
    %278 = math.tanh %277 : vector<8x128xf32>
    %279 = arith.subf %210, %278 : vector<8x128xf32>
    %280 = arith.mulf %273, %279 : vector<8x128xf32>
    %281 = arith.addf %278, %280 : vector<8x128xf32>
    %c3_i32 = arith.constant 3 : i32
    %282 = vector.broadcast %c3_i32 : i32 to vector<8x1xi32>
    %283 = arith.cmpi sgt, %11, %282 : vector<8x1xi32>
    %cst_66 = arith.constant 0.000000e+00 : f32
    %284 = vector.shape_cast %283 : vector<8x1xi1> to vector<8x1xi1>
    %285 = vector.broadcast %284 : vector<8x1xi1> to vector<8x128xi1>
    %286 = vector.broadcast %cst_66 : f32 to vector<8x128xf32>
    %287 = arith.select %285, %281, %286 : vector<8x128xi1>, vector<8x128xf32>
    %288 = vector.shape_cast %283 : vector<8x1xi1> to vector<8x1xi1>
    %289 = vector.broadcast %288 : vector<8x1xi1> to vector<8x128xi1>
    %290 = arith.select %289, %281, %210 : vector<8x128xi1>, vector<8x128xf32>
    %c32 = arith.constant 32 : index
    %c384_67 = arith.constant 384 : index
    %291 = vector.load %arg10[%c32, %c384_67] : memref<64x768xf32, #tpu.memory_space<vmem>>, vector<8x384xf32>
    %cst_68 = arith.constant dense<0.000000e+00> : vector<8x384xf32>
    %292 = tpu.matmul %247, %8, %cst_68 {dimension_numbers = #tpu.dot_dimension_numbers<[1], [0], [0], [1], [0, 0, 1, 1], [], []>} : vector<8x128xf32>, vector<128x384xf32>, vector<8x384xf32> -> vector<8x384xf32>
    %293 = vector.broadcast %10 : vector<1x384xf32> to vector<8x384xf32>
    %294 = arith.addf %292, %293 : vector<8x384xf32>
    %295 = vector.extract_strided_slice %291 {offsets = [0, 0], sizes = [8, 128], strides = [1, 1]} : vector<8x384xf32> to vector<8x128xf32>
    %296 = vector.extract_strided_slice %294 {offsets = [0, 0], sizes = [8, 128], strides = [1, 1]} : vector<8x384xf32> to vector<8x128xf32>
    %297 = arith.addf %295, %296 : vector<8x128xf32>
    %298 = arith.negf %297 : vector<8x128xf32>
    %299 = math.exp %298 : vector<8x128xf32>
    %cst_69 = arith.constant 1.000000e+00 : f32
    %300 = vector.broadcast %cst_69 : f32 to vector<8x128xf32>
    %301 = arith.addf %300, %299 : vector<8x128xf32>
    %302 = arith.divf %300, %301 : vector<8x128xf32>
    %303 = vector.extract_strided_slice %291 {offsets = [0, 128], sizes = [8, 128], strides = [1, 1]} : vector<8x384xf32> to vector<8x128xf32>
    %304 = vector.extract_strided_slice %294 {offsets = [0, 128], sizes = [8, 128], strides = [1, 1]} : vector<8x384xf32> to vector<8x128xf32>
    %305 = arith.addf %303, %304 : vector<8x128xf32>
    %306 = arith.negf %305 : vector<8x128xf32>
    %307 = math.exp %306 : vector<8x128xf32>
    %cst_70 = arith.constant 1.000000e+00 : f32
    %308 = vector.broadcast %cst_70 : f32 to vector<8x128xf32>
    %309 = arith.addf %308, %307 : vector<8x128xf32>
    %310 = arith.divf %308, %309 : vector<8x128xf32>
    %311 = vector.extract_strided_slice %291 {offsets = [0, 256], sizes = [8, 128], strides = [1, 1]} : vector<8x384xf32> to vector<8x128xf32>
    %312 = vector.extract_strided_slice %294 {offsets = [0, 256], sizes = [8, 128], strides = [1, 1]} : vector<8x384xf32> to vector<8x128xf32>
    %313 = arith.mulf %302, %312 : vector<8x128xf32>
    %314 = arith.addf %311, %313 : vector<8x128xf32>
    %315 = math.tanh %314 : vector<8x128xf32>
    %316 = arith.subf %247, %315 : vector<8x128xf32>
    %317 = arith.mulf %310, %316 : vector<8x128xf32>
    %318 = arith.addf %315, %317 : vector<8x128xf32>
    %c4_i32 = arith.constant 4 : i32
    %319 = vector.broadcast %c4_i32 : i32 to vector<8x1xi32>
    %320 = arith.cmpi sgt, %11, %319 : vector<8x1xi32>
    %cst_71 = arith.constant 0.000000e+00 : f32
    %321 = vector.shape_cast %320 : vector<8x1xi1> to vector<8x1xi1>
    %322 = vector.broadcast %321 : vector<8x1xi1> to vector<8x128xi1>
    %323 = vector.broadcast %cst_71 : f32 to vector<8x128xf32>
    %324 = arith.select %322, %318, %323 : vector<8x128xi1>, vector<8x128xf32>
    %325 = vector.shape_cast %320 : vector<8x1xi1> to vector<8x1xi1>
    %326 = vector.broadcast %325 : vector<8x1xi1> to vector<8x128xi1>
    %327 = arith.select %326, %318, %247 : vector<8x128xi1>, vector<8x128xf32>
    %c3 = arith.constant 3 : index
    %c0_72 = arith.constant 0 : index
    %c0_73 = arith.constant 0 : index
    %328 = vector.load %arg8[%c3, %c0_72, %c0_73] : memref<8x8x128xf32, #tpu.memory_space<vmem>>, vector<1x8x128xf32>
    %329 = vector.shape_cast %328 : vector<1x8x128xf32> to vector<8x128xf32>
    %330 = vector.shape_cast %287 : vector<8x128xf32> to vector<1x8x128xf32>
    tpu.vector_store %arg8[%c3, %c0_72, %c0_73], %330 {strides = array<i32>} : memref<8x8x128xf32, #tpu.memory_space<vmem>>, vector<1x8x128xf32>,
    %c4 = arith.constant 4 : index
    %c0_74 = arith.constant 0 : index
    %c0_75 = arith.constant 0 : index
    %331 = vector.load %arg8[%c4, %c0_74, %c0_75] : memref<8x8x128xf32, #tpu.memory_space<vmem>>, vector<1x8x128xf32>
    %332 = vector.shape_cast %331 : vector<1x8x128xf32> to vector<8x128xf32>
    %333 = vector.shape_cast %324 : vector<8x128xf32> to vector<1x8x128xf32>
    tpu.vector_store %arg8[%c4, %c0_74, %c0_75], %333 {strides = array<i32>} : memref<8x8x128xf32, #tpu.memory_space<vmem>>, vector<1x8x128xf32>,
    %c32_76 = arith.constant 32 : index
    %c0_77 = arith.constant 0 : index
    %334 = vector.load %arg10[%c32_76, %c0_77] : memref<64x768xf32, #tpu.memory_space<vmem>>, vector<8x384xf32>
    %cst_78 = arith.constant dense<0.000000e+00> : vector<8x384xf32>
    %335 = tpu.matmul %290, %7, %cst_78 {dimension_numbers = #tpu.dot_dimension_numbers<[1], [0], [0], [1], [0, 0, 1, 1], [], []>} : vector<8x128xf32>, vector<128x384xf32>, vector<8x384xf32> -> vector<8x384xf32>
    %336 = vector.broadcast %9 : vector<1x384xf32> to vector<8x384xf32>
    %337 = arith.addf %335, %336 : vector<8x384xf32>
    %338 = vector.extract_strided_slice %334 {offsets = [0, 0], sizes = [8, 128], strides = [1, 1]} : vector<8x384xf32> to vector<8x128xf32>
    %339 = vector.extract_strided_slice %337 {offsets = [0, 0], sizes = [8, 128], strides = [1, 1]} : vector<8x384xf32> to vector<8x128xf32>
    %340 = arith.addf %338, %339 : vector<8x128xf32>
    %341 = arith.negf %340 : vector<8x128xf32>
    %342 = math.exp %341 : vector<8x128xf32>
    %cst_79 = arith.constant 1.000000e+00 : f32
    %343 = vector.broadcast %cst_79 : f32 to vector<8x128xf32>
    %344 = arith.addf %343, %342 : vector<8x128xf32>
    %345 = arith.divf %343, %344 : vector<8x128xf32>
    %346 = vector.extract_strided_slice %334 {offsets = [0, 128], sizes = [8, 128], strides = [1, 1]} : vector<8x384xf32> to vector<8x128xf32>
    %347 = vector.extract_strided_slice %337 {offsets = [0, 128], sizes = [8, 128], strides = [1, 1]} : vector<8x384xf32> to vector<8x128xf32>
    %348 = arith.addf %346, %347 : vector<8x128xf32>
    %349 = arith.negf %348 : vector<8x128xf32>
    %350 = math.exp %349 : vector<8x128xf32>
    %cst_80 = arith.constant 1.000000e+00 : f32
    %351 = vector.broadcast %cst_80 : f32 to vector<8x128xf32>
    %352 = arith.addf %351, %350 : vector<8x128xf32>
    %353 = arith.divf %351, %352 : vector<8x128xf32>
    %354 = vector.extract_strided_slice %334 {offsets = [0, 256], sizes = [8, 128], strides = [1, 1]} : vector<8x384xf32> to vector<8x128xf32>
    %355 = vector.extract_strided_slice %337 {offsets = [0, 256], sizes = [8, 128], strides = [1, 1]} : vector<8x384xf32> to vector<8x128xf32>
    %356 = arith.mulf %345, %355 : vector<8x128xf32>
    %357 = arith.addf %354, %356 : vector<8x128xf32>
    %358 = math.tanh %357 : vector<8x128xf32>
    %359 = arith.subf %290, %358 : vector<8x128xf32>
    %360 = arith.mulf %353, %359 : vector<8x128xf32>
    %361 = arith.addf %358, %360 : vector<8x128xf32>
    %c4_i32_81 = arith.constant 4 : i32
    %362 = vector.broadcast %c4_i32_81 : i32 to vector<8x1xi32>
    %363 = arith.cmpi sgt, %11, %362 : vector<8x1xi32>
    %cst_82 = arith.constant 0.000000e+00 : f32
    %364 = vector.shape_cast %363 : vector<8x1xi1> to vector<8x1xi1>
    %365 = vector.broadcast %364 : vector<8x1xi1> to vector<8x128xi1>
    %366 = vector.broadcast %cst_82 : f32 to vector<8x128xf32>
    %367 = arith.select %365, %361, %366 : vector<8x128xi1>, vector<8x128xf32>
    %368 = vector.shape_cast %363 : vector<8x1xi1> to vector<8x1xi1>
    %369 = vector.broadcast %368 : vector<8x1xi1> to vector<8x128xi1>
    %370 = arith.select %369, %361, %290 : vector<8x128xi1>, vector<8x128xf32>
    %c24_83 = arith.constant 24 : index
    %c384_84 = arith.constant 384 : index
    %371 = vector.load %arg10[%c24_83, %c384_84] : memref<64x768xf32, #tpu.memory_space<vmem>>, vector<8x384xf32>
    %cst_85 = arith.constant dense<0.000000e+00> : vector<8x384xf32>
    %372 = tpu.matmul %327, %8, %cst_85 {dimension_numbers = #tpu.dot_dimension_numbers<[1], [0], [0], [1], [0, 0, 1, 1], [], []>} : vector<8x128xf32>, vector<128x384xf32>, vector<8x384xf32> -> vector<8x384xf32>
    %373 = vector.broadcast %10 : vector<1x384xf32> to vector<8x384xf32>
    %374 = arith.addf %372, %373 : vector<8x384xf32>
    %375 = vector.extract_strided_slice %371 {offsets = [0, 0], sizes = [8, 128], strides = [1, 1]} : vector<8x384xf32> to vector<8x128xf32>
    %376 = vector.extract_strided_slice %374 {offsets = [0, 0], sizes = [8, 128], strides = [1, 1]} : vector<8x384xf32> to vector<8x128xf32>
    %377 = arith.addf %375, %376 : vector<8x128xf32>
    %378 = arith.negf %377 : vector<8x128xf32>
    %379 = math.exp %378 : vector<8x128xf32>
    %cst_86 = arith.constant 1.000000e+00 : f32
    %380 = vector.broadcast %cst_86 : f32 to vector<8x128xf32>
    %381 = arith.addf %380, %379 : vector<8x128xf32>
    %382 = arith.divf %380, %381 : vector<8x128xf32>
    %383 = vector.extract_strided_slice %371 {offsets = [0, 128], sizes = [8, 128], strides = [1, 1]} : vector<8x384xf32> to vector<8x128xf32>
    %384 = vector.extract_strided_slice %374 {offsets = [0, 128], sizes = [8, 128], strides = [1, 1]} : vector<8x384xf32> to vector<8x128xf32>
    %385 = arith.addf %383, %384 : vector<8x128xf32>
    %386 = arith.negf %385 : vector<8x128xf32>
    %387 = math.exp %386 : vector<8x128xf32>
    %cst_87 = arith.constant 1.000000e+00 : f32
    %388 = vector.broadcast %cst_87 : f32 to vector<8x128xf32>
    %389 = arith.addf %388, %387 : vector<8x128xf32>
    %390 = arith.divf %388, %389 : vector<8x128xf32>
    %391 = vector.extract_strided_slice %371 {offsets = [0, 256], sizes = [8, 128], strides = [1, 1]} : vector<8x384xf32> to vector<8x128xf32>
    %392 = vector.extract_strided_slice %374 {offsets = [0, 256], sizes = [8, 128], strides = [1, 1]} : vector<8x384xf32> to vector<8x128xf32>
    %393 = arith.mulf %382, %392 : vector<8x128xf32>
    %394 = arith.addf %391, %393 : vector<8x128xf32>
    %395 = math.tanh %394 : vector<8x128xf32>
    %396 = arith.subf %327, %395 : vector<8x128xf32>
    %397 = arith.mulf %390, %396 : vector<8x128xf32>
    %398 = arith.addf %395, %397 : vector<8x128xf32>
    %c3_i32_88 = arith.constant 3 : i32
    %399 = vector.broadcast %c3_i32_88 : i32 to vector<8x1xi32>
    %400 = arith.cmpi sgt, %11, %399 : vector<8x1xi32>
    %cst_89 = arith.constant 0.000000e+00 : f32
    %401 = vector.shape_cast %400 : vector<8x1xi1> to vector<8x1xi1>
    %402 = vector.broadcast %401 : vector<8x1xi1> to vector<8x128xi1>
    %403 = vector.broadcast %cst_89 : f32 to vector<8x128xf32>
    %404 = arith.select %402, %398, %403 : vector<8x128xi1>, vector<8x128xf32>
    %405 = vector.shape_cast %400 : vector<8x1xi1> to vector<8x1xi1>
    %406 = vector.broadcast %405 : vector<8x1xi1> to vector<8x128xi1>
    %407 = arith.select %406, %398, %327 : vector<8x128xi1>, vector<8x128xf32>
    %c4_90 = arith.constant 4 : index
    %c0_91 = arith.constant 0 : index
    %c0_92 = arith.constant 0 : index
    %408 = vector.load %arg8[%c4_90, %c0_91, %c0_92] : memref<8x8x128xf32, #tpu.memory_space<vmem>>, vector<1x8x128xf32>
    %409 = vector.shape_cast %408 : vector<1x8x128xf32> to vector<8x128xf32>
    %410 = arith.addf %409, %367 : vector<8x128xf32>
    %c4_93 = arith.constant 4 : index
    %c0_94 = arith.constant 0 : index
    %c0_95 = arith.constant 0 : index
    %411 = vector.load %arg8[%c4_93, %c0_94, %c0_95] : memref<8x8x128xf32, #tpu.memory_space<vmem>>, vector<1x8x128xf32>
    %412 = vector.shape_cast %411 : vector<1x8x128xf32> to vector<8x128xf32>
    %413 = vector.shape_cast %410 : vector<8x128xf32> to vector<1x8x128xf32>
    tpu.vector_store %arg8[%c4_93, %c0_94, %c0_95], %413 {strides = array<i32>} : memref<8x8x128xf32, #tpu.memory_space<vmem>>, vector<1x8x128xf32>,
    %c3_96 = arith.constant 3 : index
    %c0_97 = arith.constant 0 : index
    %c0_98 = arith.constant 0 : index
    %414 = vector.load %arg8[%c3_96, %c0_97, %c0_98] : memref<8x8x128xf32, #tpu.memory_space<vmem>>, vector<1x8x128xf32>
    %415 = vector.shape_cast %414 : vector<1x8x128xf32> to vector<8x128xf32>
    %416 = arith.addf %415, %404 : vector<8x128xf32>
    %c3_99 = arith.constant 3 : index
    %c0_100 = arith.constant 0 : index
    %c0_101 = arith.constant 0 : index
    %417 = vector.load %arg8[%c3_99, %c0_100, %c0_101] : memref<8x8x128xf32, #tpu.memory_space<vmem>>, vector<1x8x128xf32>
    %418 = vector.shape_cast %417 : vector<1x8x128xf32> to vector<8x128xf32>
    %419 = vector.shape_cast %416 : vector<8x128xf32> to vector<1x8x128xf32>
    tpu.vector_store %arg8[%c3_99, %c0_100, %c0_101], %419 {strides = array<i32>} : memref<8x8x128xf32, #tpu.memory_space<vmem>>, vector<1x8x128xf32>,
    %c40_102 = arith.constant 40 : index
    %c0_103 = arith.constant 0 : index
    %420 = vector.load %arg10[%c40_102, %c0_103] : memref<64x768xf32, #tpu.memory_space<vmem>>, vector<8x384xf32>
    %cst_104 = arith.constant dense<0.000000e+00> : vector<8x384xf32>
    %421 = tpu.matmul %370, %7, %cst_104 {dimension_numbers = #tpu.dot_dimension_numbers<[1], [0], [0], [1], [0, 0, 1, 1], [], []>} : vector<8x128xf32>, vector<128x384xf32>, vector<8x384xf32> -> vector<8x384xf32>
    %422 = vector.broadcast %9 : vector<1x384xf32> to vector<8x384xf32>
    %423 = arith.addf %421, %422 : vector<8x384xf32>
    %424 = vector.extract_strided_slice %420 {offsets = [0, 0], sizes = [8, 128], strides = [1, 1]} : vector<8x384xf32> to vector<8x128xf32>
    %425 = vector.extract_strided_slice %423 {offsets = [0, 0], sizes = [8, 128], strides = [1, 1]} : vector<8x384xf32> to vector<8x128xf32>
    %426 = arith.addf %424, %425 : vector<8x128xf32>
    %427 = arith.negf %426 : vector<8x128xf32>
    %428 = math.exp %427 : vector<8x128xf32>
    %cst_105 = arith.constant 1.000000e+00 : f32
    %429 = vector.broadcast %cst_105 : f32 to vector<8x128xf32>
    %430 = arith.addf %429, %428 : vector<8x128xf32>
    %431 = arith.divf %429, %430 : vector<8x128xf32>
    %432 = vector.extract_strided_slice %420 {offsets = [0, 128], sizes = [8, 128], strides = [1, 1]} : vector<8x384xf32> to vector<8x128xf32>
    %433 = vector.extract_strided_slice %423 {offsets = [0, 128], sizes = [8, 128], strides = [1, 1]} : vector<8x384xf32> to vector<8x128xf32>
    %434 = arith.addf %432, %433 : vector<8x128xf32>
    %435 = arith.negf %434 : vector<8x128xf32>
    %436 = math.exp %435 : vector<8x128xf32>
    %cst_106 = arith.constant 1.000000e+00 : f32
    %437 = vector.broadcast %cst_106 : f32 to vector<8x128xf32>
    %438 = arith.addf %437, %436 : vector<8x128xf32>
    %439 = arith.divf %437, %438 : vector<8x128xf32>
    %440 = vector.extract_strided_slice %420 {offsets = [0, 256], sizes = [8, 128], strides = [1, 1]} : vector<8x384xf32> to vector<8x128xf32>
    %441 = vector.extract_strided_slice %423 {offsets = [0, 256], sizes = [8, 128], strides = [1, 1]} : vector<8x384xf32> to vector<8x128xf32>
    %442 = arith.mulf %431, %441 : vector<8x128xf32>
    %443 = arith.addf %440, %442 : vector<8x128xf32>
    %444 = math.tanh %443 : vector<8x128xf32>
    %445 = arith.subf %370, %444 : vector<8x128xf32>
    %446 = arith.mulf %439, %445 : vector<8x128xf32>
    %447 = arith.addf %444, %446 : vector<8x128xf32>
    %c5_i32_107 = arith.constant 5 : i32
    %448 = vector.broadcast %c5_i32_107 : i32 to vector<8x1xi32>
    %449 = arith.cmpi sgt, %11, %448 : vector<8x1xi32>
    %cst_108 = arith.constant 0.000000e+00 : f32
    %450 = vector.shape_cast %449 : vector<8x1xi1> to vector<8x1xi1>
    %451 = vector.broadcast %450 : vector<8x1xi1> to vector<8x128xi1>
    %452 = vector.broadcast %cst_108 : f32 to vector<8x128xf32>
    %453 = arith.select %451, %447, %452 : vector<8x128xi1>, vector<8x128xf32>
    %454 = vector.shape_cast %449 : vector<8x1xi1> to vector<8x1xi1>
    %455 = vector.broadcast %454 : vector<8x1xi1> to vector<8x128xi1>
    %456 = arith.select %455, %447, %370 : vector<8x128xi1>, vector<8x128xf32>
    %c16_109 = arith.constant 16 : index
    %c384_110 = arith.constant 384 : index
    %457 = vector.load %arg10[%c16_109, %c384_110] : memref<64x768xf32, #tpu.memory_space<vmem>>, vector<8x384xf32>
    %cst_111 = arith.constant dense<0.000000e+00> : vector<8x384xf32>
    %458 = tpu.matmul %407, %8, %cst_111 {dimension_numbers = #tpu.dot_dimension_numbers<[1], [0], [0], [1], [0, 0, 1, 1], [], []>} : vector<8x128xf32>, vector<128x384xf32>, vector<8x384xf32> -> vector<8x384xf32>
    %459 = vector.broadcast %10 : vector<1x384xf32> to vector<8x384xf32>
    %460 = arith.addf %458, %459 : vector<8x384xf32>
    %461 = vector.extract_strided_slice %457 {offsets = [0, 0], sizes = [8, 128], strides = [1, 1]} : vector<8x384xf32> to vector<8x128xf32>
    %462 = vector.extract_strided_slice %460 {offsets = [0, 0], sizes = [8, 128], strides = [1, 1]} : vector<8x384xf32> to vector<8x128xf32>
    %463 = arith.addf %461, %462 : vector<8x128xf32>
    %464 = arith.negf %463 : vector<8x128xf32>
    %465 = math.exp %464 : vector<8x128xf32>
    %cst_112 = arith.constant 1.000000e+00 : f32
    %466 = vector.broadcast %cst_112 : f32 to vector<8x128xf32>
    %467 = arith.addf %466, %465 : vector<8x128xf32>
    %468 = arith.divf %466, %467 : vector<8x128xf32>
    %469 = vector.extract_strided_slice %457 {offsets = [0, 128], sizes = [8, 128], strides = [1, 1]} : vector<8x384xf32> to vector<8x128xf32>
    %470 = vector.extract_strided_slice %460 {offsets = [0, 128], sizes = [8, 128], strides = [1, 1]} : vector<8x384xf32> to vector<8x128xf32>
    %471 = arith.addf %469, %470 : vector<8x128xf32>
    %472 = arith.negf %471 : vector<8x128xf32>
    %473 = math.exp %472 : vector<8x128xf32>
    %cst_113 = arith.constant 1.000000e+00 : f32
    %474 = vector.broadcast %cst_113 : f32 to vector<8x128xf32>
    %475 = arith.addf %474, %473 : vector<8x128xf32>
    %476 = arith.divf %474, %475 : vector<8x128xf32>
    %477 = vector.extract_strided_slice %457 {offsets = [0, 256], sizes = [8, 128], strides = [1, 1]} : vector<8x384xf32> to vector<8x128xf32>
    %478 = vector.extract_strided_slice %460 {offsets = [0, 256], sizes = [8, 128], strides = [1, 1]} : vector<8x384xf32> to vector<8x128xf32>
    %479 = arith.mulf %468, %478 : vector<8x128xf32>
    %480 = arith.addf %477, %479 : vector<8x128xf32>
    %481 = math.tanh %480 : vector<8x128xf32>
    %482 = arith.subf %407, %481 : vector<8x128xf32>
    %483 = arith.mulf %476, %482 : vector<8x128xf32>
    %484 = arith.addf %481, %483 : vector<8x128xf32>
    %c2_i32_114 = arith.constant 2 : i32
    %485 = vector.broadcast %c2_i32_114 : i32 to vector<8x1xi32>
    %486 = arith.cmpi sgt, %11, %485 : vector<8x1xi32>
    %cst_115 = arith.constant 0.000000e+00 : f32
    %487 = vector.shape_cast %486 : vector<8x1xi1> to vector<8x1xi1>
    %488 = vector.broadcast %487 : vector<8x1xi1> to vector<8x128xi1>
    %489 = vector.broadcast %cst_115 : f32 to vector<8x128xf32>
    %490 = arith.select %488, %484, %489 : vector<8x128xi1>, vector<8x128xf32>
    %491 = vector.shape_cast %486 : vector<8x1xi1> to vector<8x1xi1>
    %492 = vector.broadcast %491 : vector<8x1xi1> to vector<8x128xi1>
    %493 = arith.select %492, %484, %407 : vector<8x128xi1>, vector<8x128xf32>
    %c5_116 = arith.constant 5 : index
    %c0_117 = arith.constant 0 : index
    %c0_118 = arith.constant 0 : index
    %494 = vector.load %arg8[%c5_116, %c0_117, %c0_118] : memref<8x8x128xf32, #tpu.memory_space<vmem>>, vector<1x8x128xf32>
    %495 = vector.shape_cast %494 : vector<1x8x128xf32> to vector<8x128xf32>
    %496 = arith.addf %495, %453 : vector<8x128xf32>
    %c5_119 = arith.constant 5 : index
    %c0_120 = arith.constant 0 : index
    %c0_121 = arith.constant 0 : index
    %497 = vector.load %arg8[%c5_119, %c0_120, %c0_121] : memref<8x8x128xf32, #tpu.memory_space<vmem>>, vector<1x8x128xf32>
    %498 = vector.shape_cast %497 : vector<1x8x128xf32> to vector<8x128xf32>
    %499 = vector.shape_cast %496 : vector<8x128xf32> to vector<1x8x128xf32>
    tpu.vector_store %arg8[%c5_119, %c0_120, %c0_121], %499 {strides = array<i32>} : memref<8x8x128xf32, #tpu.memory_space<vmem>>, vector<1x8x128xf32>,
    %c2_122 = arith.constant 2 : index
    %c0_123 = arith.constant 0 : index
    %c0_124 = arith.constant 0 : index
    %500 = vector.load %arg8[%c2_122, %c0_123, %c0_124] : memref<8x8x128xf32, #tpu.memory_space<vmem>>, vector<1x8x128xf32>
    %501 = vector.shape_cast %500 : vector<1x8x128xf32> to vector<8x128xf32>
    %502 = arith.addf %501, %490 : vector<8x128xf32>
    %c2_125 = arith.constant 2 : index
    %c0_126 = arith.constant 0 : index
    %c0_127 = arith.constant 0 : index
    %503 = vector.load %arg8[%c2_125, %c0_126, %c0_127] : memref<8x8x128xf32, #tpu.memory_space<vmem>>, vector<1x8x128xf32>
    %504 = vector.shape_cast %503 : vector<1x8x128xf32> to vector<8x128xf32>
    %505 = vector.shape_cast %502 : vector<8x128xf32> to vector<1x8x128xf32>
    tpu.vector_store %arg8[%c2_125, %c0_126, %c0_127], %505 {strides = array<i32>} : memref<8x8x128xf32, #tpu.memory_space<vmem>>, vector<1x8x128xf32>,
    %c48_128 = arith.constant 48 : index
    %c0_129 = arith.constant 0 : index
    %506 = vector.load %arg10[%c48_128, %c0_129] : memref<64x768xf32, #tpu.memory_space<vmem>>, vector<8x384xf32>
    %cst_130 = arith.constant dense<0.000000e+00> : vector<8x384xf32>
    %507 = tpu.matmul %456, %7, %cst_130 {dimension_numbers = #tpu.dot_dimension_numbers<[1], [0], [0], [1], [0, 0, 1, 1], [], []>} : vector<8x128xf32>, vector<128x384xf32>, vector<8x384xf32> -> vector<8x384xf32>
    %508 = vector.broadcast %9 : vector<1x384xf32> to vector<8x384xf32>
    %509 = arith.addf %507, %508 : vector<8x384xf32>
    %510 = vector.extract_strided_slice %506 {offsets = [0, 0], sizes = [8, 128], strides = [1, 1]} : vector<8x384xf32> to vector<8x128xf32>
    %511 = vector.extract_strided_slice %509 {offsets = [0, 0], sizes = [8, 128], strides = [1, 1]} : vector<8x384xf32> to vector<8x128xf32>
    %512 = arith.addf %510, %511 : vector<8x128xf32>
    %513 = arith.negf %512 : vector<8x128xf32>
    %514 = math.exp %513 : vector<8x128xf32>
    %cst_131 = arith.constant 1.000000e+00 : f32
    %515 = vector.broadcast %cst_131 : f32 to vector<8x128xf32>
    %516 = arith.addf %515, %514 : vector<8x128xf32>
    %517 = arith.divf %515, %516 : vector<8x128xf32>
    %518 = vector.extract_strided_slice %506 {offsets = [0, 128], sizes = [8, 128], strides = [1, 1]} : vector<8x384xf32> to vector<8x128xf32>
    %519 = vector.extract_strided_slice %509 {offsets = [0, 128], sizes = [8, 128], strides = [1, 1]} : vector<8x384xf32> to vector<8x128xf32>
    %520 = arith.addf %518, %519 : vector<8x128xf32>
    %521 = arith.negf %520 : vector<8x128xf32>
    %522 = math.exp %521 : vector<8x128xf32>
    %cst_132 = arith.constant 1.000000e+00 : f32
    %523 = vector.broadcast %cst_132 : f32 to vector<8x128xf32>
    %524 = arith.addf %523, %522 : vector<8x128xf32>
    %525 = arith.divf %523, %524 : vector<8x128xf32>
    %526 = vector.extract_strided_slice %506 {offsets = [0, 256], sizes = [8, 128], strides = [1, 1]} : vector<8x384xf32> to vector<8x128xf32>
    %527 = vector.extract_strided_slice %509 {offsets = [0, 256], sizes = [8, 128], strides = [1, 1]} : vector<8x384xf32> to vector<8x128xf32>
    %528 = arith.mulf %517, %527 : vector<8x128xf32>
    %529 = arith.addf %526, %528 : vector<8x128xf32>
    %530 = math.tanh %529 : vector<8x128xf32>
    %531 = arith.subf %456, %530 : vector<8x128xf32>
    %532 = arith.mulf %525, %531 : vector<8x128xf32>
    %533 = arith.addf %530, %532 : vector<8x128xf32>
    %c6_i32_133 = arith.constant 6 : i32
    %534 = vector.broadcast %c6_i32_133 : i32 to vector<8x1xi32>
    %535 = arith.cmpi sgt, %11, %534 : vector<8x1xi32>
    %cst_134 = arith.constant 0.000000e+00 : f32
    %536 = vector.shape_cast %535 : vector<8x1xi1> to vector<8x1xi1>
    %537 = vector.broadcast %536 : vector<8x1xi1> to vector<8x128xi1>
    %538 = vector.broadcast %cst_134 : f32 to vector<8x128xf32>
    %539 = arith.select %537, %533, %538 : vector<8x128xi1>, vector<8x128xf32>
    %540 = vector.shape_cast %535 : vector<8x1xi1> to vector<8x1xi1>
    %541 = vector.broadcast %540 : vector<8x1xi1> to vector<8x128xi1>
    %542 = arith.select %541, %533, %456 : vector<8x128xi1>, vector<8x128xf32>
    %c8_135 = arith.constant 8 : index
    %c384_136 = arith.constant 384 : index
    %543 = vector.load %arg10[%c8_135, %c384_136] : memref<64x768xf32, #tpu.memory_space<vmem>>, vector<8x384xf32>
    %cst_137 = arith.constant dense<0.000000e+00> : vector<8x384xf32>
    %544 = tpu.matmul %493, %8, %cst_137 {dimension_numbers = #tpu.dot_dimension_numbers<[1], [0], [0], [1], [0, 0, 1, 1], [], []>} : vector<8x128xf32>, vector<128x384xf32>, vector<8x384xf32> -> vector<8x384xf32>
    %545 = vector.broadcast %10 : vector<1x384xf32> to vector<8x384xf32>
    %546 = arith.addf %544, %545 : vector<8x384xf32>
    %547 = vector.extract_strided_slice %543 {offsets = [0, 0], sizes = [8, 128], strides = [1, 1]} : vector<8x384xf32> to vector<8x128xf32>
    %548 = vector.extract_strided_slice %546 {offsets = [0, 0], sizes = [8, 128], strides = [1, 1]} : vector<8x384xf32> to vector<8x128xf32>
    %549 = arith.addf %547, %548 : vector<8x128xf32>
    %550 = arith.negf %549 : vector<8x128xf32>
    %551 = math.exp %550 : vector<8x128xf32>
    %cst_138 = arith.constant 1.000000e+00 : f32
    %552 = vector.broadcast %cst_138 : f32 to vector<8x128xf32>
    %553 = arith.addf %552, %551 : vector<8x128xf32>
    %554 = arith.divf %552, %553 : vector<8x128xf32>
    %555 = vector.extract_strided_slice %543 {offsets = [0, 128], sizes = [8, 128], strides = [1, 1]} : vector<8x384xf32> to vector<8x128xf32>
    %556 = vector.extract_strided_slice %546 {offsets = [0, 128], sizes = [8, 128], strides = [1, 1]} : vector<8x384xf32> to vector<8x128xf32>
    %557 = arith.addf %555, %556 : vector<8x128xf32>
    %558 = arith.negf %557 : vector<8x128xf32>
    %559 = math.exp %558 : vector<8x128xf32>
    %cst_139 = arith.constant 1.000000e+00 : f32
    %560 = vector.broadcast %cst_139 : f32 to vector<8x128xf32>
    %561 = arith.addf %560, %559 : vector<8x128xf32>
    %562 = arith.divf %560, %561 : vector<8x128xf32>
    %563 = vector.extract_strided_slice %543 {offsets = [0, 256], sizes = [8, 128], strides = [1, 1]} : vector<8x384xf32> to vector<8x128xf32>
    %564 = vector.extract_strided_slice %546 {offsets = [0, 256], sizes = [8, 128], strides = [1, 1]} : vector<8x384xf32> to vector<8x128xf32>
    %565 = arith.mulf %554, %564 : vector<8x128xf32>
    %566 = arith.addf %563, %565 : vector<8x128xf32>
    %567 = math.tanh %566 : vector<8x128xf32>
    %568 = arith.subf %493, %567 : vector<8x128xf32>
    %569 = arith.mulf %562, %568 : vector<8x128xf32>
    %570 = arith.addf %567, %569 : vector<8x128xf32>
    %c1_i32_140 = arith.constant 1 : i32
    %571 = vector.broadcast %c1_i32_140 : i32 to vector<8x1xi32>
    %572 = arith.cmpi sgt, %11, %571 : vector<8x1xi32>
    %cst_141 = arith.constant 0.000000e+00 : f32
    %573 = vector.shape_cast %572 : vector<8x1xi1> to vector<8x1xi1>
    %574 = vector.broadcast %573 : vector<8x1xi1> to vector<8x128xi1>
    %575 = vector.broadcast %cst_141 : f32 to vector<8x128xf32>
    %576 = arith.select %574, %570, %575 : vector<8x128xi1>, vector<8x128xf32>
    %577 = vector.shape_cast %572 : vector<8x1xi1> to vector<8x1xi1>
    %578 = vector.broadcast %577 : vector<8x1xi1> to vector<8x128xi1>
    %579 = arith.select %578, %570, %493 : vector<8x128xi1>, vector<8x128xf32>
    %c6_142 = arith.constant 6 : index
    %c0_143 = arith.constant 0 : index
    %c0_144 = arith.constant 0 : index
    %580 = vector.load %arg8[%c6_142, %c0_143, %c0_144] : memref<8x8x128xf32, #tpu.memory_space<vmem>>, vector<1x8x128xf32>
    %581 = vector.shape_cast %580 : vector<1x8x128xf32> to vector<8x128xf32>
    %582 = arith.addf %581, %539 : vector<8x128xf32>
    %c6_145 = arith.constant 6 : index
    %c0_146 = arith.constant 0 : index
    %c0_147 = arith.constant 0 : index
    %583 = vector.load %arg8[%c6_145, %c0_146, %c0_147] : memref<8x8x128xf32, #tpu.memory_space<vmem>>, vector<1x8x128xf32>
    %584 = vector.shape_cast %583 : vector<1x8x128xf32> to vector<8x128xf32>
    %585 = vector.shape_cast %582 : vector<8x128xf32> to vector<1x8x128xf32>
    tpu.vector_store %arg8[%c6_145, %c0_146, %c0_147], %585 {strides = array<i32>} : memref<8x8x128xf32, #tpu.memory_space<vmem>>, vector<1x8x128xf32>,
    %c1_148 = arith.constant 1 : index
    %c0_149 = arith.constant 0 : index
    %c0_150 = arith.constant 0 : index
    %586 = vector.load %arg8[%c1_148, %c0_149, %c0_150] : memref<8x8x128xf32, #tpu.memory_space<vmem>>, vector<1x8x128xf32>
    %587 = vector.shape_cast %586 : vector<1x8x128xf32> to vector<8x128xf32>
    %588 = arith.addf %587, %576 : vector<8x128xf32>
    %c1_151 = arith.constant 1 : index
    %c0_152 = arith.constant 0 : index
    %c0_153 = arith.constant 0 : index
    %589 = vector.load %arg8[%c1_151, %c0_152, %c0_153] : memref<8x8x128xf32, #tpu.memory_space<vmem>>, vector<1x8x128xf32>
    %590 = vector.shape_cast %589 : vector<1x8x128xf32> to vector<8x128xf32>
    %591 = vector.shape_cast %588 : vector<8x128xf32> to vector<1x8x128xf32>
    tpu.vector_store %arg8[%c1_151, %c0_152, %c0_153], %591 {strides = array<i32>} : memref<8x8x128xf32, #tpu.memory_space<vmem>>, vector<1x8x128xf32>,
    %c56_154 = arith.constant 56 : index
    %c0_155 = arith.constant 0 : index
    %592 = vector.load %arg10[%c56_154, %c0_155] : memref<64x768xf32, #tpu.memory_space<vmem>>, vector<8x384xf32>
    %cst_156 = arith.constant dense<0.000000e+00> : vector<8x384xf32>
    %593 = tpu.matmul %542, %7, %cst_156 {dimension_numbers = #tpu.dot_dimension_numbers<[1], [0], [0], [1], [0, 0, 1, 1], [], []>} : vector<8x128xf32>, vector<128x384xf32>, vector<8x384xf32> -> vector<8x384xf32>
    %594 = vector.broadcast %9 : vector<1x384xf32> to vector<8x384xf32>
    %595 = arith.addf %593, %594 : vector<8x384xf32>
    %596 = vector.extract_strided_slice %592 {offsets = [0, 0], sizes = [8, 128], strides = [1, 1]} : vector<8x384xf32> to vector<8x128xf32>
    %597 = vector.extract_strided_slice %595 {offsets = [0, 0], sizes = [8, 128], strides = [1, 1]} : vector<8x384xf32> to vector<8x128xf32>
    %598 = arith.addf %596, %597 : vector<8x128xf32>
    %599 = arith.negf %598 : vector<8x128xf32>
    %600 = math.exp %599 : vector<8x128xf32>
    %cst_157 = arith.constant 1.000000e+00 : f32
    %601 = vector.broadcast %cst_157 : f32 to vector<8x128xf32>
    %602 = arith.addf %601, %600 : vector<8x128xf32>
    %603 = arith.divf %601, %602 : vector<8x128xf32>
    %604 = vector.extract_strided_slice %592 {offsets = [0, 128], sizes = [8, 128], strides = [1, 1]} : vector<8x384xf32> to vector<8x128xf32>
    %605 = vector.extract_strided_slice %595 {offsets = [0, 128], sizes = [8, 128], strides = [1, 1]} : vector<8x384xf32> to vector<8x128xf32>
    %606 = arith.addf %604, %605 : vector<8x128xf32>
    %607 = arith.negf %606 : vector<8x128xf32>
    %608 = math.exp %607 : vector<8x128xf32>
    %cst_158 = arith.constant 1.000000e+00 : f32
    %609 = vector.broadcast %cst_158 : f32 to vector<8x128xf32>
    %610 = arith.addf %609, %608 : vector<8x128xf32>
    %611 = arith.divf %609, %610 : vector<8x128xf32>
    %612 = vector.extract_strided_slice %592 {offsets = [0, 256], sizes = [8, 128], strides = [1, 1]} : vector<8x384xf32> to vector<8x128xf32>
    %613 = vector.extract_strided_slice %595 {offsets = [0, 256], sizes = [8, 128], strides = [1, 1]} : vector<8x384xf32> to vector<8x128xf32>
    %614 = arith.mulf %603, %613 : vector<8x128xf32>
    %615 = arith.addf %612, %614 : vector<8x128xf32>
    %616 = math.tanh %615 : vector<8x128xf32>
    %617 = arith.subf %542, %616 : vector<8x128xf32>
    %618 = arith.mulf %611, %617 : vector<8x128xf32>
    %619 = arith.addf %616, %618 : vector<8x128xf32>
    %c7_i32_159 = arith.constant 7 : i32
    %620 = vector.broadcast %c7_i32_159 : i32 to vector<8x1xi32>
    %621 = arith.cmpi sgt, %11, %620 : vector<8x1xi32>
    %cst_160 = arith.constant 0.000000e+00 : f32
    %622 = vector.shape_cast %621 : vector<8x1xi1> to vector<8x1xi1>
    %623 = vector.broadcast %622 : vector<8x1xi1> to vector<8x128xi1>
    %624 = vector.broadcast %cst_160 : f32 to vector<8x128xf32>
    %625 = arith.select %623, %619, %624 : vector<8x128xi1>, vector<8x128xf32>
    %626 = vector.shape_cast %621 : vector<8x1xi1> to vector<8x1xi1>
    %627 = vector.broadcast %626 : vector<8x1xi1> to vector<8x128xi1>
    %628 = arith.select %627, %619, %542 : vector<8x128xi1>, vector<8x128xf32>
    %c0_161 = arith.constant 0 : index
    %c384_162 = arith.constant 384 : index
    %629 = vector.load %arg10[%c0_161, %c384_162] : memref<64x768xf32, #tpu.memory_space<vmem>>, vector<8x384xf32>
    %cst_163 = arith.constant dense<0.000000e+00> : vector<8x384xf32>
    %630 = tpu.matmul %579, %8, %cst_163 {dimension_numbers = #tpu.dot_dimension_numbers<[1], [0], [0], [1], [0, 0, 1, 1], [], []>} : vector<8x128xf32>, vector<128x384xf32>, vector<8x384xf32> -> vector<8x384xf32>
    %631 = vector.broadcast %10 : vector<1x384xf32> to vector<8x384xf32>
    %632 = arith.addf %630, %631 : vector<8x384xf32>
    %633 = vector.extract_strided_slice %629 {offsets = [0, 0], sizes = [8, 128], strides = [1, 1]} : vector<8x384xf32> to vector<8x128xf32>
    %634 = vector.extract_strided_slice %632 {offsets = [0, 0], sizes = [8, 128], strides = [1, 1]} : vector<8x384xf32> to vector<8x128xf32>
    %635 = arith.addf %633, %634 : vector<8x128xf32>
    %636 = arith.negf %635 : vector<8x128xf32>
    %637 = math.exp %636 : vector<8x128xf32>
    %cst_164 = arith.constant 1.000000e+00 : f32
    %638 = vector.broadcast %cst_164 : f32 to vector<8x128xf32>
    %639 = arith.addf %638, %637 : vector<8x128xf32>
    %640 = arith.divf %638, %639 : vector<8x128xf32>
    %641 = vector.extract_strided_slice %629 {offsets = [0, 128], sizes = [8, 128], strides = [1, 1]} : vector<8x384xf32> to vector<8x128xf32>
    %642 = vector.extract_strided_slice %632 {offsets = [0, 128], sizes = [8, 128], strides = [1, 1]} : vector<8x384xf32> to vector<8x128xf32>
    %643 = arith.addf %641, %642 : vector<8x128xf32>
    %644 = arith.negf %643 : vector<8x128xf32>
    %645 = math.exp %644 : vector<8x128xf32>
    %cst_165 = arith.constant 1.000000e+00 : f32
    %646 = vector.broadcast %cst_165 : f32 to vector<8x128xf32>
    %647 = arith.addf %646, %645 : vector<8x128xf32>
    %648 = arith.divf %646, %647 : vector<8x128xf32>
    %649 = vector.extract_strided_slice %629 {offsets = [0, 256], sizes = [8, 128], strides = [1, 1]} : vector<8x384xf32> to vector<8x128xf32>
    %650 = vector.extract_strided_slice %632 {offsets = [0, 256], sizes = [8, 128], strides = [1, 1]} : vector<8x384xf32> to vector<8x128xf32>
    %651 = arith.mulf %640, %650 : vector<8x128xf32>
    %652 = arith.addf %649, %651 : vector<8x128xf32>
    %653 = math.tanh %652 : vector<8x128xf32>
    %654 = arith.subf %579, %653 : vector<8x128xf32>
    %655 = arith.mulf %648, %654 : vector<8x128xf32>
    %656 = arith.addf %653, %655 : vector<8x128xf32>
    %c0_i32_166 = arith.constant 0 : i32
    %657 = vector.broadcast %c0_i32_166 : i32 to vector<8x1xi32>
    %658 = arith.cmpi sgt, %11, %657 : vector<8x1xi32>
    %cst_167 = arith.constant 0.000000e+00 : f32
    %659 = vector.shape_cast %658 : vector<8x1xi1> to vector<8x1xi1>
    %660 = vector.broadcast %659 : vector<8x1xi1> to vector<8x128xi1>
    %661 = vector.broadcast %cst_167 : f32 to vector<8x128xf32>
    %662 = arith.select %660, %656, %661 : vector<8x128xi1>, vector<8x128xf32>
    %663 = vector.shape_cast %658 : vector<8x1xi1> to vector<8x1xi1>
    %664 = vector.broadcast %663 : vector<8x1xi1> to vector<8x128xi1>
    %665 = arith.select %664, %656, %579 : vector<8x128xi1>, vector<8x128xf32>
    %c7_168 = arith.constant 7 : index
    %c0_169 = arith.constant 0 : index
    %c0_170 = arith.constant 0 : index
    %666 = vector.load %arg8[%c7_168, %c0_169, %c0_170] : memref<8x8x128xf32, #tpu.memory_space<vmem>>, vector<1x8x128xf32>
    %667 = vector.shape_cast %666 : vector<1x8x128xf32> to vector<8x128xf32>
    %668 = arith.addf %667, %625 : vector<8x128xf32>
    %c7_171 = arith.constant 7 : index
    %c0_172 = arith.constant 0 : index
    %c0_173 = arith.constant 0 : index
    %669 = vector.load %arg8[%c7_171, %c0_172, %c0_173] : memref<8x8x128xf32, #tpu.memory_space<vmem>>, vector<1x8x128xf32>
    %670 = vector.shape_cast %669 : vector<1x8x128xf32> to vector<8x128xf32>
    %671 = vector.shape_cast %668 : vector<8x128xf32> to vector<1x8x128xf32>
    tpu.vector_store %arg8[%c7_171, %c0_172, %c0_173], %671 {strides = array<i32>} : memref<8x8x128xf32, #tpu.memory_space<vmem>>, vector<1x8x128xf32>,
    %c0_174 = arith.constant 0 : index
    %c0_175 = arith.constant 0 : index
    %c0_176 = arith.constant 0 : index
    %672 = vector.load %arg8[%c0_174, %c0_175, %c0_176] : memref<8x8x128xf32, #tpu.memory_space<vmem>>, vector<1x8x128xf32>
    %673 = vector.shape_cast %672 : vector<1x8x128xf32> to vector<8x128xf32>
    %674 = arith.addf %673, %662 : vector<8x128xf32>
    %c0_177 = arith.constant 0 : index
    %c0_178 = arith.constant 0 : index
    %c0_179 = arith.constant 0 : index
    %675 = vector.load %arg8[%c0_177, %c0_178, %c0_179] : memref<8x8x128xf32, #tpu.memory_space<vmem>>, vector<1x8x128xf32>
    %676 = vector.shape_cast %675 : vector<1x8x128xf32> to vector<8x128xf32>
    %677 = vector.shape_cast %674 : vector<8x128xf32> to vector<1x8x128xf32>
    tpu.vector_store %arg8[%c0_177, %c0_178, %c0_179], %677 {strides = array<i32>} : memref<8x8x128xf32, #tpu.memory_space<vmem>>, vector<1x8x128xf32>,
    %c0_180 = arith.constant 0 : index
    %c0_181 = arith.constant 0 : index
    %c0_182 = arith.constant 0 : index
    %678 = vector.load %arg9[%c0_180, %c0_181, %c0_182] : memref<2x8x128xf32, #tpu.memory_space<vmem>>, vector<1x8x128xf32>
    %679 = vector.shape_cast %678 : vector<1x8x128xf32> to vector<8x128xf32>
    %680 = vector.shape_cast %628 : vector<8x128xf32> to vector<1x8x128xf32>
    tpu.vector_store %arg9[%c0_180, %c0_181, %c0_182], %680 {strides = array<i32>} : memref<2x8x128xf32, #tpu.memory_space<vmem>>, vector<1x8x128xf32>,
    %c1_183 = arith.constant 1 : index
    %c0_184 = arith.constant 0 : index
    %c0_185 = arith.constant 0 : index
    %681 = vector.load %arg9[%c1_183, %c0_184, %c0_185] : memref<2x8x128xf32, #tpu.memory_space<vmem>>, vector<1x8x128xf32>
    %682 = vector.shape_cast %681 : vector<1x8x128xf32> to vector<8x128xf32>
    %683 = vector.shape_cast %665 : vector<8x128xf32> to vector<1x8x128xf32>
    tpu.vector_store %arg9[%c1_183, %c0_184, %c0_185], %683 {strides = array<i32>} : memref<2x8x128xf32, #tpu.memory_space<vmem>>, vector<1x8x128xf32>,
    return
  }
}

</mosaic_0001>

<llo_original>
// kernel: tpu_custom_call.1
$region0: #{tpu_custom_call.1}
  #allocation0 [shape = 'u32[]', space=smem, size = 0x4, offset = 0x4, fixed_abs, tag = 'smem constant byte address 0x4 - core index']
  #allocation1 [shape = 'u32[144,128]{1,0:T(1,128)}', space=vmem, size = 0x12000, scoped, tag = 'internal scratch']
  #allocation2 [shape = 'f32[64,768]{1,0:T(8,128)}', space=vmem, size = 0x30000, scoped, tag = 'scratch operand']
  %s0 = inlined_call_operand.hbm [shape: f32[64,128], index: 0, kind: input, shape index: {}]
  %s1 = inlined_call_operand.vmem [shape: s32[8,1], index: 1, kind: input, shape index: {}]
  %s2 = inlined_call_operand.hbm [shape: f32[128,768], index: 2, kind: input, shape index: {}]
  %s3 = inlined_call_operand.vmem [shape: f32[1,768], index: 3, kind: input, shape index: {}]
  %s4 = inlined_call_operand.hbm [shape: f32[128,384], index: 4, kind: input, shape index: {}]
  %s5 = inlined_call_operand.vmem [shape: f32[1,384], index: 5, kind: input, shape index: {}]
  %s6 = inlined_call_operand.hbm [shape: f32[128,384], index: 6, kind: input, shape index: {}]
  %s7 = inlined_call_operand.vmem [shape: f32[1,384], index: 7, kind: input, shape index: {}]
  %s8 = inlined_call_operand.hbm [shape: f32[8,8,128], index: 8, kind: output, shape index: {0}]
  %s9 = inlined_call_operand.hbm [shape: f32[2,8,128], index: 9, kind: output, shape index: {1}]
  %10 = xla_tuple %s8, %s9
  %s11 = sld [smem:[#allocation0]]
  $region66: #{tpu_custom_call.1} parent=0
    _
  %s13 = ssub.s32 1, %s11
  %s14 = scalar_select 0, %s13, %s11
  $region1: #{tpu_custom_call.1} parent=0
    #allocation3 [shape = 'u8[32768]{0}', space=vmem, size = 0x8000, scoped, tag = 'input window, operand 0, single buffered']
    #allocation4 [shape = 's32[1]{0}', space=sflag, size = 0x4, scoped, tag = 'scoped memory for tpu_custom_call.1']
    #allocation5 [shape = 's32[1]{0}', space=sflag, size = 0x4, scoped, tag = 'scoped memory for tpu_custom_call.1']
    #allocation6 [shape = 'u8[393216]{0}', space=vmem, size = 0x60000, scoped, tag = 'input window, operand 2, single buffered']
    #allocation7 [shape = 's32[1]{0}', space=sflag, size = 0x4, scoped, tag = 'scoped memory for tpu_custom_call.1']
    #allocation8 [shape = 'u8[196608]{0}', space=vmem, size = 0x30000, scoped, tag = 'input window, operand 4, single buffered']
    #allocation9 [shape = 'u8[196608]{0}', space=vmem, size = 0x30000, scoped, tag = 'input window, operand 6, single buffered']
    #allocation10 [shape = 's32[1]{0}', space=sflag, size = 0x4, scoped, tag = 'scoped memory for tpu_custom_call.1']
    #allocation11 [shape = 'u8[32768]{0}', space=vmem, size = 0x8000, scoped, tag = 'output window, operand 0, single buffered']
    #allocation12 [shape = 'u8[8192]{0}', space=vmem, size = 0x2000, scoped, tag = 'output window, operand 1, single buffered']
    #allocation13 [shape = 's32[1]{0}', space=sflag, size = 0x4, scoped, tag = 'scoped memory for tpu_custom_call.1']
    %15 = vsyncpa [#allocation4], 0
    %16 = vsyncpa [#allocation7], 0
    %17 = vsyncpa [#allocation10], 0
    %18 = vsyncpa [#allocation5], 0
    %19 = vsyncpa [#allocation13], 0
    // Predicated region
    $region2: #{tpu_custom_call.1} parent=1 // pred_check
      _
    $region3: #{tpu_custom_call.1} parent=1 // pred_check_branch
      %21 = sbr.rel (0) target = $region5
    $region4: #{tpu_custom_call.1} parent=1 // pred_region
      %s23 = ssub.s32 1024, 1024
      %24 = vsyncadd [#allocation4], %s23
      %s25 = sshll.u32 [#allocation3], 4
      %s26 = int_to_ptr.vmem [resolvable:$true] %s25
      %31 = dma.hbm_to_vmem [thread:$0]  %s0, 1024, %s26, [#allocation4], 128, 128, 8
    $region5: #{tpu_custom_call.1} parent=1 // pred_fallthru
      _
    // Predicated region
    $region6: #{tpu_custom_call.1} parent=1 // pred_check
      _
    $region7: #{tpu_custom_call.1} parent=1 // pred_check_branch
      %33 = sbr.rel (0) target = $region9
    $region8: #{tpu_custom_call.1} parent=1 // pred_region
      _
    $region9: #{tpu_custom_call.1} parent=1 // pred_fallthru
      _
    // Predicated region
    $region10: #{tpu_custom_call.1} parent=1 // pred_check
      _
    $region11: #{tpu_custom_call.1} parent=1 // pred_check_branch
      %35 = sbr.rel (0) target = $region13
    $region12: #{tpu_custom_call.1} parent=1 // pred_region
      %s37 = ssub.s32 12288, 12288
      %38 = vsyncadd [#allocation7], %s37
      %s39 = sshll.u32 [#allocation6], 4
      %s40 = int_to_ptr.vmem [resolvable:$true] %s39
      %45 = dma.hbm_to_vmem [thread:$0]  %s2, 12288, %s40, [#allocation7], 768, 768, 48
    $region13: #{tpu_custom_call.1} parent=1 // pred_fallthru
      _
    // Predicated region
    $region14: #{tpu_custom_call.1} parent=1 // pred_check
      _
    $region15: #{tpu_custom_call.1} parent=1 // pred_check_branch
      %47 = sbr.rel (0) target = $region17
    $region16: #{tpu_custom_call.1} parent=1 // pred_region
      _
    $region17: #{tpu_custom_call.1} parent=1 // pred_fallthru
      _
    // Predicated region
    $region18: #{tpu_custom_call.1} parent=1 // pred_check
      _
    $region19: #{tpu_custom_call.1} parent=1 // pred_check_branch
      %49 = sbr.rel (0) target = $region21
    $region20: #{tpu_custom_call.1} parent=1 // pred_region
      %s51 = ssub.s32 6144, 6144
      %52 = vsyncadd [#allocation7], %s51
      %s53 = sshll.u32 [#allocation8], 4
      %s54 = int_to_ptr.vmem [resolvable:$true] %s53
      %59 = dma.hbm_to_vmem [thread:$0]  %s4, 6144, %s54, [#allocation7], 384, 384, 24
    $region21: #{tpu_custom_call.1} parent=1 // pred_fallthru
      _
    // Predicated region
    $region22: #{tpu_custom_call.1} parent=1 // pred_check
      _
    $region23: #{tpu_custom_call.1} parent=1 // pred_check_branch
      %61 = sbr.rel (0) target = $region25
    $region24: #{tpu_custom_call.1} parent=1 // pred_region
      _
    $region25: #{tpu_custom_call.1} parent=1 // pred_fallthru
      _
    // Predicated region
    $region26: #{tpu_custom_call.1} parent=1 // pred_check
      _
    $region27: #{tpu_custom_call.1} parent=1 // pred_check_branch
      %63 = sbr.rel (0) target = $region29
    $region28: #{tpu_custom_call.1} parent=1 // pred_region
      %s65 = ssub.s32 6144, 6144
      %66 = vsyncadd [#allocation10], %s65
      %s67 = sshll.u32 [#allocation9], 4
      %s68 = int_to_ptr.vmem [resolvable:$true] %s67
      %73 = dma.hbm_to_vmem [thread:$0]  %s6, 6144, %s68, [#allocation10], 384, 384, 24
    $region29: #{tpu_custom_call.1} parent=1 // pred_fallthru
      _
    // Predicated region
    $region30: #{tpu_custom_call.1} parent=1 // pred_check
      _
    $region31: #{tpu_custom_call.1} parent=1 // pred_check_branch
      %75 = sbr.rel (0) target = $region33
    $region32: #{tpu_custom_call.1} parent=1 // pred_region
      _
    $region33: #{tpu_custom_call.1} parent=1 // pred_fallthru
      _
    // Predicated region
    $region34: #{tpu_custom_call.1} parent=1 // pred_check
      _
    $region35: #{tpu_custom_call.1} parent=1 // pred_check_branch
      %77 = sbr.rel (0) target = $region37
    $region36: #{tpu_custom_call.1} parent=1 // pred_region
      %78 = dma.done [#allocation4], 1024
    $region37: #{tpu_custom_call.1} parent=1 // pred_fallthru
      _
    // Predicated region
    $region38: #{tpu_custom_call.1} parent=1 // pred_check
      _
    $region39: #{tpu_custom_call.1} parent=1 // pred_check_branch
      %80 = sbr.rel (0) target = $region41
    $region40: #{tpu_custom_call.1} parent=1 // pred_region
      %81 = dma.done [#allocation7], 12288
    $region41: #{tpu_custom_call.1} parent=1 // pred_fallthru
      _
    // Predicated region
    $region42: #{tpu_custom_call.1} parent=1 // pred_check
      _
    $region43: #{tpu_custom_call.1} parent=1 // pred_check_branch
      %83 = sbr.rel (0) target = $region45
    $region44: #{tpu_custom_call.1} parent=1 // pred_region
      %84 = dma.done [#allocation7], 6144
    $region45: #{tpu_custom_call.1} parent=1 // pred_fallthru
      _
    // Predicated region
    $region46: #{tpu_custom_call.1} parent=1 // pred_check
      _
    $region47: #{tpu_custom_call.1} parent=1 // pred_check_branch
      %86 = sbr.rel (0) target = $region49
    $region48: #{tpu_custom_call.1} parent=1 // pred_region
      %87 = dma.done [#allocation10], 6144
    $region49: #{tpu_custom_call.1} parent=1 // pred_fallthru
      _
    %v88 = vld [vmem:[#allocation3] sm:$0xff]
    %v89 = vld [vmem:[#allocation3 + $0x8] sm:$0xff]
    %v90 = vld [vmem:[#allocation3 + $0x10] sm:$0xff]
    %v91 = vld [vmem:[#allocation3 + $0x18] sm:$0xff]
    %v92 = vld [vmem:[#allocation3 + $0x20] sm:$0xff]
    %v93 = vld [vmem:[#allocation3 + $0x28] sm:$0xff]
    %v94 = vld [vmem:[#allocation3 + $0x30] sm:$0xff]
    %v95 = vld [vmem:[#allocation3 + $0x38] sm:$0xff]
    %v96 = vld [vmem:[#allocation6] sm:$0xff]
    %v97 = vld [vmem:[#allocation6 + $0x8] sm:$0xff]
    %v98 = vld [vmem:[#allocation6 + $0x10] sm:$0xff]
    %v99 = vld [vmem:[#allocation6 + $0x18] sm:$0xff]
    %v100 = vld [vmem:[#allocation6 + $0x20] sm:$0xff]
    %v101 = vld [vmem:[#allocation6 + $0x28] sm:$0xff]
    %v102 = vld [vmem:[#allocation6 + $0x30] sm:$0xff]
    %v103 = vld [vmem:[#allocation6 + $0x38] sm:$0xff]
    %v104 = vld [vmem:[#allocation6 + $0x40] sm:$0xff]
    %v105 = vld [vmem:[#allocation6 + $0x48] sm:$0xff]
    %v106 = vld [vmem:[#allocation6 + $0x50] sm:$0xff]
    %v107 = vld [vmem:[#allocation6 + $0x58] sm:$0xff]
    %v108 = vld [vmem:[#allocation6 + $0x60] sm:$0xff]
    %v109 = vld [vmem:[#allocation6 + $0x68] sm:$0xff]
    %v110 = vld [vmem:[#allocation6 + $0x70] sm:$0xff]
    %v111 = vld [vmem:[#allocation6 + $0x78] sm:$0xff]
    %v112 = vld [vmem:[#allocation6 + $0x80] sm:$0xff]
    %v113 = vld [vmem:[#allocation6 + $0x88] sm:$0xff]
    %v114 = vld [vmem:[#allocation6 + $0x90] sm:$0xff]
    %v115 = vld [vmem:[#allocation6 + $0x98] sm:$0xff]
    %v116 = vld [vmem:[#allocation6 + $0xa0] sm:$0xff]
    %v117 = vld [vmem:[#allocation6 + $0xa8] sm:$0xff]
    %v118 = vld [vmem:[#allocation6 + $0xb0] sm:$0xff]
    %v119 = vld [vmem:[#allocation6 + $0xb8] sm:$0xff]
    %v120 = vld [vmem:[#allocation6 + $0xc0] sm:$0xff]
    %v121 = vld [vmem:[#allocation6 + $0xc8] sm:$0xff]
    %v122 = vld [vmem:[#allocation6 + $0xd0] sm:$0xff]
    %v123 = vld [vmem:[#allocation6 + $0xd8] sm:$0xff]
    %v124 = vld [vmem:[#allocation6 + $0xe0] sm:$0xff]
    %v125 = vld [vmem:[#allocation6 + $0xe8] sm:$0xff]
    %v126 = vld [vmem:[#allocation6 + $0xf0] sm:$0xff]
    %v127 = vld [vmem:[#allocation6 + $0xf8] sm:$0xff]
    %v128 = vld [vmem:[#allocation6 + $0x100] sm:$0xff]
    %v129 = vld [vmem:[#allocation6 + $0x108] sm:$0xff]
    %v130 = vld [vmem:[#allocation6 + $0x110] sm:$0xff]
    %v131 = vld [vmem:[#allocation6 + $0x118] sm:$0xff]
    %v132 = vld [vmem:[#allocation6 + $0x120] sm:$0xff]
    %v133 = vld [vmem:[#allocation6 + $0x128] sm:$0xff]
    %v134 = vld [vmem:[#allocation6 + $0x130] sm:$0xff]
    %v135 = vld [vmem:[#allocation6 + $0x138] sm:$0xff]
    %v136 = vld [vmem:[#allocation6 + $0x140] sm:$0xff]
    %v137 = vld [vmem:[#allocation6 + $0x148] sm:$0xff]
    %v138 = vld [vmem:[#allocation6 + $0x150] sm:$0xff]
    %v139 = vld [vmem:[#allocation6 + $0x158] sm:$0xff]
    %v140 = vld [vmem:[#allocation6 + $0x160] sm:$0xff]
    %v141 = vld [vmem:[#allocation6 + $0x168] sm:$0xff]
    %v142 = vld [vmem:[#allocation6 + $0x170] sm:$0xff]
    %v143 = vld [vmem:[#allocation6 + $0x178] sm:$0xff]
    %v144 = vld [vmem:[#allocation6 + $0x180] sm:$0xff]
    %v145 = vld [vmem:[#allocation6 + $0x188] sm:$0xff]
    %v146 = vld [vmem:[#allocation6 + $0x190] sm:$0xff]
    %v147 = vld [vmem:[#allocation6 + $0x198] sm:$0xff]
    %v148 = vld [vmem:[#allocation6 + $0x1a0] sm:$0xff]
    %v149 = vld [vmem:[#allocation6 + $0x1a8] sm:$0xff]
    %v150 = vld [vmem:[#allocation6 + $0x1b0] sm:$0xff]
    %v151 = vld [vmem:[#allocation6 + $0x1b8] sm:$0xff]
    %v152 = vld [vmem:[#allocation6 + $0x1c0] sm:$0xff]
    %v153 = vld [vmem:[#allocation6 + $0x1c8] sm:$0xff]
    %v154 = vld [vmem:[#allocation6 + $0x1d0] sm:$0xff]
    %v155 = vld [vmem:[#allocation6 + $0x1d8] sm:$0xff]
    %v156 = vld [vmem:[#allocation6 + $0x1e0] sm:$0xff]
    %v157 = vld [vmem:[#allocation6 + $0x1e8] sm:$0xff]
    %v158 = vld [vmem:[#allocation6 + $0x1f0] sm:$0xff]
    %v159 = vld [vmem:[#allocation6 + $0x1f8] sm:$0xff]
    %v160 = vld [vmem:[#allocation6 + $0x200] sm:$0xff]
    %v161 = vld [vmem:[#allocation6 + $0x208] sm:$0xff]
    %v162 = vld [vmem:[#allocation6 + $0x210] sm:$0xff]
    %v163 = vld [vmem:[#allocation6 + $0x218] sm:$0xff]
    %v164 = vld [vmem:[#allocation6 + $0x220] sm:$0xff]
    %v165 = vld [vmem:[#allocation6 + $0x228] sm:$0xff]
    %v166 = vld [vmem:[#allocation6 + $0x230] sm:$0xff]
    %v167 = vld [vmem:[#allocation6 + $0x238] sm:$0xff]
    %v168 = vld [vmem:[#allocation6 + $0x240] sm:$0xff]
    %v169 = vld [vmem:[#allocation6 + $0x248] sm:$0xff]
    %v170 = vld [vmem:[#allocation6 + $0x250] sm:$0xff]
    %v171 = vld [vmem:[#allocation6 + $0x258] sm:$0xff]
    %v172 = vld [vmem:[#allocation6 + $0x260] sm:$0xff]
    %v173 = vld [vmem:[#allocation6 + $0x268] sm:$0xff]
    %v174 = vld [vmem:[#allocation6 + $0x270] sm:$0xff]
    %v175 = vld [vmem:[#allocation6 + $0x278] sm:$0xff]
    %v176 = vld [vmem:[#allocation6 + $0x280] sm:$0xff]
    %v177 = vld [vmem:[#allocation6 + $0x288] sm:$0xff]
    %v178 = vld [vmem:[#allocation6 + $0x290] sm:$0xff]
    %v179 = vld [vmem:[#allocation6 + $0x298] sm:$0xff]
    %v180 = vld [vmem:[#allocation6 + $0x2a0] sm:$0xff]
    %v181 = vld [vmem:[#allocation6 + $0x2a8] sm:$0xff]
    %v182 = vld [vmem:[#allocation6 + $0x2b0] sm:$0xff]
    %v183 = vld [vmem:[#allocation6 + $0x2b8] sm:$0xff]
    %v184 = vld [vmem:[#allocation6 + $0x2c0] sm:$0xff]
    %v185 = vld [vmem:[#allocation6 + $0x2c8] sm:$0xff]
    %v186 = vld [vmem:[#allocation6 + $0x2d0] sm:$0xff]
    %v187 = vld [vmem:[#allocation6 + $0x2d8] sm:$0xff]
    %v188 = vld [vmem:[#allocation6 + $0x2e0] sm:$0xff]
    %v189 = vld [vmem:[#allocation6 + $0x2e8] sm:$0xff]
    %v190 = vld [vmem:[#allocation6 + $0x2f0] sm:$0xff]
    %v191 = vld [vmem:[#allocation6 + $0x2f8] sm:$0xff]
    %v192 = vld [vmem:[%s3] sm:$0x3f]
    %v194 = vlaneseq
    %v195 = vshrl.u32 %v194, 7
    %v196 = vsub.s32 0, %v195
    %v197 = vrot.slane %v192, %v196
    %v198 = vlaneseq
    %v199 = vshrl.u32 %v198, 7
    %v200 = vsub.s32 1, %v199
    %v201 = vrot.slane %v192, %v200
    %v202 = vlaneseq
    %v203 = vshrl.u32 %v202, 7
    %v204 = vsub.s32 2, %v203
    %v205 = vrot.slane %v192, %v204
    %v206 = vlaneseq
    %v207 = vshrl.u32 %v206, 7
    %v208 = vsub.s32 3, %v207
    %v209 = vrot.slane %v192, %v208
    %v210 = vlaneseq
    %v211 = vshrl.u32 %v210, 7
    %v212 = vsub.s32 4, %v211
    %v213 = vrot.slane %v192, %v212
    %v214 = vlaneseq
    %v215 = vshrl.u32 %v214, 7
    %v216 = vsub.s32 5, %v215
    %v217 = vrot.slane %v192, %v216
    %224 = vmatprep.subr.mxu0 %v187
    %225 = vmatpush1.msra.mxu0 %v186
    %226 = vmatprep.subr.mxu0 %v181
    %227 = vmatpush1.msra.mxu0 %v180
    %228 = vmatprep.subr.mxu0 %v175
    %229 = vmatpush1.msra.mxu0 %v174
    %230 = vmatprep.subr.mxu0 %v169
    %231 = vmatpush1.msra.mxu0 %v168
    %232 = vmatprep.subr.mxu0 %v163
    %233 = vmatpush1.msra.mxu0 %v162
    %234 = vmatprep.subr.mxu0 %v157
    %235 = vmatpush1.msra.mxu0 %v156
    %236 = vmatprep.subr.mxu0 %v151
    %237 = vmatpush1.msra.mxu0 %v150
    %238 = vmatprep.subr.mxu0 %v145
    %239 = vmatpush1.msra.mxu0 %v144
    %240 = vmatprep.subr.mxu0 %v139
    %241 = vmatpush1.msra.mxu0 %v138
    %242 = vmatprep.subr.mxu0 %v133
    %243 = vmatpush1.msra.mxu0 %v132
    %244 = vmatprep.subr.mxu0 %v127
    %245 = vmatpush1.msra.mxu0 %v126
    %246 = vmatprep.subr.mxu0 %v121
    %247 = vmatpush1.msra.mxu0 %v120
    %248 = vmatprep.subr.mxu0 %v115
    %249 = vmatpush1.msra.mxu0 %v114
    %250 = vmatprep.subr.mxu0 %v109
    %251 = vmatpush1.msra.mxu0 %v108
    %252 = vmatprep.subr.mxu0 %v103
    %253 = vmatpush1.msra.mxu0 %v102
    %254 = vmatprep.subr.mxu0 %v97
    %255 = vmatpush1.msra.mxu0 %v96
    %256 = vmatprep.subr.mxu0 0.0
    %257 = vmatpush2.msra.mxu0 0.0
    %258 = vmatprep.subr.mxu0 0.0
    %259 = vmatpush2.msra.mxu0 0.0
    %260 = vmatprep.subr.mxu0 0.0
    %261 = vmatpush2.msra.mxu0 0.0
    %262 = vmatprep.subr.mxu0 0.0
    %263 = vmatpush2.msra.mxu0 0.0
    %264 = vmatprep.subr.mxu0 0.0
    %265 = vmatpush2.msra.mxu0 0.0
    %266 = vmatprep.subr.mxu0 0.0
    %267 = vmatpush2.msra.mxu0 0.0
    %268 = vmatprep.subr.mxu0 0.0
    %269 = vmatpush2.msra.mxu0 0.0
    %270 = vmatprep.subr.mxu0 0.0
    %271 = vmatpush2.msra.mxu0 0.0
    %272 = vmatprep.subr.mxu0 0.0
    %273 = vmatpush2.msra.mxu0 0.0
    %274 = vmatprep.subr.mxu0 0.0
    %275 = vmatpush2.msra.mxu0 0.0
    %276 = vmatprep.subr.mxu0 0.0
    %277 = vmatpush2.msra.mxu0 0.0
    %278 = vmatprep.subr.mxu0 0.0
    %279 = vmatpush2.msra.mxu0 0.0
    %280 = vmatprep.subr.mxu0 0.0
    %281 = vmatpush2.msra.mxu0 0.0
    %282 = vmatprep.subr.mxu0 0.0
    %283 = vmatpush2.msra.mxu0 0.0
    %284 = vmatprep.subr.mxu0 0.0
    %285 = vmatpush2.msra.mxu0 0.0
    %286 = vmatprep.subr.mxu0 0.0
    %287 = vmatpush2.msra.mxu0 0.0
    %288 = vmatprep.mubr.f32.mxu0 0.0
    %289 = vmatmul.mubr.f32.gmra.mxu0 %v88
    %v290 = vpop.f32.mrf.mxu0
    %v291 = vadd.f32 %v197, %v290
    %v292 = vpop.f32.mrf.mxu0
    %v293 = vadd.f32 %v201, %v292
    %294 = vmatprep.mubr.f32.mxu0 0.0
    %295 = vmatmul.mubr.f32.gmra.mxu0 %v89
    %v296 = vpop.f32.mrf.mxu0
    %v297 = vadd.f32 %v197, %v296
    %v298 = vpop.f32.mrf.mxu0
    %v299 = vadd.f32 %v201, %v298
    %300 = vmatprep.mubr.f32.mxu0 0.0
    %301 = vmatmul.mubr.f32.gmra.mxu0 %v90
    %v302 = vpop.f32.mrf.mxu0
    %v303 = vadd.f32 %v197, %v302
    %v304 = vpop.f32.mrf.mxu0
    %v305 = vadd.f32 %v201, %v304
    %306 = vmatprep.mubr.f32.mxu0 0.0
    %307 = vmatmul.mubr.f32.gmra.mxu0 %v91
    %v308 = vpop.f32.mrf.mxu0
    %v309 = vadd.f32 %v197, %v308
    %v310 = vpop.f32.mrf.mxu0
    %v311 = vadd.f32 %v201, %v310
    %312 = vmatprep.mubr.f32.mxu0 0.0
    %313 = vmatmul.mubr.f32.gmra.mxu0 %v92
    %v314 = vpop.f32.mrf.mxu0
    %v315 = vadd.f32 %v197, %v314
    %v316 = vpop.f32.mrf.mxu0
    %v317 = vadd.f32 %v201, %v316
    %318 = vmatprep.mubr.f32.mxu0 0.0
    %319 = vmatmul.mubr.f32.gmra.mxu0 %v93
    %v320 = vpop.f32.mrf.mxu0
    %v321 = vadd.f32 %v197, %v320
    %v322 = vpop.f32.mrf.mxu0
    %v323 = vadd.f32 %v201, %v322
    %324 = vmatprep.mubr.f32.mxu0 0.0
    %325 = vmatmul.mubr.f32.gmra.mxu0 %v94
    %v326 = vpop.f32.mrf.mxu0
    %v327 = vadd.f32 %v197, %v326
    %v328 = vpop.f32.mrf.mxu0
    %v329 = vadd.f32 %v201, %v328
    %330 = vmatprep.mubr.f32.mxu0 0.0
    %331 = vmatmul.mubr.f32.gmra.mxu0 %v95
    %v332 = vpop.f32.mrf.mxu0
    %v333 = vadd.f32 %v197, %v332
    %v334 = vpop.f32.mrf.mxu0
    %v335 = vadd.f32 %v201, %v334
    %336 = vdwg.mxu0
    %337 = vmatprep.subr.mxu0 %v189
    %338 = vmatpush1.msra.mxu0 %v188
    %339 = vmatprep.subr.mxu0 %v183
    %340 = vmatpush1.msra.mxu0 %v182
    %341 = vmatprep.subr.mxu0 %v177
    %342 = vmatpush1.msra.mxu0 %v176
    %343 = vmatprep.subr.mxu0 %v171
    %344 = vmatpush1.msra.mxu0 %v170
    %345 = vmatprep.subr.mxu0 %v165
    %346 = vmatpush1.msra.mxu0 %v164
    %347 = vmatprep.subr.mxu0 %v159
    %348 = vmatpush1.msra.mxu0 %v158
    %349 = vmatprep.subr.mxu0 %v153
    %350 = vmatpush1.msra.mxu0 %v152
    %351 = vmatprep.subr.mxu0 %v147
    %352 = vmatpush1.msra.mxu0 %v146
    %353 = vmatprep.subr.mxu0 %v141
    %354 = vmatpush1.msra.mxu0 %v140
    %355 = vmatprep.subr.mxu0 %v135
    %356 = vmatpush1.msra.mxu0 %v134
    %357 = vmatprep.subr.mxu0 %v129
    %358 = vmatpush1.msra.mxu0 %v128
    %359 = vmatprep.subr.mxu0 %v123
    %360 = vmatpush1.msra.mxu0 %v122
    %361 = vmatprep.subr.mxu0 %v117
    %362 = vmatpush1.msra.mxu0 %v116
    %363 = vmatprep.subr.mxu0 %v111
    %364 = vmatpush1.msra.mxu0 %v110
    %365 = vmatprep.subr.mxu0 %v105
    %366 = vmatpush1.msra.mxu0 %v104
    %367 = vmatprep.subr.mxu0 %v99
    %368 = vmatpush1.msra.mxu0 %v98
    %369 = vmatprep.subr.mxu0 0.0
    %370 = vmatpush2.msra.mxu0 0.0
    %371 = vmatprep.subr.mxu0 0.0
    %372 = vmatpush2.msra.mxu0 0.0
    %373 = vmatprep.subr.mxu0 0.0
    %374 = vmatpush2.msra.mxu0 0.0
    %375 = vmatprep.subr.mxu0 0.0
    %376 = vmatpush2.msra.mxu0 0.0
    %377 = vmatprep.subr.mxu0 0.0
    %378 = vmatpush2.msra.mxu0 0.0
    %379 = vmatprep.subr.mxu0 0.0
    %380 = vmatpush2.msra.mxu0 0.0
    %381 = vmatprep.subr.mxu0 0.0
    %382 = vmatpush2.msra.mxu0 0.0
    %383 = vmatprep.subr.mxu0 0.0
    %384 = vmatpush2.msra.mxu0 0.0
    %385 = vmatprep.subr.mxu0 0.0
    %386 = vmatpush2.msra.mxu0 0.0
    %387 = vmatprep.subr.mxu0 0.0
    %388 = vmatpush2.msra.mxu0 0.0
    %389 = vmatprep.subr.mxu0 0.0
    %390 = vmatpush2.msra.mxu0 0.0
    %391 = vmatprep.subr.mxu0 0.0
    %392 = vmatpush2.msra.mxu0 0.0
    %393 = vmatprep.subr.mxu0 0.0
    %394 = vmatpush2.msra.mxu0 0.0
    %395 = vmatprep.subr.mxu0 0.0
    %396 = vmatpush2.msra.mxu0 0.0
    %397 = vmatprep.subr.mxu0 0.0
    %398 = vmatpush2.msra.mxu0 0.0
    %399 = vmatprep.subr.mxu0 0.0
    %400 = vmatpush2.msra.mxu0 0.0
    %401 = vmatprep.mubr.f32.mxu0 0.0
    %402 = vmatmul.mubr.f32.gmra.mxu0 %v88
    %v403 = vpop.f32.mrf.mxu0
    %v404 = vadd.f32 %v205, %v403
    %v405 = vpop.f32.mrf.mxu0
    %v406 = vadd.f32 %v209, %v405
    %407 = vmatprep.mubr.f32.mxu0 0.0
    %408 = vmatmul.mubr.f32.gmra.mxu0 %v89
    %v409 = vpop.f32.mrf.mxu0
    %v410 = vadd.f32 %v205, %v409
    %v411 = vpop.f32.mrf.mxu0
    %v412 = vadd.f32 %v209, %v411
    %413 = vmatprep.mubr.f32.mxu0 0.0
    %414 = vmatmul.mubr.f32.gmra.mxu0 %v90
    %v415 = vpop.f32.mrf.mxu0
    %v416 = vadd.f32 %v205, %v415
    %v417 = vpop.f32.mrf.mxu0
    %v418 = vadd.f32 %v209, %v417
    %419 = vmatprep.mubr.f32.mxu0 0.0
    %420 = vmatmul.mubr.f32.gmra.mxu0 %v91
    %v421 = vpop.f32.mrf.mxu0
    %v422 = vadd.f32 %v205, %v421
    %v423 = vpop.f32.mrf.mxu0
    %v424 = vadd.f32 %v209, %v423
    %425 = vmatprep.mubr.f32.mxu0 0.0
    %426 = vmatmul.mubr.f32.gmra.mxu0 %v92
    %v427 = vpop.f32.mrf.mxu0
    %v428 = vadd.f32 %v205, %v427
    %v429 = vpop.f32.mrf.mxu0
    %v430 = vadd.f32 %v209, %v429
    %431 = vmatprep.mubr.f32.mxu0 0.0
    %432 = vmatmul.mubr.f32.gmra.mxu0 %v93
    %v433 = vpop.f32.mrf.mxu0
    %v434 = vadd.f32 %v205, %v433
    %v435 = vpop.f32.mrf.mxu0
    %v436 = vadd.f32 %v209, %v435
    %437 = vmatprep.mubr.f32.mxu0 0.0
    %438 = vmatmul.mubr.f32.gmra.mxu0 %v94
    %v439 = vpop.f32.mrf.mxu0
    %v440 = vadd.f32 %v205, %v439
    %v441 = vpop.f32.mrf.mxu0
    %v442 = vadd.f32 %v209, %v441
    %443 = vmatprep.mubr.f32.mxu0 0.0
    %444 = vmatmul.mubr.f32.gmra.mxu0 %v95
    %v445 = vpop.f32.mrf.mxu0
    %v446 = vadd.f32 %v205, %v445
    %v447 = vpop.f32.mrf.mxu0
    %v448 = vadd.f32 %v209, %v447
    %449 = vdwg.mxu0
    %450 = vmatprep.subr.mxu0 %v191
    %451 = vmatpush1.msra.mxu0 %v190
    %452 = vmatprep.subr.mxu0 %v185
    %453 = vmatpush1.msra.mxu0 %v184
    %454 = vmatprep.subr.mxu0 %v179
    %455 = vmatpush1.msra.mxu0 %v178
    %456 = vmatprep.subr.mxu0 %v173
    %457 = vmatpush1.msra.mxu0 %v172
    %458 = vmatprep.subr.mxu0 %v167
    %459 = vmatpush1.msra.mxu0 %v166
    %460 = vmatprep.subr.mxu0 %v161
    %461 = vmatpush1.msra.mxu0 %v160
    %462 = vmatprep.subr.mxu0 %v155
    %463 = vmatpush1.msra.mxu0 %v154
    %464 = vmatprep.subr.mxu0 %v149
    %465 = vmatpush1.msra.mxu0 %v148
    %466 = vmatprep.subr.mxu0 %v143
    %467 = vmatpush1.msra.mxu0 %v142
    %468 = vmatprep.subr.mxu0 %v137
    %469 = vmatpush1.msra.mxu0 %v136
    %470 = vmatprep.subr.mxu0 %v131
    %471 = vmatpush1.msra.mxu0 %v130
    %472 = vmatprep.subr.mxu0 %v125
    %473 = vmatpush1.msra.mxu0 %v124
    %474 = vmatprep.subr.mxu0 %v119
    %475 = vmatpush1.msra.mxu0 %v118
    %476 = vmatprep.subr.mxu0 %v113
    %477 = vmatpush1.msra.mxu0 %v112
    %478 = vmatprep.subr.mxu0 %v107
    %479 = vmatpush1.msra.mxu0 %v106
    %480 = vmatprep.subr.mxu0 %v101
    %481 = vmatpush1.msra.mxu0 %v100
    %482 = vmatprep.subr.mxu0 0.0
    %483 = vmatpush2.msra.mxu0 0.0
    %484 = vmatprep.subr.mxu0 0.0
    %485 = vmatpush2.msra.mxu0 0.0
    %486 = vmatprep.subr.mxu0 0.0
    %487 = vmatpush2.msra.mxu0 0.0
    %488 = vmatprep.subr.mxu0 0.0
    %489 = vmatpush2.msra.mxu0 0.0
    %490 = vmatprep.subr.mxu0 0.0
    %491 = vmatpush2.msra.mxu0 0.0
    %492 = vmatprep.subr.mxu0 0.0
    %493 = vmatpush2.msra.mxu0 0.0
    %494 = vmatprep.subr.mxu0 0.0
    %495 = vmatpush2.msra.mxu0 0.0
    %496 = vmatprep.subr.mxu0 0.0
    %497 = vmatpush2.msra.mxu0 0.0
    %498 = vmatprep.subr.mxu0 0.0
    %499 = vmatpush2.msra.mxu0 0.0
    %500 = vmatprep.subr.mxu0 0.0
    %501 = vmatpush2.msra.mxu0 0.0
    %502 = vmatprep.subr.mxu0 0.0
    %503 = vmatpush2.msra.mxu0 0.0
    %504 = vmatprep.subr.mxu0 0.0
    %505 = vmatpush2.msra.mxu0 0.0
    %506 = vmatprep.subr.mxu0 0.0
    %507 = vmatpush2.msra.mxu0 0.0
    %508 = vmatprep.subr.mxu0 0.0
    %509 = vmatpush2.msra.mxu0 0.0
    %510 = vmatprep.subr.mxu0 0.0
    %511 = vmatpush2.msra.mxu0 0.0
    %512 = vmatprep.subr.mxu0 0.0
    %513 = vmatpush2.msra.mxu0 0.0
    %514 = vmatprep.mubr.f32.mxu0 0.0
    %515 = vmatmul.mubr.f32.gmra.mxu0 %v88
    %v516 = vpop.f32.mrf.mxu0
    %v517 = vadd.f32 %v213, %v516
    %v518 = vpop.f32.mrf.mxu0
    %v519 = vadd.f32 %v217, %v518
    %520 = vmatprep.mubr.f32.mxu0 0.0
    %521 = vmatmul.mubr.f32.gmra.mxu0 %v89
    %v522 = vpop.f32.mrf.mxu0
    %v523 = vadd.f32 %v213, %v522
    %v524 = vpop.f32.mrf.mxu0
    %v525 = vadd.f32 %v217, %v524
    %526 = vmatprep.mubr.f32.mxu0 0.0
    %527 = vmatmul.mubr.f32.gmra.mxu0 %v90
    %v528 = vpop.f32.mrf.mxu0
    %v529 = vadd.f32 %v213, %v528
    %v530 = vpop.f32.mrf.mxu0
    %v531 = vadd.f32 %v217, %v530
    %532 = vmatprep.mubr.f32.mxu0 0.0
    %533 = vmatmul.mubr.f32.gmra.mxu0 %v91
    %v534 = vpop.f32.mrf.mxu0
    %v535 = vadd.f32 %v213, %v534
    %v536 = vpop.f32.mrf.mxu0
    %v537 = vadd.f32 %v217, %v536
    %538 = vmatprep.mubr.f32.mxu0 0.0
    %539 = vmatmul.mubr.f32.gmra.mxu0 %v92
    %v540 = vpop.f32.mrf.mxu0
    %v541 = vadd.f32 %v213, %v540
    %v542 = vpop.f32.mrf.mxu0
    %v543 = vadd.f32 %v217, %v542
    %544 = vmatprep.mubr.f32.mxu0 0.0
    %545 = vmatmul.mubr.f32.gmra.mxu0 %v93
    %v546 = vpop.f32.mrf.mxu0
    %v547 = vadd.f32 %v213, %v546
    %v548 = vpop.f32.mrf.mxu0
    %v549 = vadd.f32 %v217, %v548
    %550 = vmatprep.mubr.f32.mxu0 0.0
    %551 = vmatmul.mubr.f32.gmra.mxu0 %v94
    %v552 = vpop.f32.mrf.mxu0
    %v553 = vadd.f32 %v213, %v552
    %v554 = vpop.f32.mrf.mxu0
    %v555 = vadd.f32 %v217, %v554
    %556 = vmatprep.mubr.f32.mxu0 0.0
    %557 = vmatmul.mubr.f32.gmra.mxu0 %v95
    %v558 = vpop.f32.mrf.mxu0
    %v559 = vadd.f32 %v213, %v558
    %v560 = vpop.f32.mrf.mxu0
    %v561 = vadd.f32 %v217, %v560
    %562 = vdwg.mxu0
    %563 = vst [vmem:[#allocation2] sm:$0xff] %v291
    %564 = vst [vmem:[#allocation2 + $0x8] sm:$0xff] %v293
    %565 = vst [vmem:[#allocation2 + $0x10] sm:$0xff] %v404
    %566 = vst [vmem:[#allocation2 + $0x18] sm:$0xff] %v406
    %567 = vst [vmem:[#allocation2 + $0x20] sm:$0xff] %v517
    %568 = vst [vmem:[#allocation2 + $0x28] sm:$0xff] %v519
    %569 = vst [vmem:[#allocation2 + $0x30] sm:$0xff] %v297
    %570 = vst [vmem:[#allocation2 + $0x38] sm:$0xff] %v299
    %571 = vst [vmem:[#allocation2 + $0x40] sm:$0xff] %v410
    %572 = vst [vmem:[#allocation2 + $0x48] sm:$0xff] %v412
    %573 = vst [vmem:[#allocation2 + $0x50] sm:$0xff] %v523
    %574 = vst [vmem:[#allocation2 + $0x58] sm:$0xff] %v525
    %575 = vst [vmem:[#allocation2 + $0x60] sm:$0xff] %v303
    %576 = vst [vmem:[#allocation2 + $0x68] sm:$0xff] %v305
    %577 = vst [vmem:[#allocation2 + $0x70] sm:$0xff] %v416
    %578 = vst [vmem:[#allocation2 + $0x78] sm:$0xff] %v418
    %579 = vst [vmem:[#allocation2 + $0x80] sm:$0xff] %v529
    %580 = vst [vmem:[#allocation2 + $0x88] sm:$0xff] %v531
    %581 = vst [vmem:[#allocation2 + $0x90] sm:$0xff] %v309
    %582 = vst [vmem:[#allocation2 + $0x98] sm:$0xff] %v311
    %583 = vst [vmem:[#allocation2 + $0xa0] sm:$0xff] %v422
    %584 = vst [vmem:[#allocation2 + $0xa8] sm:$0xff] %v424
    %585 = vst [vmem:[#allocation2 + $0xb0] sm:$0xff] %v535
    %586 = vst [vmem:[#allocation2 + $0xb8] sm:$0xff] %v537
    %587 = vst [vmem:[#allocation2 + $0xc0] sm:$0xff] %v315
    %588 = vst [vmem:[#allocation2 + $0xc8] sm:$0xff] %v317
    %589 = vst [vmem:[#allocation2 + $0xd0] sm:$0xff] %v428
    %590 = vst [vmem:[#allocation2 + $0xd8] sm:$0xff] %v430
    %591 = vst [vmem:[#allocation2 + $0xe0] sm:$0xff] %v541
    %592 = vst [vmem:[#allocation2 + $0xe8] sm:$0xff] %v543
    %593 = vst [vmem:[#allocation2 + $0xf0] sm:$0xff] %v321
    %594 = vst [vmem:[#allocation2 + $0xf8] sm:$0xff] %v323
    %595 = vst [vmem:[#allocation2 + $0x100] sm:$0xff] %v434
    %596 = vst [vmem:[#allocation2 + $0x108] sm:$0xff] %v436
    %597 = vst [vmem:[#allocation2 + $0x110] sm:$0xff] %v547
    %598 = vst [vmem:[#allocation2 + $0x118] sm:$0xff] %v549
    %599 = vst [vmem:[#allocation2 + $0x120] sm:$0xff] %v327
    %600 = vst [vmem:[#allocation2 + $0x128] sm:$0xff] %v329
    %601 = vst [vmem:[#allocation2 + $0x130] sm:$0xff] %v440
    %602 = vst [vmem:[#allocation2 + $0x138] sm:$0xff] %v442
    %603 = vst [vmem:[#allocation2 + $0x140] sm:$0xff] %v553
    %604 = vst [vmem:[#allocation2 + $0x148] sm:$0xff] %v555
    %605 = vst [vmem:[#allocation2 + $0x150] sm:$0xff] %v333
    %606 = vst [vmem:[#allocation2 + $0x158] sm:$0xff] %v335
    %607 = vst [vmem:[#allocation2 + $0x160] sm:$0xff] %v446
    %608 = vst [vmem:[#allocation2 + $0x168] sm:$0xff] %v448
    %609 = vst [vmem:[#allocation2 + $0x170] sm:$0xff] %v559
    %610 = vst [vmem:[#allocation2 + $0x178] sm:$0xff] %v561
    %v611 = vld [vmem:[#allocation8] sm:$0xff]
    %v612 = vld [vmem:[#allocation8 + $0x8] sm:$0xff]
    %v613 = vld [vmem:[#allocation8 + $0x10] sm:$0xff]
    %v614 = vld [vmem:[#allocation8 + $0x18] sm:$0xff]
    %v615 = vld [vmem:[#allocation8 + $0x20] sm:$0xff]
    %v616 = vld [vmem:[#allocation8 + $0x28] sm:$0xff]
    %v617 = vld [vmem:[#allocation8 + $0x30] sm:$0xff]
    %v618 = vld [vmem:[#allocation8 + $0x38] sm:$0xff]
    %v619 = vld [vmem:[#allocation8 + $0x40] sm:$0xff]
    %v620 = vld [vmem:[#allocation8 + $0x48] sm:$0xff]
    %v621 = vld [vmem:[#allocation8 + $0x50] sm:$0xff]
    %v622 = vld [vmem:[#allocation8 + $0x58] sm:$0xff]
    %v623 = vld [vmem:[#allocation8 + $0x60] sm:$0xff]
    %v624 = vld [vmem:[#allocation8 + $0x68] sm:$0xff]
    %v625 = vld [vmem:[#allocation8 + $0x70] sm:$0xff]
    %v626 = vld [vmem:[#allocation8 + $0x78] sm:$0xff]
    %v627 = vld [vmem:[#allocation8 + $0x80] sm:$0xff]
    %v628 = vld [vmem:[#allocation8 + $0x88] sm:$0xff]
    %v629 = vld [vmem:[#allocation8 + $0x90] sm:$0xff]
    %v630 = vld [vmem:[#allocation8 + $0x98] sm:$0xff]
    %v631 = vld [vmem:[#allocation8 + $0xa0] sm:$0xff]
    %v632 = vld [vmem:[#allocation8 + $0xa8] sm:$0xff]
    %v633 = vld [vmem:[#allocation8 + $0xb0] sm:$0xff]
    %v634 = vld [vmem:[#allocation8 + $0xb8] sm:$0xff]
    %v635 = vld [vmem:[#allocation8 + $0xc0] sm:$0xff]
    %v636 = vld [vmem:[#allocation8 + $0xc8] sm:$0xff]
    %v637 = vld [vmem:[#allocation8 + $0xd0] sm:$0xff]
    %v638 = vld [vmem:[#allocation8 + $0xd8] sm:$0xff]
    %v639 = vld [vmem:[#allocation8 + $0xe0] sm:$0xff]
    %v640 = vld [vmem:[#allocation8 + $0xe8] sm:$0xff]
    %v641 = vld [vmem:[#allocation8 + $0xf0] sm:$0xff]
    %v642 = vld [vmem:[#allocation8 + $0xf8] sm:$0xff]
    %v643 = vld [vmem:[#allocation8 + $0x100] sm:$0xff]
    %v644 = vld [vmem:[#allocation8 + $0x108] sm:$0xff]
    %v645 = vld [vmem:[#allocation8 + $0x110] sm:$0xff]
    %v646 = vld [vmem:[#allocation8 + $0x118] sm:$0xff]
    %v647 = vld [vmem:[#allocation8 + $0x120] sm:$0xff]
    %v648 = vld [vmem:[#allocation8 + $0x128] sm:$0xff]
    %v649 = vld [vmem:[#allocation8 + $0x130] sm:$0xff]
    %v650 = vld [vmem:[#allocation8 + $0x138] sm:$0xff]
    %v651 = vld [vmem:[#allocation8 + $0x140] sm:$0xff]
    %v652 = vld [vmem:[#allocation8 + $0x148] sm:$0xff]
    %v653 = vld [vmem:[#allocation8 + $0x150] sm:$0xff]
    %v654 = vld [vmem:[#allocation8 + $0x158] sm:$0xff]
    %v655 = vld [vmem:[#allocation8 + $0x160] sm:$0xff]
    %v656 = vld [vmem:[#allocation8 + $0x168] sm:$0xff]
    %v657 = vld [vmem:[#allocation8 + $0x170] sm:$0xff]
    %v658 = vld [vmem:[#allocation8 + $0x178] sm:$0xff]
    %v659 = vld [vmem:[#allocation9] sm:$0xff]
    %v660 = vld [vmem:[#allocation9 + $0x8] sm:$0xff]
    %v661 = vld [vmem:[#allocation9 + $0x10] sm:$0xff]
    %v662 = vld [vmem:[#allocation9 + $0x18] sm:$0xff]
    %v663 = vld [vmem:[#allocation9 + $0x20] sm:$0xff]
    %v664 = vld [vmem:[#allocation9 + $0x28] sm:$0xff]
    %v665 = vld [vmem:[#allocation9 + $0x30] sm:$0xff]
    %v666 = vld [vmem:[#allocation9 + $0x38] sm:$0xff]
    %v667 = vld [vmem:[#allocation9 + $0x40] sm:$0xff]
    %v668 = vld [vmem:[#allocation9 + $0x48] sm:$0xff]
    %v669 = vld [vmem:[#allocation9 + $0x50] sm:$0xff]
    %v670 = vld [vmem:[#allocation9 + $0x58] sm:$0xff]
    %v671 = vld [vmem:[#allocation9 + $0x60] sm:$0xff]
    %v672 = vld [vmem:[#allocation9 + $0x68] sm:$0xff]
    %v673 = vld [vmem:[#allocation9 + $0x70] sm:$0xff]
    %v674 = vld [vmem:[#allocation9 + $0x78] sm:$0xff]
    %v675 = vld [vmem:[#allocation9 + $0x80] sm:$0xff]
    %v676 = vld [vmem:[#allocation9 + $0x88] sm:$0xff]
    %v677 = vld [vmem:[#allocation9 + $0x90] sm:$0xff]
    %v678 = vld [vmem:[#allocation9 + $0x98] sm:$0xff]
    %v679 = vld [vmem:[#allocation9 + $0xa0] sm:$0xff]
    %v680 = vld [vmem:[#allocation9 + $0xa8] sm:$0xff]
    %v681 = vld [vmem:[#allocation9 + $0xb0] sm:$0xff]
    %v682 = vld [vmem:[#allocation9 + $0xb8] sm:$0xff]
    %v683 = vld [vmem:[#allocation9 + $0xc0] sm:$0xff]
    %v684 = vld [vmem:[#allocation9 + $0xc8] sm:$0xff]
    %v685 = vld [vmem:[#allocation9 + $0xd0] sm:$0xff]
    %v686 = vld [vmem:[#allocation9 + $0xd8] sm:$0xff]
    %v687 = vld [vmem:[#allocation9 + $0xe0] sm:$0xff]
    %v688 = vld [vmem:[#allocation9 + $0xe8] sm:$0xff]
    %v689 = vld [vmem:[#allocation9 + $0xf0] sm:$0xff]
    %v690 = vld [vmem:[#allocation9 + $0xf8] sm:$0xff]
    %v691 = vld [vmem:[#allocation9 + $0x100] sm:$0xff]
    %v692 = vld [vmem:[#allocation9 + $0x108] sm:$0xff]
    %v693 = vld [vmem:[#allocation9 + $0x110] sm:$0xff]
    %v694 = vld [vmem:[#allocation9 + $0x118] sm:$0xff]
    %v695 = vld [vmem:[#allocation9 + $0x120] sm:$0xff]
    %v696 = vld [vmem:[#allocation9 + $0x128] sm:$0xff]
    %v697 = vld [vmem:[#allocation9 + $0x130] sm:$0xff]
    %v698 = vld [vmem:[#allocation9 + $0x138] sm:$0xff]
    %v699 = vld [vmem:[#allocation9 + $0x140] sm:$0xff]
    %v700 = vld [vmem:[#allocation9 + $0x148] sm:$0xff]
    %v701 = vld [vmem:[#allocation9 + $0x150] sm:$0xff]
    %v702 = vld [vmem:[#allocation9 + $0x158] sm:$0xff]
    %v703 = vld [vmem:[#allocation9 + $0x160] sm:$0xff]
    %v704 = vld [vmem:[#allocation9 + $0x168] sm:$0xff]
    %v705 = vld [vmem:[#allocation9 + $0x170] sm:$0xff]
    %v706 = vld [vmem:[#allocation9 + $0x178] sm:$0xff]
    %v707 = vld [vmem:[%s5] sm:$0x7]
    %v708 = vld [vmem:[%s7] sm:$0x7]
    %v709 = vld [vmem:[%s1] sm:$0xff]
    %v710 = vld [vmem:[#allocation2] sm:$0xff]
    %v711 = vld [vmem:[#allocation2 + $0x8] sm:$0xff]
    %v712 = vld [vmem:[#allocation2 + $0x10] sm:$0xff]
    %v714 = vlaneseq
    %v715 = vshrl.u32 %v714, 7
    %v716 = vsub.s32 0, %v715
    %v717 = vrot.slane %v707, %v716
    %v718 = vlaneseq
    %v719 = vshrl.u32 %v718, 7
    %v720 = vsub.s32 1, %v719
    %v721 = vrot.slane %v707, %v720
    %v722 = vlaneseq
    %v723 = vshrl.u32 %v722, 7
    %v724 = vsub.s32 2, %v723
    %v725 = vrot.slane %v707, %v724
    %729 = vmatprep.subr.mxu0 %v657
    %730 = vmatpush1.msra.mxu0 %v656
    %731 = vmatprep.subr.mxu0 %v654
    %732 = vmatpush1.msra.mxu0 %v653
    %733 = vmatprep.subr.mxu0 %v651
    %734 = vmatpush1.msra.mxu0 %v650
    %735 = vmatprep.subr.mxu0 %v648
    %736 = vmatpush1.msra.mxu0 %v647
    %737 = vmatprep.subr.mxu0 %v645
    %738 = vmatpush1.msra.mxu0 %v644
    %739 = vmatprep.subr.mxu0 %v642
    %740 = vmatpush1.msra.mxu0 %v641
    %741 = vmatprep.subr.mxu0 %v639
    %742 = vmatpush1.msra.mxu0 %v638
    %743 = vmatprep.subr.mxu0 %v636
    %744 = vmatpush1.msra.mxu0 %v635
    %745 = vmatprep.subr.mxu0 %v633
    %746 = vmatpush1.msra.mxu0 %v632
    %747 = vmatprep.subr.mxu0 %v630
    %748 = vmatpush1.msra.mxu0 %v629
    %749 = vmatprep.subr.mxu0 %v627
    %750 = vmatpush1.msra.mxu0 %v626
    %751 = vmatprep.subr.mxu0 %v624
    %752 = vmatpush1.msra.mxu0 %v623
    %753 = vmatprep.subr.mxu0 %v621
    %754 = vmatpush1.msra.mxu0 %v620
    %755 = vmatprep.subr.mxu0 %v618
    %756 = vmatpush1.msra.mxu0 %v617
    %757 = vmatprep.subr.mxu0 %v615
    %758 = vmatpush1.msra.mxu0 %v614
    %759 = vmatprep.subr.mxu0 %v612
    %760 = vmatpush1.msra.mxu0 %v611
    %761 = vmatprep.subr.mxu0 0.0
    %762 = vmatpush2.msra.mxu0 0.0
    %763 = vmatprep.subr.mxu0 0.0
    %764 = vmatpush2.msra.mxu0 0.0
    %765 = vmatprep.subr.mxu0 0.0
    %766 = vmatpush2.msra.mxu0 0.0
    %767 = vmatprep.subr.mxu0 0.0
    %768 = vmatpush2.msra.mxu0 0.0
    %769 = vmatprep.subr.mxu0 0.0
    %770 = vmatpush2.msra.mxu0 0.0
    %771 = vmatprep.subr.mxu0 0.0
    %772 = vmatpush2.msra.mxu0 0.0
    %773 = vmatprep.subr.mxu0 0.0
    %774 = vmatpush2.msra.mxu0 0.0
    %775 = vmatprep.subr.mxu0 0.0
    %776 = vmatpush2.msra.mxu0 0.0
    %777 = vmatprep.subr.mxu0 0.0
    %778 = vmatpush2.msra.mxu0 0.0
    %779 = vmatprep.subr.mxu0 0.0
    %780 = vmatpush2.msra.mxu0 0.0
    %781 = vmatprep.subr.mxu0 0.0
    %782 = vmatpush2.msra.mxu0 0.0
    %783 = vmatprep.subr.mxu0 0.0
    %784 = vmatpush2.msra.mxu0 0.0
    %785 = vmatprep.subr.mxu0 0.0
    %786 = vmatpush2.msra.mxu0 0.0
    %787 = vmatprep.subr.mxu0 0.0
    %788 = vmatpush2.msra.mxu0 0.0
    %789 = vmatprep.subr.mxu0 0.0
    %790 = vmatpush2.msra.mxu0 0.0
    %791 = vmatprep.subr.mxu0 0.0
    %792 = vmatpush2.msra.mxu0 0.0
    %793 = vmatprep.mubr.f32.mxu0 0.0
    %794 = vmatmul.mubr.f32.gmra.mxu0 0.0
    %v795 = vpop.f32.mrf.mxu0
    %v796 = vadd.f32 %v717, %v795
    %v797 = vpop.f32.mrf.mxu0
    %v798 = vadd.f32 %v721, %v797
    %799 = vdwg.mxu0
    %800 = vmatprep.subr.mxu0 0.0
    %801 = vmatpush1.msra.mxu0 %v658
    %802 = vmatprep.subr.mxu0 0.0
    %803 = vmatpush1.msra.mxu0 %v655
    %804 = vmatprep.subr.mxu0 0.0
    %805 = vmatpush1.msra.mxu0 %v652
    %806 = vmatprep.subr.mxu0 0.0
    %807 = vmatpush1.msra.mxu0 %v649
    %808 = vmatprep.subr.mxu0 0.0
    %809 = vmatpush1.msra.mxu0 %v646
    %810 = vmatprep.subr.mxu0 0.0
    %811 = vmatpush1.msra.mxu0 %v643
    %812 = vmatprep.subr.mxu0 0.0
    %813 = vmatpush1.msra.mxu0 %v640
    %814 = vmatprep.subr.mxu0 0.0
    %815 = vmatpush1.msra.mxu0 %v637
    %816 = vmatprep.subr.mxu0 0.0
    %817 = vmatpush1.msra.mxu0 %v634
    %818 = vmatprep.subr.mxu0 0.0
    %819 = vmatpush1.msra.mxu0 %v631
    %820 = vmatprep.subr.mxu0 0.0
    %821 = vmatpush1.msra.mxu0 %v628
    %822 = vmatprep.subr.mxu0 0.0
    %823 = vmatpush1.msra.mxu0 %v625
    %824 = vmatprep.subr.mxu0 0.0
    %825 = vmatpush1.msra.mxu0 %v622
    %826 = vmatprep.subr.mxu0 0.0
    %827 = vmatpush1.msra.mxu0 %v619
    %828 = vmatprep.subr.mxu0 0.0
    %829 = vmatpush1.msra.mxu0 %v616
    %830 = vmatprep.subr.mxu0 0.0
    %831 = vmatpush1.msra.mxu0 %v613
    %832 = vmatprep.subr.mxu0 0.0
    %833 = vmatpush2.msra.mxu0 0.0
    %834 = vmatprep.subr.mxu0 0.0
    %835 = vmatpush2.msra.mxu0 0.0
    %836 = vmatprep.subr.mxu0 0.0
    %837 = vmatpush2.msra.mxu0 0.0
    %838 = vmatprep.subr.mxu0 0.0
    %839 = vmatpush2.msra.mxu0 0.0
    %840 = vmatprep.subr.mxu0 0.0
    %841 = vmatpush2.msra.mxu0 0.0
    %842 = vmatprep.subr.mxu0 0.0
    %843 = vmatpush2.msra.mxu0 0.0
    %844 = vmatprep.subr.mxu0 0.0
    %845 = vmatpush2.msra.mxu0 0.0
    %846 = vmatprep.subr.mxu0 0.0
    %847 = vmatpush2.msra.mxu0 0.0
    %848 = vmatprep.subr.mxu0 0.0
    %849 = vmatpush2.msra.mxu0 0.0
    %850 = vmatprep.subr.mxu0 0.0
    %851 = vmatpush2.msra.mxu0 0.0
    %852 = vmatprep.subr.mxu0 0.0
    %853 = vmatpush2.msra.mxu0 0.0
    %854 = vmatprep.subr.mxu0 0.0
    %855 = vmatpush2.msra.mxu0 0.0
    %856 = vmatprep.subr.mxu0 0.0
    %857 = vmatpush2.msra.mxu0 0.0
    %858 = vmatprep.subr.mxu0 0.0
    %859 = vmatpush2.msra.mxu0 0.0
    %860 = vmatprep.subr.mxu0 0.0
    %861 = vmatpush2.msra.mxu0 0.0
    %862 = vmatprep.subr.mxu0 0.0
    %863 = vmatpush2.msra.mxu0 0.0
    %864 = vmatprep.mubr.f32.mxu0 0.0
    %865 = vmatmul.mubr.f32.gmra.mxu0 0.0
    %v866 = vpop.f32.mrf.mxu0
    %v867 = vadd.f32 %v725, %v866
    %v868 = vpop.f32.mrf.mxu0
    %869 = vdwg.mxu0
    %v870 = vadd.f32 %v710, %v796
    %v871 = vxor.u32 %v870, 2147483648
    %v872 = vmul.f32 %v871, 1.442695
    %v873 = vpow.pop %v872
    %v874 = vadd.f32 %v873, 1.0
    %v875 = vrcp.pop %v874
    %v876 = vmul.f32 1.0, %v875
    %v877 = vadd.f32 %v711, %v798
    %v878 = vxor.u32 %v877, 2147483648
    %v879 = vmul.f32 %v878, 1.442695
    %v880 = vpow.pop %v879
    %v881 = vadd.f32 %v880, 1.0
    %v882 = vrcp.pop %v881
    %v883 = vmul.f32 1.0, %v882
    %v884 = vmul.f32 %v876, %v867
    %v885 = vadd.f32 %v712, %v884
    %v886 = vtanh.pop %v885
    %v887 = vsub.f32 0.0, %v886
    %v888 = vmul.f32 %v883, %v887
    %v889 = vadd.f32 %v886, %v888
    %vm890 = vcmp.gt.s32.totalorder %v709, 0
    %v891 = vsel %vm890, 1, 0
    %892 = vset.pattern.permute.xlu0 0
    %893 = vperm.xlu0 %892, %v891
    %v894 = vpop.permute.xlu0 %893
    %vm895 = vcmp.eq.s32.totalorder %v894, 1
    %v896 = vsel %vm895, %v889, 0.0
    %v897 = vld [vmem:[#allocation2 + $0x168] sm:$0xff]
    %v898 = vld [vmem:[#allocation2 + $0x170] sm:$0xff]
    %v899 = vld [vmem:[#allocation2 + $0x178] sm:$0xff]
    %v901 = vlaneseq
    %v902 = vshrl.u32 %v901, 7
    %v903 = vsub.s32 0, %v902
    %v904 = vrot.slane %v708, %v903
    %v905 = vlaneseq
    %v906 = vshrl.u32 %v905, 7
    %v907 = vsub.s32 1, %v906
    %v908 = vrot.slane %v708, %v907
    %v909 = vlaneseq
    %v910 = vshrl.u32 %v909, 7
    %v911 = vsub.s32 2, %v910
    %v912 = vrot.slane %v708, %v911
    %916 = vmatprep.subr.mxu0 %v705
    %917 = vmatpush1.msra.mxu0 %v704
    %918 = vmatprep.subr.mxu0 %v702
    %919 = vmatpush1.msra.mxu0 %v701
    %920 = vmatprep.subr.mxu0 %v699
    %921 = vmatpush1.msra.mxu0 %v698
    %922 = vmatprep.subr.mxu0 %v696
    %923 = vmatpush1.msra.mxu0 %v695
    %924 = vmatprep.subr.mxu0 %v693
    %925 = vmatpush1.msra.mxu0 %v692
    %926 = vmatprep.subr.mxu0 %v690
    %927 = vmatpush1.msra.mxu0 %v689
    %928 = vmatprep.subr.mxu0 %v687
    %929 = vmatpush1.msra.mxu0 %v686
    %930 = vmatprep.subr.mxu0 %v684
    %931 = vmatpush1.msra.mxu0 %v683
    %932 = vmatprep.subr.mxu0 %v681
    %933 = vmatpush1.msra.mxu0 %v680
    %934 = vmatprep.subr.mxu0 %v678
    %935 = vmatpush1.msra.mxu0 %v677
    %936 = vmatprep.subr.mxu0 %v675
    %937 = vmatpush1.msra.mxu0 %v674
    %938 = vmatprep.subr.mxu0 %v672
    %939 = vmatpush1.msra.mxu0 %v671
    %940 = vmatprep.subr.mxu0 %v669
    %941 = vmatpush1.msra.mxu0 %v668
    %942 = vmatprep.subr.mxu0 %v666
    %943 = vmatpush1.msra.mxu0 %v665
    %944 = vmatprep.subr.mxu0 %v663
    %945 = vmatpush1.msra.mxu0 %v662
    %946 = vmatprep.subr.mxu0 %v660
    %947 = vmatpush1.msra.mxu0 %v659
    %948 = vmatprep.subr.mxu0 0.0
    %949 = vmatpush2.msra.mxu0 0.0
    %950 = vmatprep.subr.mxu0 0.0
    %951 = vmatpush2.msra.mxu0 0.0
    %952 = vmatprep.subr.mxu0 0.0
    %953 = vmatpush2.msra.mxu0 0.0
    %954 = vmatprep.subr.mxu0 0.0
    %955 = vmatpush2.msra.mxu0 0.0
    %956 = vmatprep.subr.mxu0 0.0
    %957 = vmatpush2.msra.mxu0 0.0
    %958 = vmatprep.subr.mxu0 0.0
    %959 = vmatpush2.msra.mxu0 0.0
    %960 = vmatprep.subr.mxu0 0.0
    %961 = vmatpush2.msra.mxu0 0.0
    %962 = vmatprep.subr.mxu0 0.0
    %963 = vmatpush2.msra.mxu0 0.0
    %964 = vmatprep.subr.mxu0 0.0
    %965 = vmatpush2.msra.mxu0 0.0
    %966 = vmatprep.subr.mxu0 0.0
    %967 = vmatpush2.msra.mxu0 0.0
    %968 = vmatprep.subr.mxu0 0.0
    %969 = vmatpush2.msra.mxu0 0.0
    %970 = vmatprep.subr.mxu0 0.0
    %971 = vmatpush2.msra.mxu0 0.0
    %972 = vmatprep.subr.mxu0 0.0
    %973 = vmatpush2.msra.mxu0 0.0
    %974 = vmatprep.subr.mxu0 0.0
    %975 = vmatpush2.msra.mxu0 0.0
    %976 = vmatprep.subr.mxu0 0.0
    %977 = vmatpush2.msra.mxu0 0.0
    %978 = vmatprep.subr.mxu0 0.0
    %979 = vmatpush2.msra.mxu0 0.0
    %980 = vmatprep.mubr.f32.mxu0 0.0
    %981 = vmatmul.mubr.f32.gmra.mxu0 0.0
    %v982 = vpop.f32.mrf.mxu0
    %v983 = vadd.f32 %v904, %v982
    %v984 = vpop.f32.mrf.mxu0
    %v985 = vadd.f32 %v908, %v984
    %986 = vdwg.mxu0
    %987 = vmatprep.subr.mxu0 0.0
    %988 = vmatpush1.msra.mxu0 %v706
    %989 = vmatprep.subr.mxu0 0.0
    %990 = vmatpush1.msra.mxu0 %v703
    %991 = vmatprep.subr.mxu0 0.0
    %992 = vmatpush1.msra.mxu0 %v700
    %993 = vmatprep.subr.mxu0 0.0
    %994 = vmatpush1.msra.mxu0 %v697
    %995 = vmatprep.subr.mxu0 0.0
    %996 = vmatpush1.msra.mxu0 %v694
    %997 = vmatprep.subr.mxu0 0.0
    %998 = vmatpush1.msra.mxu0 %v691
    %999 = vmatprep.subr.mxu0 0.0
    %1000 = vmatpush1.msra.mxu0 %v688
    %1001 = vmatprep.subr.mxu0 0.0
    %1002 = vmatpush1.msra.mxu0 %v685
    %1003 = vmatprep.subr.mxu0 0.0
    %1004 = vmatpush1.msra.mxu0 %v682
    %1005 = vmatprep.subr.mxu0 0.0
    %1006 = vmatpush1.msra.mxu0 %v679
    %1007 = vmatprep.subr.mxu0 0.0
    %1008 = vmatpush1.msra.mxu0 %v676
    %1009 = vmatprep.subr.mxu0 0.0
    %1010 = vmatpush1.msra.mxu0 %v673
    %1011 = vmatprep.subr.mxu0 0.0
    %1012 = vmatpush1.msra.mxu0 %v670
    %1013 = vmatprep.subr.mxu0 0.0
    %1014 = vmatpush1.msra.mxu0 %v667
    %1015 = vmatprep.subr.mxu0 0.0
    %1016 = vmatpush1.msra.mxu0 %v664
    %1017 = vmatprep.subr.mxu0 0.0
    %1018 = vmatpush1.msra.mxu0 %v661
    %1019 = vmatprep.subr.mxu0 0.0
    %1020 = vmatpush2.msra.mxu0 0.0
    %1021 = vmatprep.subr.mxu0 0.0
    %1022 = vmatpush2.msra.mxu0 0.0
    %1023 = vmatprep.subr.mxu0 0.0
    %1024 = vmatpush2.msra.mxu0 0.0
    %1025 = vmatprep.subr.mxu0 0.0
    %1026 = vmatpush2.msra.mxu0 0.0
    %1027 = vmatprep.subr.mxu0 0.0
    %1028 = vmatpush2.msra.mxu0 0.0
    %1029 = vmatprep.subr.mxu0 0.0
    %1030 = vmatpush2.msra.mxu0 0.0
    %1031 = vmatprep.subr.mxu0 0.0
    %1032 = vmatpush2.msra.mxu0 0.0
    %1033 = vmatprep.subr.mxu0 0.0
    %1034 = vmatpush2.msra.mxu0 0.0
    %1035 = vmatprep.subr.mxu0 0.0
    %1036 = vmatpush2.msra.mxu0 0.0
    %1037 = vmatprep.subr.mxu0 0.0
    %1038 = vmatpush2.msra.mxu0 0.0
    %1039 = vmatprep.subr.mxu0 0.0
    %1040 = vmatpush2.msra.mxu0 0.0
    %1041 = vmatprep.subr.mxu0 0.0
    %1042 = vmatpush2.msra.mxu0 0.0
    %1043 = vmatprep.subr.mxu0 0.0
    %1044 = vmatpush2.msra.mxu0 0.0
    %1045 = vmatprep.subr.mxu0 0.0
    %1046 = vmatpush2.msra.mxu0 0.0
    %1047 = vmatprep.subr.mxu0 0.0
    %1048 = vmatpush2.msra.mxu0 0.0
    %1049 = vmatprep.subr.mxu0 0.0
    %1050 = vmatpush2.msra.mxu0 0.0
    %1051 = vmatprep.mubr.f32.mxu0 0.0
    %1052 = vmatmul.mubr.f32.gmra.mxu0 0.0
    %v1053 = vpop.f32.mrf.mxu0
    %v1054 = vadd.f32 %v912, %v1053
    %v1055 = vpop.f32.mrf.mxu0
    %1056 = vdwg.mxu0
    %v1057 = vadd.f32 %v897, %v983
    %v1058 = vxor.u32 %v1057, 2147483648
    %v1059 = vmul.f32 %v1058, 1.442695
    %v1060 = vpow.pop %v1059
    %v1061 = vadd.f32 %v1060, 1.0
    %v1062 = vrcp.pop %v1061
    %v1063 = vmul.f32 1.0, %v1062
    %v1064 = vadd.f32 %v898, %v985
    %v1065 = vxor.u32 %v1064, 2147483648
    %v1066 = vmul.f32 %v1065, 1.442695
    %v1067 = vpow.pop %v1066
    %v1068 = vadd.f32 %v1067, 1.0
    %v1069 = vrcp.pop %v1068
    %v1070 = vmul.f32 1.0, %v1069
    %v1071 = vmul.f32 %v1063, %v1054
    %v1072 = vadd.f32 %v899, %v1071
    %v1073 = vtanh.pop %v1072
    %v1074 = vsub.f32 0.0, %v1073
    %v1075 = vmul.f32 %v1070, %v1074
    %v1076 = vadd.f32 %v1073, %v1075
    %vm1077 = vcmp.gt.s32.totalorder %v709, 7
    %v1078 = vsel %vm1077, 1, 0
    %1079 = vset.pattern.permute.xlu0 0
    %1080 = vperm.xlu0 %1079, %v1078
    %v1081 = vpop.permute.xlu0 %1080
    %vm1082 = vcmp.eq.s32.totalorder %v1081, 1
    %v1083 = vsel %vm1082, %v1076, 0.0
    %1084 = vst [vmem:[#allocation11] sm:$0xff] %v896
    %s1085 = scalar_lea.vmem [#allocation11], 56
    %1086 = vst [vmem:[%s1085] sm:$0xff] %v1083
    %v1087 = vld [vmem:[#allocation2 + $0x30] sm:$0xff]
    %v1088 = vld [vmem:[#allocation2 + $0x38] sm:$0xff]
    %v1089 = vld [vmem:[#allocation2 + $0x40] sm:$0xff]
    %1090 = vmatprep.subr.mxu0 %v657
    %1091 = vmatpush1.msra.mxu0 %v656
    %1092 = vmatprep.subr.mxu0 %v654
    %1093 = vmatpush1.msra.mxu0 %v653
    %1094 = vmatprep.subr.mxu0 %v651
    %1095 = vmatpush1.msra.mxu0 %v650
    %1096 = vmatprep.subr.mxu0 %v648
    %1097 = vmatpush1.msra.mxu0 %v647
    %1098 = vmatprep.subr.mxu0 %v645
    %1099 = vmatpush1.msra.mxu0 %v644
    %1100 = vmatprep.subr.mxu0 %v642
    %1101 = vmatpush1.msra.mxu0 %v641
    %1102 = vmatprep.subr.mxu0 %v639
    %1103 = vmatpush1.msra.mxu0 %v638
    %1104 = vmatprep.subr.mxu0 %v636
    %1105 = vmatpush1.msra.mxu0 %v635
    %1106 = vmatprep.subr.mxu0 %v633
    %1107 = vmatpush1.msra.mxu0 %v632
    %1108 = vmatprep.subr.mxu0 %v630
    %1109 = vmatpush1.msra.mxu0 %v629
    %1110 = vmatprep.subr.mxu0 %v627
    %1111 = vmatpush1.msra.mxu0 %v626
    %1112 = vmatprep.subr.mxu0 %v624
    %1113 = vmatpush1.msra.mxu0 %v623
    %1114 = vmatprep.subr.mxu0 %v621
    %1115 = vmatpush1.msra.mxu0 %v620
    %1116 = vmatprep.subr.mxu0 %v618
    %1117 = vmatpush1.msra.mxu0 %v617
    %1118 = vmatprep.subr.mxu0 %v615
    %1119 = vmatpush1.msra.mxu0 %v614
    %1120 = vmatprep.subr.mxu0 %v612
    %1121 = vmatpush1.msra.mxu0 %v611
    %1122 = vmatprep.subr.mxu0 0.0
    %1123 = vmatpush2.msra.mxu0 0.0
    %1124 = vmatprep.subr.mxu0 0.0
    %1125 = vmatpush2.msra.mxu0 0.0
    %1126 = vmatprep.subr.mxu0 0.0
    %1127 = vmatpush2.msra.mxu0 0.0
    %1128 = vmatprep.subr.mxu0 0.0
    %1129 = vmatpush2.msra.mxu0 0.0
    %1130 = vmatprep.subr.mxu0 0.0
    %1131 = vmatpush2.msra.mxu0 0.0
    %1132 = vmatprep.subr.mxu0 0.0
    %1133 = vmatpush2.msra.mxu0 0.0
    %1134 = vmatprep.subr.mxu0 0.0
    %1135 = vmatpush2.msra.mxu0 0.0
    %1136 = vmatprep.subr.mxu0 0.0
    %1137 = vmatpush2.msra.mxu0 0.0
    %1138 = vmatprep.subr.mxu0 0.0
    %1139 = vmatpush2.msra.mxu0 0.0
    %1140 = vmatprep.subr.mxu0 0.0
    %1141 = vmatpush2.msra.mxu0 0.0
    %1142 = vmatprep.subr.mxu0 0.0
    %1143 = vmatpush2.msra.mxu0 0.0
    %1144 = vmatprep.subr.mxu0 0.0
    %1145 = vmatpush2.msra.mxu0 0.0
    %1146 = vmatprep.subr.mxu0 0.0
    %1147 = vmatpush2.msra.mxu0 0.0
    %1148 = vmatprep.subr.mxu0 0.0
    %1149 = vmatpush2.msra.mxu0 0.0
    %1150 = vmatprep.subr.mxu0 0.0
    %1151 = vmatpush2.msra.mxu0 0.0
    %1152 = vmatprep.subr.mxu0 0.0
    %1153 = vmatpush2.msra.mxu0 0.0
    %1154 = vmatprep.mubr.f32.mxu0 0.0
    %1155 = vmatmul.mubr.f32.gmra.mxu0 %v896
    %v1156 = vpop.f32.mrf.mxu0
    %v1157 = vadd.f32 %v717, %v1156
    %v1158 = vpop.f32.mrf.mxu0
    %v1159 = vadd.f32 %v721, %v1158
    %1160 = vdwg.mxu0
    %1161 = vmatprep.subr.mxu0 0.0
    %1162 = vmatpush1.msra.mxu0 %v658
    %1163 = vmatprep.subr.mxu0 0.0
    %1164 = vmatpush1.msra.mxu0 %v655
    %1165 = vmatprep.subr.mxu0 0.0
    %1166 = vmatpush1.msra.mxu0 %v652
    %1167 = vmatprep.subr.mxu0 0.0
    %1168 = vmatpush1.msra.mxu0 %v649
    %1169 = vmatprep.subr.mxu0 0.0
    %1170 = vmatpush1.msra.mxu0 %v646
    %1171 = vmatprep.subr.mxu0 0.0
    %1172 = vmatpush1.msra.mxu0 %v643
    %1173 = vmatprep.subr.mxu0 0.0
    %1174 = vmatpush1.msra.mxu0 %v640
    %1175 = vmatprep.subr.mxu0 0.0
    %1176 = vmatpush1.msra.mxu0 %v637
    %1177 = vmatprep.subr.mxu0 0.0
    %1178 = vmatpush1.msra.mxu0 %v634
    %1179 = vmatprep.subr.mxu0 0.0
    %1180 = vmatpush1.msra.mxu0 %v631
    %1181 = vmatprep.subr.mxu0 0.0
    %1182 = vmatpush1.msra.mxu0 %v628
    %1183 = vmatprep.subr.mxu0 0.0
    %1184 = vmatpush1.msra.mxu0 %v625
    %1185 = vmatprep.subr.mxu0 0.0
    %1186 = vmatpush1.msra.mxu0 %v622
    %1187 = vmatprep.subr.mxu0 0.0
    %1188 = vmatpush1.msra.mxu0 %v619
    %1189 = vmatprep.subr.mxu0 0.0
    %1190 = vmatpush1.msra.mxu0 %v616
    %1191 = vmatprep.subr.mxu0 0.0
    %1192 = vmatpush1.msra.mxu0 %v613
    %1193 = vmatprep.subr.mxu0 0.0
    %1194 = vmatpush2.msra.mxu0 0.0
    %1195 = vmatprep.subr.mxu0 0.0
    %1196 = vmatpush2.msra.mxu0 0.0
    %1197 = vmatprep.subr.mxu0 0.0
    %1198 = vmatpush2.msra.mxu0 0.0
    %1199 = vmatprep.subr.mxu0 0.0
    %1200 = vmatpush2.msra.mxu0 0.0
    %1201 = vmatprep.subr.mxu0 0.0
    %1202 = vmatpush2.msra.mxu0 0.0
    %1203 = vmatprep.subr.mxu0 0.0
    %1204 = vmatpush2.msra.mxu0 0.0
    %1205 = vmatprep.subr.mxu0 0.0
    %1206 = vmatpush2.msra.mxu0 0.0
    %1207 = vmatprep.subr.mxu0 0.0
    %1208 = vmatpush2.msra.mxu0 0.0
    %1209 = vmatprep.subr.mxu0 0.0
    %1210 = vmatpush2.msra.mxu0 0.0
    %1211 = vmatprep.subr.mxu0 0.0
    %1212 = vmatpush2.msra.mxu0 0.0
    %1213 = vmatprep.subr.mxu0 0.0
    %1214 = vmatpush2.msra.mxu0 0.0
    %1215 = vmatprep.subr.mxu0 0.0
    %1216 = vmatpush2.msra.mxu0 0.0
    %1217 = vmatprep.subr.mxu0 0.0
    %1218 = vmatpush2.msra.mxu0 0.0
    %1219 = vmatprep.subr.mxu0 0.0
    %1220 = vmatpush2.msra.mxu0 0.0
    %1221 = vmatprep.subr.mxu0 0.0
    %1222 = vmatpush2.msra.mxu0 0.0
    %1223 = vmatprep.subr.mxu0 0.0
    %1224 = vmatpush2.msra.mxu0 0.0
    %1225 = vmatprep.mubr.f32.mxu0 0.0
    %1226 = vmatmul.mubr.f32.gmra.mxu0 %v896
    %v1227 = vpop.f32.mrf.mxu0
    %v1228 = vadd.f32 %v725, %v1227
    %v1229 = vpop.f32.mrf.mxu0
    %1230 = vdwg.mxu0
    %v1231 = vadd.f32 %v1087, %v1157
    %v1232 = vxor.u32 %v1231, 2147483648
    %v1233 = vmul.f32 %v1232, 1.442695
    %v1234 = vpow.pop %v1233
    %v1235 = vadd.f32 %v1234, 1.0
    %v1236 = vrcp.pop %v1235
    %v1237 = vmul.f32 1.0, %v1236
    %v1238 = vadd.f32 %v1088, %v1159
    %v1239 = vxor.u32 %v1238, 2147483648
    %v1240 = vmul.f32 %v1239, 1.442695
    %v1241 = vpow.pop %v1240
    %v1242 = vadd.f32 %v1241, 1.0
    %v1243 = vrcp.pop %v1242
    %v1244 = vmul.f32 1.0, %v1243
    %v1245 = vmul.f32 %v1237, %v1228
    %v1246 = vadd.f32 %v1089, %v1245
    %v1247 = vtanh.pop %v1246
    %v1248 = vsub.f32 %v896, %v1247
    %v1249 = vmul.f32 %v1244, %v1248
    %v1250 = vadd.f32 %v1247, %v1249
    %vm1251 = vcmp.gt.s32.totalorder %v709, 1
    %v1252 = vsel %vm1251, 1, 0
    %1253 = vset.pattern.permute.xlu0 0
    %1254 = vperm.xlu0 %1253, %v1252
    %v1255 = vpop.permute.xlu0 %1254
    %vm1256 = vcmp.eq.s32.totalorder %v1255, 1
    %v1257 = vsel %vm1256, %v1250, 0.0
    %v1258 = vsel %vm1256, %v1250, %v896
    %v1259 = vld [vmem:[#allocation2 + $0x138] sm:$0xff]
    %v1260 = vld [vmem:[#allocation2 + $0x140] sm:$0xff]
    %v1261 = vld [vmem:[#allocation2 + $0x148] sm:$0xff]
    %1262 = vmatprep.subr.mxu0 %v705
    %1263 = vmatpush1.msra.mxu0 %v704
    %1264 = vmatprep.subr.mxu0 %v702
    %1265 = vmatpush1.msra.mxu0 %v701
    %1266 = vmatprep.subr.mxu0 %v699
    %1267 = vmatpush1.msra.mxu0 %v698
    %1268 = vmatprep.subr.mxu0 %v696
    %1269 = vmatpush1.msra.mxu0 %v695
    %1270 = vmatprep.subr.mxu0 %v693
    %1271 = vmatpush1.msra.mxu0 %v692
    %1272 = vmatprep.subr.mxu0 %v690
    %1273 = vmatpush1.msra.mxu0 %v689
    %1274 = vmatprep.subr.mxu0 %v687
    %1275 = vmatpush1.msra.mxu0 %v686
    %1276 = vmatprep.subr.mxu0 %v684
    %1277 = vmatpush1.msra.mxu0 %v683
    %1278 = vmatprep.subr.mxu0 %v681
    %1279 = vmatpush1.msra.mxu0 %v680
    %1280 = vmatprep.subr.mxu0 %v678
    %1281 = vmatpush1.msra.mxu0 %v677
    %1282 = vmatprep.subr.mxu0 %v675
    %1283 = vmatpush1.msra.mxu0 %v674
    %1284 = vmatprep.subr.mxu0 %v672
    %1285 = vmatpush1.msra.mxu0 %v671
    %1286 = vmatprep.subr.mxu0 %v669
    %1287 = vmatpush1.msra.mxu0 %v668
    %1288 = vmatprep.subr.mxu0 %v666
    %1289 = vmatpush1.msra.mxu0 %v665
    %1290 = vmatprep.subr.mxu0 %v663
    %1291 = vmatpush1.msra.mxu0 %v662
    %1292 = vmatprep.subr.mxu0 %v660
    %1293 = vmatpush1.msra.mxu0 %v659
    %1294 = vmatprep.subr.mxu0 0.0
    %1295 = vmatpush2.msra.mxu0 0.0
    %1296 = vmatprep.subr.mxu0 0.0
    %1297 = vmatpush2.msra.mxu0 0.0
    %1298 = vmatprep.subr.mxu0 0.0
    %1299 = vmatpush2.msra.mxu0 0.0
    %1300 = vmatprep.subr.mxu0 0.0
    %1301 = vmatpush2.msra.mxu0 0.0
    %1302 = vmatprep.subr.mxu0 0.0
    %1303 = vmatpush2.msra.mxu0 0.0
    %1304 = vmatprep.subr.mxu0 0.0
    %1305 = vmatpush2.msra.mxu0 0.0
    %1306 = vmatprep.subr.mxu0 0.0
    %1307 = vmatpush2.msra.mxu0 0.0
    %1308 = vmatprep.subr.mxu0 0.0
    %1309 = vmatpush2.msra.mxu0 0.0
    %1310 = vmatprep.subr.mxu0 0.0
    %1311 = vmatpush2.msra.mxu0 0.0
    %1312 = vmatprep.subr.mxu0 0.0
    %1313 = vmatpush2.msra.mxu0 0.0
    %1314 = vmatprep.subr.mxu0 0.0
    %1315 = vmatpush2.msra.mxu0 0.0
    %1316 = vmatprep.subr.mxu0 0.0
    %1317 = vmatpush2.msra.mxu0 0.0
    %1318 = vmatprep.subr.mxu0 0.0
    %1319 = vmatpush2.msra.mxu0 0.0
    %1320 = vmatprep.subr.mxu0 0.0
    %1321 = vmatpush2.msra.mxu0 0.0
    %1322 = vmatprep.subr.mxu0 0.0
    %1323 = vmatpush2.msra.mxu0 0.0
    %1324 = vmatprep.subr.mxu0 0.0
    %1325 = vmatpush2.msra.mxu0 0.0
    %1326 = vmatprep.mubr.f32.mxu0 0.0
    %1327 = vmatmul.mubr.f32.gmra.mxu0 %v1083
    %v1328 = vpop.f32.mrf.mxu0
    %v1329 = vadd.f32 %v904, %v1328
    %v1330 = vpop.f32.mrf.mxu0
    %v1331 = vadd.f32 %v908, %v1330
    %1332 = vdwg.mxu0
    %1333 = vmatprep.subr.mxu0 0.0
    %1334 = vmatpush1.msra.mxu0 %v706
    %1335 = vmatprep.subr.mxu0 0.0
    %1336 = vmatpush1.msra.mxu0 %v703
    %1337 = vmatprep.subr.mxu0 0.0
    %1338 = vmatpush1.msra.mxu0 %v700
    %1339 = vmatprep.subr.mxu0 0.0
    %1340 = vmatpush1.msra.mxu0 %v697
    %1341 = vmatprep.subr.mxu0 0.0
    %1342 = vmatpush1.msra.mxu0 %v694
    %1343 = vmatprep.subr.mxu0 0.0
    %1344 = vmatpush1.msra.mxu0 %v691
    %1345 = vmatprep.subr.mxu0 0.0
    %1346 = vmatpush1.msra.mxu0 %v688
    %1347 = vmatprep.subr.mxu0 0.0
    %1348 = vmatpush1.msra.mxu0 %v685
    %1349 = vmatprep.subr.mxu0 0.0
    %1350 = vmatpush1.msra.mxu0 %v682
    %1351 = vmatprep.subr.mxu0 0.0
    %1352 = vmatpush1.msra.mxu0 %v679
    %1353 = vmatprep.subr.mxu0 0.0
    %1354 = vmatpush1.msra.mxu0 %v676
    %1355 = vmatprep.subr.mxu0 0.0
    %1356 = vmatpush1.msra.mxu0 %v673
    %1357 = vmatprep.subr.mxu0 0.0
    %1358 = vmatpush1.msra.mxu0 %v670
    %1359 = vmatprep.subr.mxu0 0.0
    %1360 = vmatpush1.msra.mxu0 %v667
    %1361 = vmatprep.subr.mxu0 0.0
    %1362 = vmatpush1.msra.mxu0 %v664
    %1363 = vmatprep.subr.mxu0 0.0
    %1364 = vmatpush1.msra.mxu0 %v661
    %1365 = vmatprep.subr.mxu0 0.0
    %1366 = vmatpush2.msra.mxu0 0.0
    %1367 = vmatprep.subr.mxu0 0.0
    %1368 = vmatpush2.msra.mxu0 0.0
    %1369 = vmatprep.subr.mxu0 0.0
    %1370 = vmatpush2.msra.mxu0 0.0
    %1371 = vmatprep.subr.mxu0 0.0
    %1372 = vmatpush2.msra.mxu0 0.0
    %1373 = vmatprep.subr.mxu0 0.0
    %1374 = vmatpush2.msra.mxu0 0.0
    %1375 = vmatprep.subr.mxu0 0.0
    %1376 = vmatpush2.msra.mxu0 0.0
    %1377 = vmatprep.subr.mxu0 0.0
    %1378 = vmatpush2.msra.mxu0 0.0
    %1379 = vmatprep.subr.mxu0 0.0
    %1380 = vmatpush2.msra.mxu0 0.0
    %1381 = vmatprep.subr.mxu0 0.0
    %1382 = vmatpush2.msra.mxu0 0.0
    %1383 = vmatprep.subr.mxu0 0.0
    %1384 = vmatpush2.msra.mxu0 0.0
    %1385 = vmatprep.subr.mxu0 0.0
    %1386 = vmatpush2.msra.mxu0 0.0
    %1387 = vmatprep.subr.mxu0 0.0
    %1388 = vmatpush2.msra.mxu0 0.0
    %1389 = vmatprep.subr.mxu0 0.0
    %1390 = vmatpush2.msra.mxu0 0.0
    %1391 = vmatprep.subr.mxu0 0.0
    %1392 = vmatpush2.msra.mxu0 0.0
    %1393 = vmatprep.subr.mxu0 0.0
    %1394 = vmatpush2.msra.mxu0 0.0
    %1395 = vmatprep.subr.mxu0 0.0
    %1396 = vmatpush2.msra.mxu0 0.0
    %1397 = vmatprep.mubr.f32.mxu0 0.0
    %1398 = vmatmul.mubr.f32.gmra.mxu0 %v1083
    %v1399 = vpop.f32.mrf.mxu0
    %v1400 = vadd.f32 %v912, %v1399
    %v1401 = vpop.f32.mrf.mxu0
    %1402 = vdwg.mxu0
    %v1403 = vadd.f32 %v1259, %v1329
    %v1404 = vxor.u32 %v1403, 2147483648
    %v1405 = vmul.f32 %v1404, 1.442695
    %v1406 = vpow.pop %v1405
    %v1407 = vadd.f32 %v1406, 1.0
    %v1408 = vrcp.pop %v1407
    %v1409 = vmul.f32 1.0, %v1408
    %v1410 = vadd.f32 %v1260, %v1331
    %v1411 = vxor.u32 %v1410, 2147483648
    %v1412 = vmul.f32 %v1411, 1.442695
    %v1413 = vpow.pop %v1412
    %v1414 = vadd.f32 %v1413, 1.0
    %v1415 = vrcp.pop %v1414
    %v1416 = vmul.f32 1.0, %v1415
    %v1417 = vmul.f32 %v1409, %v1400
    %v1418 = vadd.f32 %v1261, %v1417
    %v1419 = vtanh.pop %v1418
    %v1420 = vsub.f32 %v1083, %v1419
    %v1421 = vmul.f32 %v1416, %v1420
    %v1422 = vadd.f32 %v1419, %v1421
    %vm1423 = vcmp.gt.s32.totalorder %v709, 6
    %v1424 = vsel %vm1423, 1, 0
    %1425 = vset.pattern.permute.xlu0 0
    %1426 = vperm.xlu0 %1425, %v1424
    %v1427 = vpop.permute.xlu0 %1426
    %vm1428 = vcmp.eq.s32.totalorder %v1427, 1
    %v1429 = vsel %vm1428, %v1422, 0.0
    %v1430 = vsel %vm1428, %v1422, %v1083
    %s1431 = scalar_lea.vmem [#allocation11], 8
    %1432 = vst [vmem:[%s1431] sm:$0xff] %v1257
    %s1433 = scalar_lea.vmem [#allocation11], 48
    %1434 = vst [vmem:[%s1433] sm:$0xff] %v1429
    %v1435 = vld [vmem:[#allocation2 + $0x60] sm:$0xff]
    %v1436 = vld [vmem:[#allocation2 + $0x68] sm:$0xff]
    %v1437 = vld [vmem:[#allocation2 + $0x70] sm:$0xff]
    %1438 = vmatprep.subr.mxu0 %v657
    %1439 = vmatpush1.msra.mxu0 %v656
    %1440 = vmatprep.subr.mxu0 %v654
    %1441 = vmatpush1.msra.mxu0 %v653
    %1442 = vmatprep.subr.mxu0 %v651
    %1443 = vmatpush1.msra.mxu0 %v650
    %1444 = vmatprep.subr.mxu0 %v648
    %1445 = vmatpush1.msra.mxu0 %v647
    %1446 = vmatprep.subr.mxu0 %v645
    %1447 = vmatpush1.msra.mxu0 %v644
    %1448 = vmatprep.subr.mxu0 %v642
    %1449 = vmatpush1.msra.mxu0 %v641
    %1450 = vmatprep.subr.mxu0 %v639
    %1451 = vmatpush1.msra.mxu0 %v638
    %1452 = vmatprep.subr.mxu0 %v636
    %1453 = vmatpush1.msra.mxu0 %v635
    %1454 = vmatprep.subr.mxu0 %v633
    %1455 = vmatpush1.msra.mxu0 %v632
    %1456 = vmatprep.subr.mxu0 %v630
    %1457 = vmatpush1.msra.mxu0 %v629
    %1458 = vmatprep.subr.mxu0 %v627
    %1459 = vmatpush1.msra.mxu0 %v626
    %1460 = vmatprep.subr.mxu0 %v624
    %1461 = vmatpush1.msra.mxu0 %v623
    %1462 = vmatprep.subr.mxu0 %v621
    %1463 = vmatpush1.msra.mxu0 %v620
    %1464 = vmatprep.subr.mxu0 %v618
    %1465 = vmatpush1.msra.mxu0 %v617
    %1466 = vmatprep.subr.mxu0 %v615
    %1467 = vmatpush1.msra.mxu0 %v614
    %1468 = vmatprep.subr.mxu0 %v612
    %1469 = vmatpush1.msra.mxu0 %v611
    %1470 = vmatprep.subr.mxu0 0.0
    %1471 = vmatpush2.msra.mxu0 0.0
    %1472 = vmatprep.subr.mxu0 0.0
    %1473 = vmatpush2.msra.mxu0 0.0
    %1474 = vmatprep.subr.mxu0 0.0
    %1475 = vmatpush2.msra.mxu0 0.0
    %1476 = vmatprep.subr.mxu0 0.0
    %1477 = vmatpush2.msra.mxu0 0.0
    %1478 = vmatprep.subr.mxu0 0.0
    %1479 = vmatpush2.msra.mxu0 0.0
    %1480 = vmatprep.subr.mxu0 0.0
    %1481 = vmatpush2.msra.mxu0 0.0
    %1482 = vmatprep.subr.mxu0 0.0
    %1483 = vmatpush2.msra.mxu0 0.0
    %1484 = vmatprep.subr.mxu0 0.0
    %1485 = vmatpush2.msra.mxu0 0.0
    %1486 = vmatprep.subr.mxu0 0.0
    %1487 = vmatpush2.msra.mxu0 0.0
    %1488 = vmatprep.subr.mxu0 0.0
    %1489 = vmatpush2.msra.mxu0 0.0
    %1490 = vmatprep.subr.mxu0 0.0
    %1491 = vmatpush2.msra.mxu0 0.0
    %1492 = vmatprep.subr.mxu0 0.0
    %1493 = vmatpush2.msra.mxu0 0.0
    %1494 = vmatprep.subr.mxu0 0.0
    %1495 = vmatpush2.msra.mxu0 0.0
    %1496 = vmatprep.subr.mxu0 0.0
    %1497 = vmatpush2.msra.mxu0 0.0
    %1498 = vmatprep.subr.mxu0 0.0
    %1499 = vmatpush2.msra.mxu0 0.0
    %1500 = vmatprep.subr.mxu0 0.0
    %1501 = vmatpush2.msra.mxu0 0.0
    %1502 = vmatprep.mubr.f32.mxu0 0.0
    %1503 = vmatmul.mubr.f32.gmra.mxu0 %v1258
    %v1504 = vpop.f32.mrf.mxu0
    %v1505 = vadd.f32 %v717, %v1504
    %v1506 = vpop.f32.mrf.mxu0
    %v1507 = vadd.f32 %v721, %v1506
    %1508 = vdwg.mxu0
    %1509 = vmatprep.subr.mxu0 0.0
    %1510 = vmatpush1.msra.mxu0 %v658
    %1511 = vmatprep.subr.mxu0 0.0
    %1512 = vmatpush1.msra.mxu0 %v655
    %1513 = vmatprep.subr.mxu0 0.0
    %1514 = vmatpush1.msra.mxu0 %v652
    %1515 = vmatprep.subr.mxu0 0.0
    %1516 = vmatpush1.msra.mxu0 %v649
    %1517 = vmatprep.subr.mxu0 0.0
    %1518 = vmatpush1.msra.mxu0 %v646
    %1519 = vmatprep.subr.mxu0 0.0
    %1520 = vmatpush1.msra.mxu0 %v643
    %1521 = vmatprep.subr.mxu0 0.0
    %1522 = vmatpush1.msra.mxu0 %v640
    %1523 = vmatprep.subr.mxu0 0.0
    %1524 = vmatpush1.msra.mxu0 %v637
    %1525 = vmatprep.subr.mxu0 0.0
    %1526 = vmatpush1.msra.mxu0 %v634
    %1527 = vmatprep.subr.mxu0 0.0
    %1528 = vmatpush1.msra.mxu0 %v631
    %1529 = vmatprep.subr.mxu0 0.0
    %1530 = vmatpush1.msra.mxu0 %v628
    %1531 = vmatprep.subr.mxu0 0.0
    %1532 = vmatpush1.msra.mxu0 %v625
    %1533 = vmatprep.subr.mxu0 0.0
    %1534 = vmatpush1.msra.mxu0 %v622
    %1535 = vmatprep.subr.mxu0 0.0
    %1536 = vmatpush1.msra.mxu0 %v619
    %1537 = vmatprep.subr.mxu0 0.0
    %1538 = vmatpush1.msra.mxu0 %v616
    %1539 = vmatprep.subr.mxu0 0.0
    %1540 = vmatpush1.msra.mxu0 %v613
    %1541 = vmatprep.subr.mxu0 0.0
    %1542 = vmatpush2.msra.mxu0 0.0
    %1543 = vmatprep.subr.mxu0 0.0
    %1544 = vmatpush2.msra.mxu0 0.0
    %1545 = vmatprep.subr.mxu0 0.0
    %1546 = vmatpush2.msra.mxu0 0.0
    %1547 = vmatprep.subr.mxu0 0.0
    %1548 = vmatpush2.msra.mxu0 0.0
    %1549 = vmatprep.subr.mxu0 0.0
    %1550 = vmatpush2.msra.mxu0 0.0
    %1551 = vmatprep.subr.mxu0 0.0
    %1552 = vmatpush2.msra.mxu0 0.0
    %1553 = vmatprep.subr.mxu0 0.0
    %1554 = vmatpush2.msra.mxu0 0.0
    %1555 = vmatprep.subr.mxu0 0.0
    %1556 = vmatpush2.msra.mxu0 0.0
    %1557 = vmatprep.subr.mxu0 0.0
    %1558 = vmatpush2.msra.mxu0 0.0
    %1559 = vmatprep.subr.mxu0 0.0
    %1560 = vmatpush2.msra.mxu0 0.0
    %1561 = vmatprep.subr.mxu0 0.0
    %1562 = vmatpush2.msra.mxu0 0.0
    %1563 = vmatprep.subr.mxu0 0.0
    %1564 = vmatpush2.msra.mxu0 0.0
    %1565 = vmatprep.subr.mxu0 0.0
    %1566 = vmatpush2.msra.mxu0 0.0
    %1567 = vmatprep.subr.mxu0 0.0
    %1568 = vmatpush2.msra.mxu0 0.0
    %1569 = vmatprep.subr.mxu0 0.0
    %1570 = vmatpush2.msra.mxu0 0.0
    %1571 = vmatprep.subr.mxu0 0.0
    %1572 = vmatpush2.msra.mxu0 0.0
    %1573 = vmatprep.mubr.f32.mxu0 0.0
    %1574 = vmatmul.mubr.f32.gmra.mxu0 %v1258
    %v1575 = vpop.f32.mrf.mxu0
    %v1576 = vadd.f32 %v725, %v1575
    %v1577 = vpop.f32.mrf.mxu0
    %1578 = vdwg.mxu0
    %v1579 = vadd.f32 %v1435, %v1505
    %v1580 = vxor.u32 %v1579, 2147483648
    %v1581 = vmul.f32 %v1580, 1.442695
    %v1582 = vpow.pop %v1581
    %v1583 = vadd.f32 %v1582, 1.0
    %v1584 = vrcp.pop %v1583
    %v1585 = vmul.f32 1.0, %v1584
    %v1586 = vadd.f32 %v1436, %v1507
    %v1587 = vxor.u32 %v1586, 2147483648
    %v1588 = vmul.f32 %v1587, 1.442695
    %v1589 = vpow.pop %v1588
    %v1590 = vadd.f32 %v1589, 1.0
    %v1591 = vrcp.pop %v1590
    %v1592 = vmul.f32 1.0, %v1591
    %v1593 = vmul.f32 %v1585, %v1576
    %v1594 = vadd.f32 %v1437, %v1593
    %v1595 = vtanh.pop %v1594
    %v1596 = vsub.f32 %v1258, %v1595
    %v1597 = vmul.f32 %v1592, %v1596
    %v1598 = vadd.f32 %v1595, %v1597
    %vm1599 = vcmp.gt.s32.totalorder %v709, 2
    %v1600 = vsel %vm1599, 1, 0
    %1601 = vset.pattern.permute.xlu0 0
    %1602 = vperm.xlu0 %1601, %v1600
    %v1603 = vpop.permute.xlu0 %1602
    %vm1604 = vcmp.eq.s32.totalorder %v1603, 1
    %v1605 = vsel %vm1604, %v1598, 0.0
    %v1606 = vsel %vm1604, %v1598, %v1258
    %v1607 = vld [vmem:[#allocation2 + $0x108] sm:$0xff]
    %v1608 = vld [vmem:[#allocation2 + $0x110] sm:$0xff]
    %v1609 = vld [vmem:[#allocation2 + $0x118] sm:$0xff]
    %1610 = vmatprep.subr.mxu0 %v705
    %1611 = vmatpush1.msra.mxu0 %v704
    %1612 = vmatprep.subr.mxu0 %v702
    %1613 = vmatpush1.msra.mxu0 %v701
    %1614 = vmatprep.subr.mxu0 %v699
    %1615 = vmatpush1.msra.mxu0 %v698
    %1616 = vmatprep.subr.mxu0 %v696
    %1617 = vmatpush1.msra.mxu0 %v695
    %1618 = vmatprep.subr.mxu0 %v693
    %1619 = vmatpush1.msra.mxu0 %v692
    %1620 = vmatprep.subr.mxu0 %v690
    %1621 = vmatpush1.msra.mxu0 %v689
    %1622 = vmatprep.subr.mxu0 %v687
    %1623 = vmatpush1.msra.mxu0 %v686
    %1624 = vmatprep.subr.mxu0 %v684
    %1625 = vmatpush1.msra.mxu0 %v683
    %1626 = vmatprep.subr.mxu0 %v681
    %1627 = vmatpush1.msra.mxu0 %v680
    %1628 = vmatprep.subr.mxu0 %v678
    %1629 = vmatpush1.msra.mxu0 %v677
    %1630 = vmatprep.subr.mxu0 %v675
    %1631 = vmatpush1.msra.mxu0 %v674
    %1632 = vmatprep.subr.mxu0 %v672
    %1633 = vmatpush1.msra.mxu0 %v671
    %1634 = vmatprep.subr.mxu0 %v669
    %1635 = vmatpush1.msra.mxu0 %v668
    %1636 = vmatprep.subr.mxu0 %v666
    %1637 = vmatpush1.msra.mxu0 %v665
    %1638 = vmatprep.subr.mxu0 %v663
    %1639 = vmatpush1.msra.mxu0 %v662
    %1640 = vmatprep.subr.mxu0 %v660
    %1641 = vmatpush1.msra.mxu0 %v659
    %1642 = vmatprep.subr.mxu0 0.0
    %1643 = vmatpush2.msra.mxu0 0.0
    %1644 = vmatprep.subr.mxu0 0.0
    %1645 = vmatpush2.msra.mxu0 0.0
    %1646 = vmatprep.subr.mxu0 0.0
    %1647 = vmatpush2.msra.mxu0 0.0
    %1648 = vmatprep.subr.mxu0 0.0
    %1649 = vmatpush2.msra.mxu0 0.0
    %1650 = vmatprep.subr.mxu0 0.0
    %1651 = vmatpush2.msra.mxu0 0.0
    %1652 = vmatprep.subr.mxu0 0.0
    %1653 = vmatpush2.msra.mxu0 0.0
    %1654 = vmatprep.subr.mxu0 0.0
    %1655 = vmatpush2.msra.mxu0 0.0
    %1656 = vmatprep.subr.mxu0 0.0
    %1657 = vmatpush2.msra.mxu0 0.0
    %1658 = vmatprep.subr.mxu0 0.0
    %1659 = vmatpush2.msra.mxu0 0.0
    %1660 = vmatprep.subr.mxu0 0.0
    %1661 = vmatpush2.msra.mxu0 0.0
    %1662 = vmatprep.subr.mxu0 0.0
    %1663 = vmatpush2.msra.mxu0 0.0
    %1664 = vmatprep.subr.mxu0 0.0
    %1665 = vmatpush2.msra.mxu0 0.0
    %1666 = vmatprep.subr.mxu0 0.0
    %1667 = vmatpush2.msra.mxu0 0.0
    %1668 = vmatprep.subr.mxu0 0.0
    %1669 = vmatpush2.msra.mxu0 0.0
    %1670 = vmatprep.subr.mxu0 0.0
    %1671 = vmatpush2.msra.mxu0 0.0
    %1672 = vmatprep.subr.mxu0 0.0
    %1673 = vmatpush2.msra.mxu0 0.0
    %1674 = vmatprep.mubr.f32.mxu0 0.0
    %1675 = vmatmul.mubr.f32.gmra.mxu0 %v1430
    %v1676 = vpop.f32.mrf.mxu0
    %v1677 = vadd.f32 %v904, %v1676
    %v1678 = vpop.f32.mrf.mxu0
    %v1679 = vadd.f32 %v908, %v1678
    %1680 = vdwg.mxu0
    %1681 = vmatprep.subr.mxu0 0.0
    %1682 = vmatpush1.msra.mxu0 %v706
    %1683 = vmatprep.subr.mxu0 0.0
    %1684 = vmatpush1.msra.mxu0 %v703
    %1685 = vmatprep.subr.mxu0 0.0
    %1686 = vmatpush1.msra.mxu0 %v700
    %1687 = vmatprep.subr.mxu0 0.0
    %1688 = vmatpush1.msra.mxu0 %v697
    %1689 = vmatprep.subr.mxu0 0.0
    %1690 = vmatpush1.msra.mxu0 %v694
    %1691 = vmatprep.subr.mxu0 0.0
    %1692 = vmatpush1.msra.mxu0 %v691
    %1693 = vmatprep.subr.mxu0 0.0
    %1694 = vmatpush1.msra.mxu0 %v688
    %1695 = vmatprep.subr.mxu0 0.0
    %1696 = vmatpush1.msra.mxu0 %v685
    %1697 = vmatprep.subr.mxu0 0.0
    %1698 = vmatpush1.msra.mxu0 %v682
    %1699 = vmatprep.subr.mxu0 0.0
    %1700 = vmatpush1.msra.mxu0 %v679
    %1701 = vmatprep.subr.mxu0 0.0
    %1702 = vmatpush1.msra.mxu0 %v676
    %1703 = vmatprep.subr.mxu0 0.0
    %1704 = vmatpush1.msra.mxu0 %v673
    %1705 = vmatprep.subr.mxu0 0.0
    %1706 = vmatpush1.msra.mxu0 %v670
    %1707 = vmatprep.subr.mxu0 0.0
    %1708 = vmatpush1.msra.mxu0 %v667
    %1709 = vmatprep.subr.mxu0 0.0
    %1710 = vmatpush1.msra.mxu0 %v664
    %1711 = vmatprep.subr.mxu0 0.0
    %1712 = vmatpush1.msra.mxu0 %v661
    %1713 = vmatprep.subr.mxu0 0.0
    %1714 = vmatpush2.msra.mxu0 0.0
    %1715 = vmatprep.subr.mxu0 0.0
    %1716 = vmatpush2.msra.mxu0 0.0
    %1717 = vmatprep.subr.mxu0 0.0
    %1718 = vmatpush2.msra.mxu0 0.0
    %1719 = vmatprep.subr.mxu0 0.0
    %1720 = vmatpush2.msra.mxu0 0.0
    %1721 = vmatprep.subr.mxu0 0.0
    %1722 = vmatpush2.msra.mxu0 0.0
    %1723 = vmatprep.subr.mxu0 0.0
    %1724 = vmatpush2.msra.mxu0 0.0
    %1725 = vmatprep.subr.mxu0 0.0
    %1726 = vmatpush2.msra.mxu0 0.0
    %1727 = vmatprep.subr.mxu0 0.0
    %1728 = vmatpush2.msra.mxu0 0.0
    %1729 = vmatprep.subr.mxu0 0.0
    %1730 = vmatpush2.msra.mxu0 0.0
    %1731 = vmatprep.subr.mxu0 0.0
    %1732 = vmatpush2.msra.mxu0 0.0
    %1733 = vmatprep.subr.mxu0 0.0
    %1734 = vmatpush2.msra.mxu0 0.0
    %1735 = vmatprep.subr.mxu0 0.0
    %1736 = vmatpush2.msra.mxu0 0.0
    %1737 = vmatprep.subr.mxu0 0.0
    %1738 = vmatpush2.msra.mxu0 0.0
    %1739 = vmatprep.subr.mxu0 0.0
    %1740 = vmatpush2.msra.mxu0 0.0
    %1741 = vmatprep.subr.mxu0 0.0
    %1742 = vmatpush2.msra.mxu0 0.0
    %1743 = vmatprep.subr.mxu0 0.0
    %1744 = vmatpush2.msra.mxu0 0.0
    %1745 = vmatprep.mubr.f32.mxu0 0.0
    %1746 = vmatmul.mubr.f32.gmra.mxu0 %v1430
    %v1747 = vpop.f32.mrf.mxu0
    %v1748 = vadd.f32 %v912, %v1747
    %v1749 = vpop.f32.mrf.mxu0
    %1750 = vdwg.mxu0
    %v1751 = vadd.f32 %v1607, %v1677
    %v1752 = vxor.u32 %v1751, 2147483648
    %v1753 = vmul.f32 %v1752, 1.442695
    %v1754 = vpow.pop %v1753
    %v1755 = vadd.f32 %v1754, 1.0
    %v1756 = vrcp.pop %v1755
    %v1757 = vmul.f32 1.0, %v1756
    %v1758 = vadd.f32 %v1608, %v1679
    %v1759 = vxor.u32 %v1758, 2147483648
    %v1760 = vmul.f32 %v1759, 1.442695
    %v1761 = vpow.pop %v1760
    %v1762 = vadd.f32 %v1761, 1.0
    %v1763 = vrcp.pop %v1762
    %v1764 = vmul.f32 1.0, %v1763
    %v1765 = vmul.f32 %v1757, %v1748
    %v1766 = vadd.f32 %v1609, %v1765
    %v1767 = vtanh.pop %v1766
    %v1768 = vsub.f32 %v1430, %v1767
    %v1769 = vmul.f32 %v1764, %v1768
    %v1770 = vadd.f32 %v1767, %v1769
    %vm1771 = vcmp.gt.s32.totalorder %v709, 5
    %v1772 = vsel %vm1771, 1, 0
    %1773 = vset.pattern.permute.xlu0 0
    %1774 = vperm.xlu0 %1773, %v1772
    %v1775 = vpop.permute.xlu0 %1774
    %vm1776 = vcmp.eq.s32.totalorder %v1775, 1
    %v1777 = vsel %vm1776, %v1770, 0.0
    %v1778 = vsel %vm1776, %v1770, %v1430
    %s1779 = scalar_lea.vmem [#allocation11], 16
    %1780 = vst [vmem:[%s1779] sm:$0xff] %v1605
    %s1781 = scalar_lea.vmem [#allocation11], 40
    %1782 = vst [vmem:[%s1781] sm:$0xff] %v1777
    %v1783 = vld [vmem:[#allocation2 + $0x90] sm:$0xff]
    %v1784 = vld [vmem:[#allocation2 + $0x98] sm:$0xff]
    %v1785 = vld [vmem:[#allocation2 + $0xa0] sm:$0xff]
    %1786 = vmatprep.subr.mxu0 %v657
    %1787 = vmatpush1.msra.mxu0 %v656
    %1788 = vmatprep.subr.mxu0 %v654
    %1789 = vmatpush1.msra.mxu0 %v653
    %1790 = vmatprep.subr.mxu0 %v651
    %1791 = vmatpush1.msra.mxu0 %v650
    %1792 = vmatprep.subr.mxu0 %v648
    %1793 = vmatpush1.msra.mxu0 %v647
    %1794 = vmatprep.subr.mxu0 %v645
    %1795 = vmatpush1.msra.mxu0 %v644
    %1796 = vmatprep.subr.mxu0 %v642
    %1797 = vmatpush1.msra.mxu0 %v641
    %1798 = vmatprep.subr.mxu0 %v639
    %1799 = vmatpush1.msra.mxu0 %v638
    %1800 = vmatprep.subr.mxu0 %v636
    %1801 = vmatpush1.msra.mxu0 %v635
    %1802 = vmatprep.subr.mxu0 %v633
    %1803 = vmatpush1.msra.mxu0 %v632
    %1804 = vmatprep.subr.mxu0 %v630
    %1805 = vmatpush1.msra.mxu0 %v629
    %1806 = vmatprep.subr.mxu0 %v627
    %1807 = vmatpush1.msra.mxu0 %v626
    %1808 = vmatprep.subr.mxu0 %v624
    %1809 = vmatpush1.msra.mxu0 %v623
    %1810 = vmatprep.subr.mxu0 %v621
    %1811 = vmatpush1.msra.mxu0 %v620
    %1812 = vmatprep.subr.mxu0 %v618
    %1813 = vmatpush1.msra.mxu0 %v617
    %1814 = vmatprep.subr.mxu0 %v615
    %1815 = vmatpush1.msra.mxu0 %v614
    %1816 = vmatprep.subr.mxu0 %v612
    %1817 = vmatpush1.msra.mxu0 %v611
    %1818 = vmatprep.subr.mxu0 0.0
    %1819 = vmatpush2.msra.mxu0 0.0
    %1820 = vmatprep.subr.mxu0 0.0
    %1821 = vmatpush2.msra.mxu0 0.0
    %1822 = vmatprep.subr.mxu0 0.0
    %1823 = vmatpush2.msra.mxu0 0.0
    %1824 = vmatprep.subr.mxu0 0.0
    %1825 = vmatpush2.msra.mxu0 0.0
    %1826 = vmatprep.subr.mxu0 0.0
    %1827 = vmatpush2.msra.mxu0 0.0
    %1828 = vmatprep.subr.mxu0 0.0
    %1829 = vmatpush2.msra.mxu0 0.0
    %1830 = vmatprep.subr.mxu0 0.0
    %1831 = vmatpush2.msra.mxu0 0.0
    %1832 = vmatprep.subr.mxu0 0.0
    %1833 = vmatpush2.msra.mxu0 0.0
    %1834 = vmatprep.subr.mxu0 0.0
    %1835 = vmatpush2.msra.mxu0 0.0
    %1836 = vmatprep.subr.mxu0 0.0
    %1837 = vmatpush2.msra.mxu0 0.0
    %1838 = vmatprep.subr.mxu0 0.0
    %1839 = vmatpush2.msra.mxu0 0.0
    %1840 = vmatprep.subr.mxu0 0.0
    %1841 = vmatpush2.msra.mxu0 0.0
    %1842 = vmatprep.subr.mxu0 0.0
    %1843 = vmatpush2.msra.mxu0 0.0
    %1844 = vmatprep.subr.mxu0 0.0
    %1845 = vmatpush2.msra.mxu0 0.0
    %1846 = vmatprep.subr.mxu0 0.0
    %1847 = vmatpush2.msra.mxu0 0.0
    %1848 = vmatprep.subr.mxu0 0.0
    %1849 = vmatpush2.msra.mxu0 0.0
    %1850 = vmatprep.mubr.f32.mxu0 0.0
    %1851 = vmatmul.mubr.f32.gmra.mxu0 %v1606
    %v1852 = vpop.f32.mrf.mxu0
    %v1853 = vadd.f32 %v717, %v1852
    %v1854 = vpop.f32.mrf.mxu0
    %v1855 = vadd.f32 %v721, %v1854
    %1856 = vdwg.mxu0
    %1857 = vmatprep.subr.mxu0 0.0
    %1858 = vmatpush1.msra.mxu0 %v658
    %1859 = vmatprep.subr.mxu0 0.0
    %1860 = vmatpush1.msra.mxu0 %v655
    %1861 = vmatprep.subr.mxu0 0.0
    %1862 = vmatpush1.msra.mxu0 %v652
    %1863 = vmatprep.subr.mxu0 0.0
    %1864 = vmatpush1.msra.mxu0 %v649
    %1865 = vmatprep.subr.mxu0 0.0
    %1866 = vmatpush1.msra.mxu0 %v646
    %1867 = vmatprep.subr.mxu0 0.0
    %1868 = vmatpush1.msra.mxu0 %v643
    %1869 = vmatprep.subr.mxu0 0.0
    %1870 = vmatpush1.msra.mxu0 %v640
    %1871 = vmatprep.subr.mxu0 0.0
    %1872 = vmatpush1.msra.mxu0 %v637
    %1873 = vmatprep.subr.mxu0 0.0
    %1874 = vmatpush1.msra.mxu0 %v634
    %1875 = vmatprep.subr.mxu0 0.0
    %1876 = vmatpush1.msra.mxu0 %v631
    %1877 = vmatprep.subr.mxu0 0.0
    %1878 = vmatpush1.msra.mxu0 %v628
    %1879 = vmatprep.subr.mxu0 0.0
    %1880 = vmatpush1.msra.mxu0 %v625
    %1881 = vmatprep.subr.mxu0 0.0
    %1882 = vmatpush1.msra.mxu0 %v622
    %1883 = vmatprep.subr.mxu0 0.0
    %1884 = vmatpush1.msra.mxu0 %v619
    %1885 = vmatprep.subr.mxu0 0.0
    %1886 = vmatpush1.msra.mxu0 %v616
    %1887 = vmatprep.subr.mxu0 0.0
    %1888 = vmatpush1.msra.mxu0 %v613
    %1889 = vmatprep.subr.mxu0 0.0
    %1890 = vmatpush2.msra.mxu0 0.0
    %1891 = vmatprep.subr.mxu0 0.0
    %1892 = vmatpush2.msra.mxu0 0.0
    %1893 = vmatprep.subr.mxu0 0.0
    %1894 = vmatpush2.msra.mxu0 0.0
    %1895 = vmatprep.subr.mxu0 0.0
    %1896 = vmatpush2.msra.mxu0 0.0
    %1897 = vmatprep.subr.mxu0 0.0
    %1898 = vmatpush2.msra.mxu0 0.0
    %1899 = vmatprep.subr.mxu0 0.0
    %1900 = vmatpush2.msra.mxu0 0.0
    %1901 = vmatprep.subr.mxu0 0.0
    %1902 = vmatpush2.msra.mxu0 0.0
    %1903 = vmatprep.subr.mxu0 0.0
    %1904 = vmatpush2.msra.mxu0 0.0
    %1905 = vmatprep.subr.mxu0 0.0
    %1906 = vmatpush2.msra.mxu0 0.0
    %1907 = vmatprep.subr.mxu0 0.0
    %1908 = vmatpush2.msra.mxu0 0.0
    %1909 = vmatprep.subr.mxu0 0.0
    %1910 = vmatpush2.msra.mxu0 0.0
    %1911 = vmatprep.subr.mxu0 0.0
    %1912 = vmatpush2.msra.mxu0 0.0
    %1913 = vmatprep.subr.mxu0 0.0
    %1914 = vmatpush2.msra.mxu0 0.0
    %1915 = vmatprep.subr.mxu0 0.0
    %1916 = vmatpush2.msra.mxu0 0.0
    %1917 = vmatprep.subr.mxu0 0.0
    %1918 = vmatpush2.msra.mxu0 0.0
    %1919 = vmatprep.subr.mxu0 0.0
    %1920 = vmatpush2.msra.mxu0 0.0
    %1921 = vmatprep.mubr.f32.mxu0 0.0
    %1922 = vmatmul.mubr.f32.gmra.mxu0 %v1606
    %v1923 = vpop.f32.mrf.mxu0
    %v1924 = vadd.f32 %v725, %v1923
    %v1925 = vpop.f32.mrf.mxu0
    %1926 = vdwg.mxu0
    %v1927 = vadd.f32 %v1783, %v1853
    %v1928 = vxor.u32 %v1927, 2147483648
    %v1929 = vmul.f32 %v1928, 1.442695
    %v1930 = vpow.pop %v1929
    %v1931 = vadd.f32 %v1930, 1.0
    %v1932 = vrcp.pop %v1931
    %v1933 = vmul.f32 1.0, %v1932
    %v1934 = vadd.f32 %v1784, %v1855
    %v1935 = vxor.u32 %v1934, 2147483648
    %v1936 = vmul.f32 %v1935, 1.442695
    %v1937 = vpow.pop %v1936
    %v1938 = vadd.f32 %v1937, 1.0
    %v1939 = vrcp.pop %v1938
    %v1940 = vmul.f32 1.0, %v1939
    %v1941 = vmul.f32 %v1933, %v1924
    %v1942 = vadd.f32 %v1785, %v1941
    %v1943 = vtanh.pop %v1942
    %v1944 = vsub.f32 %v1606, %v1943
    %v1945 = vmul.f32 %v1940, %v1944
    %v1946 = vadd.f32 %v1943, %v1945
    %vm1947 = vcmp.gt.s32.totalorder %v709, 3
    %v1948 = vsel %vm1947, 1, 0
    %1949 = vset.pattern.permute.xlu0 0
    %1950 = vperm.xlu0 %1949, %v1948
    %v1951 = vpop.permute.xlu0 %1950
    %vm1952 = vcmp.eq.s32.totalorder %v1951, 1
    %v1953 = vsel %vm1952, %v1946, 0.0
    %v1954 = vsel %vm1952, %v1946, %v1606
    %v1955 = vld [vmem:[#allocation2 + $0xd8] sm:$0xff]
    %v1956 = vld [vmem:[#allocation2 + $0xe0] sm:$0xff]
    %v1957 = vld [vmem:[#allocation2 + $0xe8] sm:$0xff]
    %1958 = vmatprep.subr.mxu0 %v705
    %1959 = vmatpush1.msra.mxu0 %v704
    %1960 = vmatprep.subr.mxu0 %v702
    %1961 = vmatpush1.msra.mxu0 %v701
    %1962 = vmatprep.subr.mxu0 %v699
    %1963 = vmatpush1.msra.mxu0 %v698
    %1964 = vmatprep.subr.mxu0 %v696
    %1965 = vmatpush1.msra.mxu0 %v695
    %1966 = vmatprep.subr.mxu0 %v693
    %1967 = vmatpush1.msra.mxu0 %v692
    %1968 = vmatprep.subr.mxu0 %v690
    %1969 = vmatpush1.msra.mxu0 %v689
    %1970 = vmatprep.subr.mxu0 %v687
    %1971 = vmatpush1.msra.mxu0 %v686
    %1972 = vmatprep.subr.mxu0 %v684
    %1973 = vmatpush1.msra.mxu0 %v683
    %1974 = vmatprep.subr.mxu0 %v681
    %1975 = vmatpush1.msra.mxu0 %v680
    %1976 = vmatprep.subr.mxu0 %v678
    %1977 = vmatpush1.msra.mxu0 %v677
    %1978 = vmatprep.subr.mxu0 %v675
    %1979 = vmatpush1.msra.mxu0 %v674
    %1980 = vmatprep.subr.mxu0 %v672
    %1981 = vmatpush1.msra.mxu0 %v671
    %1982 = vmatprep.subr.mxu0 %v669
    %1983 = vmatpush1.msra.mxu0 %v668
    %1984 = vmatprep.subr.mxu0 %v666
    %1985 = vmatpush1.msra.mxu0 %v665
    %1986 = vmatprep.subr.mxu0 %v663
    %1987 = vmatpush1.msra.mxu0 %v662
    %1988 = vmatprep.subr.mxu0 %v660
    %1989 = vmatpush1.msra.mxu0 %v659
    %1990 = vmatprep.subr.mxu0 0.0
    %1991 = vmatpush2.msra.mxu0 0.0
    %1992 = vmatprep.subr.mxu0 0.0
    %1993 = vmatpush2.msra.mxu0 0.0
    %1994 = vmatprep.subr.mxu0 0.0
    %1995 = vmatpush2.msra.mxu0 0.0
    %1996 = vmatprep.subr.mxu0 0.0
    %1997 = vmatpush2.msra.mxu0 0.0
    %1998 = vmatprep.subr.mxu0 0.0
    %1999 = vmatpush2.msra.mxu0 0.0
    %2000 = vmatprep.subr.mxu0 0.0
    %2001 = vmatpush2.msra.mxu0 0.0
    %2002 = vmatprep.subr.mxu0 0.0
    %2003 = vmatpush2.msra.mxu0 0.0
    %2004 = vmatprep.subr.mxu0 0.0
    %2005 = vmatpush2.msra.mxu0 0.0
    %2006 = vmatprep.subr.mxu0 0.0
    %2007 = vmatpush2.msra.mxu0 0.0
    %2008 = vmatprep.subr.mxu0 0.0
    %2009 = vmatpush2.msra.mxu0 0.0
    %2010 = vmatprep.subr.mxu0 0.0
    %2011 = vmatpush2.msra.mxu0 0.0
    %2012 = vmatprep.subr.mxu0 0.0
    %2013 = vmatpush2.msra.mxu0 0.0
    %2014 = vmatprep.subr.mxu0 0.0
    %2015 = vmatpush2.msra.mxu0 0.0
    %2016 = vmatprep.subr.mxu0 0.0
    %2017 = vmatpush2.msra.mxu0 0.0
    %2018 = vmatprep.subr.mxu0 0.0
    %2019 = vmatpush2.msra.mxu0 0.0
    %2020 = vmatprep.subr.mxu0 0.0
    %2021 = vmatpush2.msra.mxu0 0.0
    %2022 = vmatprep.mubr.f32.mxu0 0.0
    %2023 = vmatmul.mubr.f32.gmra.mxu0 %v1778
    %v2024 = vpop.f32.mrf.mxu0
    %v2025 = vadd.f32 %v904, %v2024
    %v2026 = vpop.f32.mrf.mxu0
    %v2027 = vadd.f32 %v908, %v2026
    %2028 = vdwg.mxu0
    %2029 = vmatprep.subr.mxu0 0.0
    %2030 = vmatpush1.msra.mxu0 %v706
    %2031 = vmatprep.subr.mxu0 0.0
    %2032 = vmatpush1.msra.mxu0 %v703
    %2033 = vmatprep.subr.mxu0 0.0
    %2034 = vmatpush1.msra.mxu0 %v700
    %2035 = vmatprep.subr.mxu0 0.0
    %2036 = vmatpush1.msra.mxu0 %v697
    %2037 = vmatprep.subr.mxu0 0.0
    %2038 = vmatpush1.msra.mxu0 %v694
    %2039 = vmatprep.subr.mxu0 0.0
    %2040 = vmatpush1.msra.mxu0 %v691
    %2041 = vmatprep.subr.mxu0 0.0
    %2042 = vmatpush1.msra.mxu0 %v688
    %2043 = vmatprep.subr.mxu0 0.0
    %2044 = vmatpush1.msra.mxu0 %v685
    %2045 = vmatprep.subr.mxu0 0.0
    %2046 = vmatpush1.msra.mxu0 %v682
    %2047 = vmatprep.subr.mxu0 0.0
    %2048 = vmatpush1.msra.mxu0 %v679
    %2049 = vmatprep.subr.mxu0 0.0
    %2050 = vmatpush1.msra.mxu0 %v676
    %2051 = vmatprep.subr.mxu0 0.0
    %2052 = vmatpush1.msra.mxu0 %v673
    %2053 = vmatprep.subr.mxu0 0.0
    %2054 = vmatpush1.msra.mxu0 %v670
    %2055 = vmatprep.subr.mxu0 0.0
    %2056 = vmatpush1.msra.mxu0 %v667
    %2057 = vmatprep.subr.mxu0 0.0
    %2058 = vmatpush1.msra.mxu0 %v664
    %2059 = vmatprep.subr.mxu0 0.0
    %2060 = vmatpush1.msra.mxu0 %v661
    %2061 = vmatprep.subr.mxu0 0.0
    %2062 = vmatpush2.msra.mxu0 0.0
    %2063 = vmatprep.subr.mxu0 0.0
    %2064 = vmatpush2.msra.mxu0 0.0
    %2065 = vmatprep.subr.mxu0 0.0
    %2066 = vmatpush2.msra.mxu0 0.0
    %2067 = vmatprep.subr.mxu0 0.0
    %2068 = vmatpush2.msra.mxu0 0.0
    %2069 = vmatprep.subr.mxu0 0.0
    %2070 = vmatpush2.msra.mxu0 0.0
    %2071 = vmatprep.subr.mxu0 0.0
    %2072 = vmatpush2.msra.mxu0 0.0
    %2073 = vmatprep.subr.mxu0 0.0
    %2074 = vmatpush2.msra.mxu0 0.0
    %2075 = vmatprep.subr.mxu0 0.0
    %2076 = vmatpush2.msra.mxu0 0.0
    %2077 = vmatprep.subr.mxu0 0.0
    %2078 = vmatpush2.msra.mxu0 0.0
    %2079 = vmatprep.subr.mxu0 0.0
    %2080 = vmatpush2.msra.mxu0 0.0
    %2081 = vmatprep.subr.mxu0 0.0
    %2082 = vmatpush2.msra.mxu0 0.0
    %2083 = vmatprep.subr.mxu0 0.0
    %2084 = vmatpush2.msra.mxu0 0.0
    %2085 = vmatprep.subr.mxu0 0.0
    %2086 = vmatpush2.msra.mxu0 0.0
    %2087 = vmatprep.subr.mxu0 0.0
    %2088 = vmatpush2.msra.mxu0 0.0
    %2089 = vmatprep.subr.mxu0 0.0
    %2090 = vmatpush2.msra.mxu0 0.0
    %2091 = vmatprep.subr.mxu0 0.0
    %2092 = vmatpush2.msra.mxu0 0.0
    %2093 = vmatprep.mubr.f32.mxu0 0.0
    %2094 = vmatmul.mubr.f32.gmra.mxu0 %v1778
    %v2095 = vpop.f32.mrf.mxu0
    %v2096 = vadd.f32 %v912, %v2095
    %v2097 = vpop.f32.mrf.mxu0
    %2098 = vdwg.mxu0
    %v2099 = vadd.f32 %v1955, %v2025
    %v2100 = vxor.u32 %v2099, 2147483648
    %v2101 = vmul.f32 %v2100, 1.442695
    %v2102 = vpow.pop %v2101
    %v2103 = vadd.f32 %v2102, 1.0
    %v2104 = vrcp.pop %v2103
    %v2105 = vmul.f32 1.0, %v2104
    %v2106 = vadd.f32 %v1956, %v2027
    %v2107 = vxor.u32 %v2106, 2147483648
    %v2108 = vmul.f32 %v2107, 1.442695
    %v2109 = vpow.pop %v2108
    %v2110 = vadd.f32 %v2109, 1.0
    %v2111 = vrcp.pop %v2110
    %v2112 = vmul.f32 1.0, %v2111
    %v2113 = vmul.f32 %v2105, %v2096
    %v2114 = vadd.f32 %v1957, %v2113
    %v2115 = vtanh.pop %v2114
    %v2116 = vsub.f32 %v1778, %v2115
    %v2117 = vmul.f32 %v2112, %v2116
    %v2118 = vadd.f32 %v2115, %v2117
    %vm2119 = vcmp.gt.s32.totalorder %v709, 4
    %v2120 = vsel %vm2119, 1, 0
    %2121 = vset.pattern.permute.xlu0 0
    %2122 = vperm.xlu0 %2121, %v2120
    %v2123 = vpop.permute.xlu0 %2122
    %vm2124 = vcmp.eq.s32.totalorder %v2123, 1
    %v2125 = vsel %vm2124, %v2118, 0.0
    %v2126 = vsel %vm2124, %v2118, %v1778
    %s2127 = scalar_lea.vmem [#allocation11], 24
    %2128 = vst [vmem:[%s2127] sm:$0xff] %v1953
    %s2129 = scalar_lea.vmem [#allocation11], 32
    %2130 = vst [vmem:[%s2129] sm:$0xff] %v2125
    %v2131 = vld [vmem:[#allocation2 + $0xc0] sm:$0xff]
    %v2132 = vld [vmem:[#allocation2 + $0xc8] sm:$0xff]
    %v2133 = vld [vmem:[#allocation2 + $0xd0] sm:$0xff]
    %2134 = vmatprep.subr.mxu0 %v657
    %2135 = vmatpush1.msra.mxu0 %v656
    %2136 = vmatprep.subr.mxu0 %v654
    %2137 = vmatpush1.msra.mxu0 %v653
    %2138 = vmatprep.subr.mxu0 %v651
    %2139 = vmatpush1.msra.mxu0 %v650
    %2140 = vmatprep.subr.mxu0 %v648
    %2141 = vmatpush1.msra.mxu0 %v647
    %2142 = vmatprep.subr.mxu0 %v645
    %2143 = vmatpush1.msra.mxu0 %v644
    %2144 = vmatprep.subr.mxu0 %v642
    %2145 = vmatpush1.msra.mxu0 %v641
    %2146 = vmatprep.subr.mxu0 %v639
    %2147 = vmatpush1.msra.mxu0 %v638
    %2148 = vmatprep.subr.mxu0 %v636
    %2149 = vmatpush1.msra.mxu0 %v635
    %2150 = vmatprep.subr.mxu0 %v633
    %2151 = vmatpush1.msra.mxu0 %v632
    %2152 = vmatprep.subr.mxu0 %v630
    %2153 = vmatpush1.msra.mxu0 %v629
    %2154 = vmatprep.subr.mxu0 %v627
    %2155 = vmatpush1.msra.mxu0 %v626
    %2156 = vmatprep.subr.mxu0 %v624
    %2157 = vmatpush1.msra.mxu0 %v623
    %2158 = vmatprep.subr.mxu0 %v621
    %2159 = vmatpush1.msra.mxu0 %v620
    %2160 = vmatprep.subr.mxu0 %v618
    %2161 = vmatpush1.msra.mxu0 %v617
    %2162 = vmatprep.subr.mxu0 %v615
    %2163 = vmatpush1.msra.mxu0 %v614
    %2164 = vmatprep.subr.mxu0 %v612
    %2165 = vmatpush1.msra.mxu0 %v611
    %2166 = vmatprep.subr.mxu0 0.0
    %2167 = vmatpush2.msra.mxu0 0.0
    %2168 = vmatprep.subr.mxu0 0.0
    %2169 = vmatpush2.msra.mxu0 0.0
    %2170 = vmatprep.subr.mxu0 0.0
    %2171 = vmatpush2.msra.mxu0 0.0
    %2172 = vmatprep.subr.mxu0 0.0
    %2173 = vmatpush2.msra.mxu0 0.0
    %2174 = vmatprep.subr.mxu0 0.0
    %2175 = vmatpush2.msra.mxu0 0.0
    %2176 = vmatprep.subr.mxu0 0.0
    %2177 = vmatpush2.msra.mxu0 0.0
    %2178 = vmatprep.subr.mxu0 0.0
    %2179 = vmatpush2.msra.mxu0 0.0
    %2180 = vmatprep.subr.mxu0 0.0
    %2181 = vmatpush2.msra.mxu0 0.0
    %2182 = vmatprep.subr.mxu0 0.0
    %2183 = vmatpush2.msra.mxu0 0.0
    %2184 = vmatprep.subr.mxu0 0.0
    %2185 = vmatpush2.msra.mxu0 0.0
    %2186 = vmatprep.subr.mxu0 0.0
    %2187 = vmatpush2.msra.mxu0 0.0
    %2188 = vmatprep.subr.mxu0 0.0
    %2189 = vmatpush2.msra.mxu0 0.0
    %2190 = vmatprep.subr.mxu0 0.0
    %2191 = vmatpush2.msra.mxu0 0.0
    %2192 = vmatprep.subr.mxu0 0.0
    %2193 = vmatpush2.msra.mxu0 0.0
    %2194 = vmatprep.subr.mxu0 0.0
    %2195 = vmatpush2.msra.mxu0 0.0
    %2196 = vmatprep.subr.mxu0 0.0
    %2197 = vmatpush2.msra.mxu0 0.0
    %2198 = vmatprep.mubr.f32.mxu0 0.0
    %2199 = vmatmul.mubr.f32.gmra.mxu0 %v1954
    %v2200 = vpop.f32.mrf.mxu0
    %v2201 = vadd.f32 %v717, %v2200
    %v2202 = vpop.f32.mrf.mxu0
    %v2203 = vadd.f32 %v721, %v2202
    %2204 = vdwg.mxu0
    %2205 = vmatprep.subr.mxu0 0.0
    %2206 = vmatpush1.msra.mxu0 %v658
    %2207 = vmatprep.subr.mxu0 0.0
    %2208 = vmatpush1.msra.mxu0 %v655
    %2209 = vmatprep.subr.mxu0 0.0
    %2210 = vmatpush1.msra.mxu0 %v652
    %2211 = vmatprep.subr.mxu0 0.0
    %2212 = vmatpush1.msra.mxu0 %v649
    %2213 = vmatprep.subr.mxu0 0.0
    %2214 = vmatpush1.msra.mxu0 %v646
    %2215 = vmatprep.subr.mxu0 0.0
    %2216 = vmatpush1.msra.mxu0 %v643
    %2217 = vmatprep.subr.mxu0 0.0
    %2218 = vmatpush1.msra.mxu0 %v640
    %2219 = vmatprep.subr.mxu0 0.0
    %2220 = vmatpush1.msra.mxu0 %v637
    %2221 = vmatprep.subr.mxu0 0.0
    %2222 = vmatpush1.msra.mxu0 %v634
    %2223 = vmatprep.subr.mxu0 0.0
    %2224 = vmatpush1.msra.mxu0 %v631
    %2225 = vmatprep.subr.mxu0 0.0
    %2226 = vmatpush1.msra.mxu0 %v628
    %2227 = vmatprep.subr.mxu0 0.0
    %2228 = vmatpush1.msra.mxu0 %v625
    %2229 = vmatprep.subr.mxu0 0.0
    %2230 = vmatpush1.msra.mxu0 %v622
    %2231 = vmatprep.subr.mxu0 0.0
    %2232 = vmatpush1.msra.mxu0 %v619
    %2233 = vmatprep.subr.mxu0 0.0
    %2234 = vmatpush1.msra.mxu0 %v616
    %2235 = vmatprep.subr.mxu0 0.0
    %2236 = vmatpush1.msra.mxu0 %v613
    %2237 = vmatprep.subr.mxu0 0.0
    %2238 = vmatpush2.msra.mxu0 0.0
    %2239 = vmatprep.subr.mxu0 0.0
    %2240 = vmatpush2.msra.mxu0 0.0
    %2241 = vmatprep.subr.mxu0 0.0
    %2242 = vmatpush2.msra.mxu0 0.0
    %2243 = vmatprep.subr.mxu0 0.0
    %2244 = vmatpush2.msra.mxu0 0.0
    %2245 = vmatprep.subr.mxu0 0.0
    %2246 = vmatpush2.msra.mxu0 0.0
    %2247 = vmatprep.subr.mxu0 0.0
    %2248 = vmatpush2.msra.mxu0 0.0
    %2249 = vmatprep.subr.mxu0 0.0
    %2250 = vmatpush2.msra.mxu0 0.0
    %2251 = vmatprep.subr.mxu0 0.0
    %2252 = vmatpush2.msra.mxu0 0.0
    %2253 = vmatprep.subr.mxu0 0.0
    %2254 = vmatpush2.msra.mxu0 0.0
    %2255 = vmatprep.subr.mxu0 0.0
    %2256 = vmatpush2.msra.mxu0 0.0
    %2257 = vmatprep.subr.mxu0 0.0
    %2258 = vmatpush2.msra.mxu0 0.0
    %2259 = vmatprep.subr.mxu0 0.0
    %2260 = vmatpush2.msra.mxu0 0.0
    %2261 = vmatprep.subr.mxu0 0.0
    %2262 = vmatpush2.msra.mxu0 0.0
    %2263 = vmatprep.subr.mxu0 0.0
    %2264 = vmatpush2.msra.mxu0 0.0
    %2265 = vmatprep.subr.mxu0 0.0
    %2266 = vmatpush2.msra.mxu0 0.0
    %2267 = vmatprep.subr.mxu0 0.0
    %2268 = vmatpush2.msra.mxu0 0.0
    %2269 = vmatprep.mubr.f32.mxu0 0.0
    %2270 = vmatmul.mubr.f32.gmra.mxu0 %v1954
    %v2271 = vpop.f32.mrf.mxu0
    %v2272 = vadd.f32 %v725, %v2271
    %v2273 = vpop.f32.mrf.mxu0
    %2274 = vdwg.mxu0
    %v2275 = vadd.f32 %v2131, %v2201
    %v2276 = vxor.u32 %v2275, 2147483648
    %v2277 = vmul.f32 %v2276, 1.442695
    %v2278 = vpow.pop %v2277
    %v2279 = vadd.f32 %v2278, 1.0
    %v2280 = vrcp.pop %v2279
    %v2281 = vmul.f32 1.0, %v2280
    %v2282 = vadd.f32 %v2132, %v2203
    %v2283 = vxor.u32 %v2282, 2147483648
    %v2284 = vmul.f32 %v2283, 1.442695
    %v2285 = vpow.pop %v2284
    %v2286 = vadd.f32 %v2285, 1.0
    %v2287 = vrcp.pop %v2286
    %v2288 = vmul.f32 1.0, %v2287
    %v2289 = vmul.f32 %v2281, %v2272
    %v2290 = vadd.f32 %v2133, %v2289
    %v2291 = vtanh.pop %v2290
    %v2292 = vsub.f32 %v1954, %v2291
    %v2293 = vmul.f32 %v2288, %v2292
    %v2294 = vadd.f32 %v2291, %v2293
    %v2295 = vsel %vm2124, %v2294, 0.0
    %v2296 = vsel %vm2124, %v2294, %v1954
    %v2297 = vld [vmem:[#allocation2 + $0xa8] sm:$0xff]
    %v2298 = vld [vmem:[#allocation2 + $0xb0] sm:$0xff]
    %v2299 = vld [vmem:[#allocation2 + $0xb8] sm:$0xff]
    %2300 = vmatprep.subr.mxu0 %v705
    %2301 = vmatpush1.msra.mxu0 %v704
    %2302 = vmatprep.subr.mxu0 %v702
    %2303 = vmatpush1.msra.mxu0 %v701
    %2304 = vmatprep.subr.mxu0 %v699
    %2305 = vmatpush1.msra.mxu0 %v698
    %2306 = vmatprep.subr.mxu0 %v696
    %2307 = vmatpush1.msra.mxu0 %v695
    %2308 = vmatprep.subr.mxu0 %v693
    %2309 = vmatpush1.msra.mxu0 %v692
    %2310 = vmatprep.subr.mxu0 %v690
    %2311 = vmatpush1.msra.mxu0 %v689
    %2312 = vmatprep.subr.mxu0 %v687
    %2313 = vmatpush1.msra.mxu0 %v686
    %2314 = vmatprep.subr.mxu0 %v684
    %2315 = vmatpush1.msra.mxu0 %v683
    %2316 = vmatprep.subr.mxu0 %v681
    %2317 = vmatpush1.msra.mxu0 %v680
    %2318 = vmatprep.subr.mxu0 %v678
    %2319 = vmatpush1.msra.mxu0 %v677
    %2320 = vmatprep.subr.mxu0 %v675
    %2321 = vmatpush1.msra.mxu0 %v674
    %2322 = vmatprep.subr.mxu0 %v672
    %2323 = vmatpush1.msra.mxu0 %v671
    %2324 = vmatprep.subr.mxu0 %v669
    %2325 = vmatpush1.msra.mxu0 %v668
    %2326 = vmatprep.subr.mxu0 %v666
    %2327 = vmatpush1.msra.mxu0 %v665
    %2328 = vmatprep.subr.mxu0 %v663
    %2329 = vmatpush1.msra.mxu0 %v662
    %2330 = vmatprep.subr.mxu0 %v660
    %2331 = vmatpush1.msra.mxu0 %v659
    %2332 = vmatprep.subr.mxu0 0.0
    %2333 = vmatpush2.msra.mxu0 0.0
    %2334 = vmatprep.subr.mxu0 0.0
    %2335 = vmatpush2.msra.mxu0 0.0
    %2336 = vmatprep.subr.mxu0 0.0
    %2337 = vmatpush2.msra.mxu0 0.0
    %2338 = vmatprep.subr.mxu0 0.0
    %2339 = vmatpush2.msra.mxu0 0.0
    %2340 = vmatprep.subr.mxu0 0.0
    %2341 = vmatpush2.msra.mxu0 0.0
    %2342 = vmatprep.subr.mxu0 0.0
    %2343 = vmatpush2.msra.mxu0 0.0
    %2344 = vmatprep.subr.mxu0 0.0
    %2345 = vmatpush2.msra.mxu0 0.0
    %2346 = vmatprep.subr.mxu0 0.0
    %2347 = vmatpush2.msra.mxu0 0.0
    %2348 = vmatprep.subr.mxu0 0.0
    %2349 = vmatpush2.msra.mxu0 0.0
    %2350 = vmatprep.subr.mxu0 0.0
    %2351 = vmatpush2.msra.mxu0 0.0
    %2352 = vmatprep.subr.mxu0 0.0
    %2353 = vmatpush2.msra.mxu0 0.0
    %2354 = vmatprep.subr.mxu0 0.0
    %2355 = vmatpush2.msra.mxu0 0.0
    %2356 = vmatprep.subr.mxu0 0.0
    %2357 = vmatpush2.msra.mxu0 0.0
    %2358 = vmatprep.subr.mxu0 0.0
    %2359 = vmatpush2.msra.mxu0 0.0
    %2360 = vmatprep.subr.mxu0 0.0
    %2361 = vmatpush2.msra.mxu0 0.0
    %2362 = vmatprep.subr.mxu0 0.0
    %2363 = vmatpush2.msra.mxu0 0.0
    %2364 = vmatprep.mubr.f32.mxu0 0.0
    %2365 = vmatmul.mubr.f32.gmra.mxu0 %v2126
    %v2366 = vpop.f32.mrf.mxu0
    %v2367 = vadd.f32 %v904, %v2366
    %v2368 = vpop.f32.mrf.mxu0
    %v2369 = vadd.f32 %v908, %v2368
    %2370 = vdwg.mxu0
    %2371 = vmatprep.subr.mxu0 0.0
    %2372 = vmatpush1.msra.mxu0 %v706
    %2373 = vmatprep.subr.mxu0 0.0
    %2374 = vmatpush1.msra.mxu0 %v703
    %2375 = vmatprep.subr.mxu0 0.0
    %2376 = vmatpush1.msra.mxu0 %v700
    %2377 = vmatprep.subr.mxu0 0.0
    %2378 = vmatpush1.msra.mxu0 %v697
    %2379 = vmatprep.subr.mxu0 0.0
    %2380 = vmatpush1.msra.mxu0 %v694
    %2381 = vmatprep.subr.mxu0 0.0
    %2382 = vmatpush1.msra.mxu0 %v691
    %2383 = vmatprep.subr.mxu0 0.0
    %2384 = vmatpush1.msra.mxu0 %v688
    %2385 = vmatprep.subr.mxu0 0.0
    %2386 = vmatpush1.msra.mxu0 %v685
    %2387 = vmatprep.subr.mxu0 0.0
    %2388 = vmatpush1.msra.mxu0 %v682
    %2389 = vmatprep.subr.mxu0 0.0
    %2390 = vmatpush1.msra.mxu0 %v679
    %2391 = vmatprep.subr.mxu0 0.0
    %2392 = vmatpush1.msra.mxu0 %v676
    %2393 = vmatprep.subr.mxu0 0.0
    %2394 = vmatpush1.msra.mxu0 %v673
    %2395 = vmatprep.subr.mxu0 0.0
    %2396 = vmatpush1.msra.mxu0 %v670
    %2397 = vmatprep.subr.mxu0 0.0
    %2398 = vmatpush1.msra.mxu0 %v667
    %2399 = vmatprep.subr.mxu0 0.0
    %2400 = vmatpush1.msra.mxu0 %v664
    %2401 = vmatprep.subr.mxu0 0.0
    %2402 = vmatpush1.msra.mxu0 %v661
    %2403 = vmatprep.subr.mxu0 0.0
    %2404 = vmatpush2.msra.mxu0 0.0
    %2405 = vmatprep.subr.mxu0 0.0
    %2406 = vmatpush2.msra.mxu0 0.0
    %2407 = vmatprep.subr.mxu0 0.0
    %2408 = vmatpush2.msra.mxu0 0.0
    %2409 = vmatprep.subr.mxu0 0.0
    %2410 = vmatpush2.msra.mxu0 0.0
    %2411 = vmatprep.subr.mxu0 0.0
    %2412 = vmatpush2.msra.mxu0 0.0
    %2413 = vmatprep.subr.mxu0 0.0
    %2414 = vmatpush2.msra.mxu0 0.0
    %2415 = vmatprep.subr.mxu0 0.0
    %2416 = vmatpush2.msra.mxu0 0.0
    %2417 = vmatprep.subr.mxu0 0.0
    %2418 = vmatpush2.msra.mxu0 0.0
    %2419 = vmatprep.subr.mxu0 0.0
    %2420 = vmatpush2.msra.mxu0 0.0
    %2421 = vmatprep.subr.mxu0 0.0
    %2422 = vmatpush2.msra.mxu0 0.0
    %2423 = vmatprep.subr.mxu0 0.0
    %2424 = vmatpush2.msra.mxu0 0.0
    %2425 = vmatprep.subr.mxu0 0.0
    %2426 = vmatpush2.msra.mxu0 0.0
    %2427 = vmatprep.subr.mxu0 0.0
    %2428 = vmatpush2.msra.mxu0 0.0
    %2429 = vmatprep.subr.mxu0 0.0
    %2430 = vmatpush2.msra.mxu0 0.0
    %2431 = vmatprep.subr.mxu0 0.0
    %2432 = vmatpush2.msra.mxu0 0.0
    %2433 = vmatprep.subr.mxu0 0.0
    %2434 = vmatpush2.msra.mxu0 0.0
    %2435 = vmatprep.mubr.f32.mxu0 0.0
    %2436 = vmatmul.mubr.f32.gmra.mxu0 %v2126
    %v2437 = vpop.f32.mrf.mxu0
    %v2438 = vadd.f32 %v912, %v2437
    %v2439 = vpop.f32.mrf.mxu0
    %2440 = vdwg.mxu0
    %v2441 = vadd.f32 %v2297, %v2367
    %v2442 = vxor.u32 %v2441, 2147483648
    %v2443 = vmul.f32 %v2442, 1.442695
    %v2444 = vpow.pop %v2443
    %v2445 = vadd.f32 %v2444, 1.0
    %v2446 = vrcp.pop %v2445
    %v2447 = vmul.f32 1.0, %v2446
    %v2448 = vadd.f32 %v2298, %v2369
    %v2449 = vxor.u32 %v2448, 2147483648
    %v2450 = vmul.f32 %v2449, 1.442695
    %v2451 = vpow.pop %v2450
    %v2452 = vadd.f32 %v2451, 1.0
    %v2453 = vrcp.pop %v2452
    %v2454 = vmul.f32 1.0, %v2453
    %v2455 = vmul.f32 %v2447, %v2438
    %v2456 = vadd.f32 %v2299, %v2455
    %v2457 = vtanh.pop %v2456
    %v2458 = vsub.f32 %v2126, %v2457
    %v2459 = vmul.f32 %v2454, %v2458
    %v2460 = vadd.f32 %v2457, %v2459
    %v2461 = vsel %vm1952, %v2460, 0.0
    %v2462 = vsel %vm1952, %v2460, %v2126
    %v2463 = vld [vmem:[%s2129] sm:$0xff]
    %v2464 = vadd.f32 %v2463, %v2295
    %2465 = vst [vmem:[%s2129] sm:$0xff] %v2464
    %v2466 = vld [vmem:[%s2127] sm:$0xff]
    %v2467 = vadd.f32 %v2466, %v2461
    %2468 = vst [vmem:[%s2127] sm:$0xff] %v2467
    %v2469 = vld [vmem:[#allocation2 + $0xf0] sm:$0xff]
    %v2470 = vld [vmem:[#allocation2 + $0xf8] sm:$0xff]
    %v2471 = vld [vmem:[#allocation2 + $0x100] sm:$0xff]
    %2472 = vmatprep.subr.mxu0 %v657
    %2473 = vmatpush1.msra.mxu0 %v656
    %2474 = vmatprep.subr.mxu0 %v654
    %2475 = vmatpush1.msra.mxu0 %v653
    %2476 = vmatprep.subr.mxu0 %v651
    %2477 = vmatpush1.msra.mxu0 %v650
    %2478 = vmatprep.subr.mxu0 %v648
    %2479 = vmatpush1.msra.mxu0 %v647
    %2480 = vmatprep.subr.mxu0 %v645
    %2481 = vmatpush1.msra.mxu0 %v644
    %2482 = vmatprep.subr.mxu0 %v642
    %2483 = vmatpush1.msra.mxu0 %v641
    %2484 = vmatprep.subr.mxu0 %v639
    %2485 = vmatpush1.msra.mxu0 %v638
    %2486 = vmatprep.subr.mxu0 %v636
    %2487 = vmatpush1.msra.mxu0 %v635
    %2488 = vmatprep.subr.mxu0 %v633
    %2489 = vmatpush1.msra.mxu0 %v632
    %2490 = vmatprep.subr.mxu0 %v630
    %2491 = vmatpush1.msra.mxu0 %v629
    %2492 = vmatprep.subr.mxu0 %v627
    %2493 = vmatpush1.msra.mxu0 %v626
    %2494 = vmatprep.subr.mxu0 %v624
    %2495 = vmatpush1.msra.mxu0 %v623
    %2496 = vmatprep.subr.mxu0 %v621
    %2497 = vmatpush1.msra.mxu0 %v620
    %2498 = vmatprep.subr.mxu0 %v618
    %2499 = vmatpush1.msra.mxu0 %v617
    %2500 = vmatprep.subr.mxu0 %v615
    %2501 = vmatpush1.msra.mxu0 %v614
    %2502 = vmatprep.subr.mxu0 %v612
    %2503 = vmatpush1.msra.mxu0 %v611
    %2504 = vmatprep.subr.mxu0 0.0
    %2505 = vmatpush2.msra.mxu0 0.0
    %2506 = vmatprep.subr.mxu0 0.0
    %2507 = vmatpush2.msra.mxu0 0.0
    %2508 = vmatprep.subr.mxu0 0.0
    %2509 = vmatpush2.msra.mxu0 0.0
    %2510 = vmatprep.subr.mxu0 0.0
    %2511 = vmatpush2.msra.mxu0 0.0
    %2512 = vmatprep.subr.mxu0 0.0
    %2513 = vmatpush2.msra.mxu0 0.0
    %2514 = vmatprep.subr.mxu0 0.0
    %2515 = vmatpush2.msra.mxu0 0.0
    %2516 = vmatprep.subr.mxu0 0.0
    %2517 = vmatpush2.msra.mxu0 0.0
    %2518 = vmatprep.subr.mxu0 0.0
    %2519 = vmatpush2.msra.mxu0 0.0
    %2520 = vmatprep.subr.mxu0 0.0
    %2521 = vmatpush2.msra.mxu0 0.0
    %2522 = vmatprep.subr.mxu0 0.0
    %2523 = vmatpush2.msra.mxu0 0.0
    %2524 = vmatprep.subr.mxu0 0.0
    %2525 = vmatpush2.msra.mxu0 0.0
    %2526 = vmatprep.subr.mxu0 0.0
    %2527 = vmatpush2.msra.mxu0 0.0
    %2528 = vmatprep.subr.mxu0 0.0
    %2529 = vmatpush2.msra.mxu0 0.0
    %2530 = vmatprep.subr.mxu0 0.0
    %2531 = vmatpush2.msra.mxu0 0.0
    %2532 = vmatprep.subr.mxu0 0.0
    %2533 = vmatpush2.msra.mxu0 0.0
    %2534 = vmatprep.subr.mxu0 0.0
    %2535 = vmatpush2.msra.mxu0 0.0
    %2536 = vmatprep.mubr.f32.mxu0 0.0
    %2537 = vmatmul.mubr.f32.gmra.mxu0 %v2296
    %v2538 = vpop.f32.mrf.mxu0
    %v2539 = vadd.f32 %v717, %v2538
    %v2540 = vpop.f32.mrf.mxu0
    %v2541 = vadd.f32 %v721, %v2540
    %2542 = vdwg.mxu0
    %2543 = vmatprep.subr.mxu0 0.0
    %2544 = vmatpush1.msra.mxu0 %v658
    %2545 = vmatprep.subr.mxu0 0.0
    %2546 = vmatpush1.msra.mxu0 %v655
    %2547 = vmatprep.subr.mxu0 0.0
    %2548 = vmatpush1.msra.mxu0 %v652
    %2549 = vmatprep.subr.mxu0 0.0
    %2550 = vmatpush1.msra.mxu0 %v649
    %2551 = vmatprep.subr.mxu0 0.0
    %2552 = vmatpush1.msra.mxu0 %v646
    %2553 = vmatprep.subr.mxu0 0.0
    %2554 = vmatpush1.msra.mxu0 %v643
    %2555 = vmatprep.subr.mxu0 0.0
    %2556 = vmatpush1.msra.mxu0 %v640
    %2557 = vmatprep.subr.mxu0 0.0
    %2558 = vmatpush1.msra.mxu0 %v637
    %2559 = vmatprep.subr.mxu0 0.0
    %2560 = vmatpush1.msra.mxu0 %v634
    %2561 = vmatprep.subr.mxu0 0.0
    %2562 = vmatpush1.msra.mxu0 %v631
    %2563 = vmatprep.subr.mxu0 0.0
    %2564 = vmatpush1.msra.mxu0 %v628
    %2565 = vmatprep.subr.mxu0 0.0
    %2566 = vmatpush1.msra.mxu0 %v625
    %2567 = vmatprep.subr.mxu0 0.0
    %2568 = vmatpush1.msra.mxu0 %v622
    %2569 = vmatprep.subr.mxu0 0.0
    %2570 = vmatpush1.msra.mxu0 %v619
    %2571 = vmatprep.subr.mxu0 0.0
    %2572 = vmatpush1.msra.mxu0 %v616
    %2573 = vmatprep.subr.mxu0 0.0
    %2574 = vmatpush1.msra.mxu0 %v613
    %2575 = vmatprep.subr.mxu0 0.0
    %2576 = vmatpush2.msra.mxu0 0.0
    %2577 = vmatprep.subr.mxu0 0.0
    %2578 = vmatpush2.msra.mxu0 0.0
    %2579 = vmatprep.subr.mxu0 0.0
    %2580 = vmatpush2.msra.mxu0 0.0
    %2581 = vmatprep.subr.mxu0 0.0
    %2582 = vmatpush2.msra.mxu0 0.0
    %2583 = vmatprep.subr.mxu0 0.0
    %2584 = vmatpush2.msra.mxu0 0.0
    %2585 = vmatprep.subr.mxu0 0.0
    %2586 = vmatpush2.msra.mxu0 0.0
    %2587 = vmatprep.subr.mxu0 0.0
    %2588 = vmatpush2.msra.mxu0 0.0
    %2589 = vmatprep.subr.mxu0 0.0
    %2590 = vmatpush2.msra.mxu0 0.0
    %2591 = vmatprep.subr.mxu0 0.0
    %2592 = vmatpush2.msra.mxu0 0.0
    %2593 = vmatprep.subr.mxu0 0.0
    %2594 = vmatpush2.msra.mxu0 0.0
    %2595 = vmatprep.subr.mxu0 0.0
    %2596 = vmatpush2.msra.mxu0 0.0
    %2597 = vmatprep.subr.mxu0 0.0
    %2598 = vmatpush2.msra.mxu0 0.0
    %2599 = vmatprep.subr.mxu0 0.0
    %2600 = vmatpush2.msra.mxu0 0.0
    %2601 = vmatprep.subr.mxu0 0.0
    %2602 = vmatpush2.msra.mxu0 0.0
    %2603 = vmatprep.subr.mxu0 0.0
    %2604 = vmatpush2.msra.mxu0 0.0
    %2605 = vmatprep.subr.mxu0 0.0
    %2606 = vmatpush2.msra.mxu0 0.0
    %2607 = vmatprep.mubr.f32.mxu0 0.0
    %2608 = vmatmul.mubr.f32.gmra.mxu0 %v2296
    %v2609 = vpop.f32.mrf.mxu0
    %v2610 = vadd.f32 %v725, %v2609
    %v2611 = vpop.f32.mrf.mxu0
    %2612 = vdwg.mxu0
    %v2613 = vadd.f32 %v2469, %v2539
    %v2614 = vxor.u32 %v2613, 2147483648
    %v2615 = vmul.f32 %v2614, 1.442695
    %v2616 = vpow.pop %v2615
    %v2617 = vadd.f32 %v2616, 1.0
    %v2618 = vrcp.pop %v2617
    %v2619 = vmul.f32 1.0, %v2618
    %v2620 = vadd.f32 %v2470, %v2541
    %v2621 = vxor.u32 %v2620, 2147483648
    %v2622 = vmul.f32 %v2621, 1.442695
    %v2623 = vpow.pop %v2622
    %v2624 = vadd.f32 %v2623, 1.0
    %v2625 = vrcp.pop %v2624
    %v2626 = vmul.f32 1.0, %v2625
    %v2627 = vmul.f32 %v2619, %v2610
    %v2628 = vadd.f32 %v2471, %v2627
    %v2629 = vtanh.pop %v2628
    %v2630 = vsub.f32 %v2296, %v2629
    %v2631 = vmul.f32 %v2626, %v2630
    %v2632 = vadd.f32 %v2629, %v2631
    %v2633 = vsel %vm1776, %v2632, 0.0
    %v2634 = vsel %vm1776, %v2632, %v2296
    %v2635 = vld [vmem:[#allocation2 + $0x78] sm:$0xff]
    %v2636 = vld [vmem:[#allocation2 + $0x80] sm:$0xff]
    %v2637 = vld [vmem:[#allocation2 + $0x88] sm:$0xff]
    %2638 = vmatprep.subr.mxu0 %v705
    %2639 = vmatpush1.msra.mxu0 %v704
    %2640 = vmatprep.subr.mxu0 %v702
    %2641 = vmatpush1.msra.mxu0 %v701
    %2642 = vmatprep.subr.mxu0 %v699
    %2643 = vmatpush1.msra.mxu0 %v698
    %2644 = vmatprep.subr.mxu0 %v696
    %2645 = vmatpush1.msra.mxu0 %v695
    %2646 = vmatprep.subr.mxu0 %v693
    %2647 = vmatpush1.msra.mxu0 %v692
    %2648 = vmatprep.subr.mxu0 %v690
    %2649 = vmatpush1.msra.mxu0 %v689
    %2650 = vmatprep.subr.mxu0 %v687
    %2651 = vmatpush1.msra.mxu0 %v686
    %2652 = vmatprep.subr.mxu0 %v684
    %2653 = vmatpush1.msra.mxu0 %v683
    %2654 = vmatprep.subr.mxu0 %v681
    %2655 = vmatpush1.msra.mxu0 %v680
    %2656 = vmatprep.subr.mxu0 %v678
    %2657 = vmatpush1.msra.mxu0 %v677
    %2658 = vmatprep.subr.mxu0 %v675
    %2659 = vmatpush1.msra.mxu0 %v674
    %2660 = vmatprep.subr.mxu0 %v672
    %2661 = vmatpush1.msra.mxu0 %v671
    %2662 = vmatprep.subr.mxu0 %v669
    %2663 = vmatpush1.msra.mxu0 %v668
    %2664 = vmatprep.subr.mxu0 %v666
    %2665 = vmatpush1.msra.mxu0 %v665
    %2666 = vmatprep.subr.mxu0 %v663
    %2667 = vmatpush1.msra.mxu0 %v662
    %2668 = vmatprep.subr.mxu0 %v660
    %2669 = vmatpush1.msra.mxu0 %v659
    %2670 = vmatprep.subr.mxu0 0.0
    %2671 = vmatpush2.msra.mxu0 0.0
    %2672 = vmatprep.subr.mxu0 0.0
    %2673 = vmatpush2.msra.mxu0 0.0
    %2674 = vmatprep.subr.mxu0 0.0
    %2675 = vmatpush2.msra.mxu0 0.0
    %2676 = vmatprep.subr.mxu0 0.0
    %2677 = vmatpush2.msra.mxu0 0.0
    %2678 = vmatprep.subr.mxu0 0.0
    %2679 = vmatpush2.msra.mxu0 0.0
    %2680 = vmatprep.subr.mxu0 0.0
    %2681 = vmatpush2.msra.mxu0 0.0
    %2682 = vmatprep.subr.mxu0 0.0
    %2683 = vmatpush2.msra.mxu0 0.0
    %2684 = vmatprep.subr.mxu0 0.0
    %2685 = vmatpush2.msra.mxu0 0.0
    %2686 = vmatprep.subr.mxu0 0.0
    %2687 = vmatpush2.msra.mxu0 0.0
    %2688 = vmatprep.subr.mxu0 0.0
    %2689 = vmatpush2.msra.mxu0 0.0
    %2690 = vmatprep.subr.mxu0 0.0
    %2691 = vmatpush2.msra.mxu0 0.0
    %2692 = vmatprep.subr.mxu0 0.0
    %2693 = vmatpush2.msra.mxu0 0.0
    %2694 = vmatprep.subr.mxu0 0.0
    %2695 = vmatpush2.msra.mxu0 0.0
    %2696 = vmatprep.subr.mxu0 0.0
    %2697 = vmatpush2.msra.mxu0 0.0
    %2698 = vmatprep.subr.mxu0 0.0
    %2699 = vmatpush2.msra.mxu0 0.0
    %2700 = vmatprep.subr.mxu0 0.0
    %2701 = vmatpush2.msra.mxu0 0.0
    %2702 = vmatprep.mubr.f32.mxu0 0.0
    %2703 = vmatmul.mubr.f32.gmra.mxu0 %v2462
    %v2704 = vpop.f32.mrf.mxu0
    %v2705 = vadd.f32 %v904, %v2704
    %v2706 = vpop.f32.mrf.mxu0
    %v2707 = vadd.f32 %v908, %v2706
    %2708 = vdwg.mxu0
    %2709 = vmatprep.subr.mxu0 0.0
    %2710 = vmatpush1.msra.mxu0 %v706
    %2711 = vmatprep.subr.mxu0 0.0
    %2712 = vmatpush1.msra.mxu0 %v703
    %2713 = vmatprep.subr.mxu0 0.0
    %2714 = vmatpush1.msra.mxu0 %v700
    %2715 = vmatprep.subr.mxu0 0.0
    %2716 = vmatpush1.msra.mxu0 %v697
    %2717 = vmatprep.subr.mxu0 0.0
    %2718 = vmatpush1.msra.mxu0 %v694
    %2719 = vmatprep.subr.mxu0 0.0
    %2720 = vmatpush1.msra.mxu0 %v691
    %2721 = vmatprep.subr.mxu0 0.0
    %2722 = vmatpush1.msra.mxu0 %v688
    %2723 = vmatprep.subr.mxu0 0.0
    %2724 = vmatpush1.msra.mxu0 %v685
    %2725 = vmatprep.subr.mxu0 0.0
    %2726 = vmatpush1.msra.mxu0 %v682
    %2727 = vmatprep.subr.mxu0 0.0
    %2728 = vmatpush1.msra.mxu0 %v679
    %2729 = vmatprep.subr.mxu0 0.0
    %2730 = vmatpush1.msra.mxu0 %v676
    %2731 = vmatprep.subr.mxu0 0.0
    %2732 = vmatpush1.msra.mxu0 %v673
    %2733 = vmatprep.subr.mxu0 0.0
    %2734 = vmatpush1.msra.mxu0 %v670
    %2735 = vmatprep.subr.mxu0 0.0
    %2736 = vmatpush1.msra.mxu0 %v667
    %2737 = vmatprep.subr.mxu0 0.0
    %2738 = vmatpush1.msra.mxu0 %v664
    %2739 = vmatprep.subr.mxu0 0.0
    %2740 = vmatpush1.msra.mxu0 %v661
    %2741 = vmatprep.subr.mxu0 0.0
    %2742 = vmatpush2.msra.mxu0 0.0
    %2743 = vmatprep.subr.mxu0 0.0
    %2744 = vmatpush2.msra.mxu0 0.0
    %2745 = vmatprep.subr.mxu0 0.0
    %2746 = vmatpush2.msra.mxu0 0.0
    %2747 = vmatprep.subr.mxu0 0.0
    %2748 = vmatpush2.msra.mxu0 0.0
    %2749 = vmatprep.subr.mxu0 0.0
    %2750 = vmatpush2.msra.mxu0 0.0
    %2751 = vmatprep.subr.mxu0 0.0
    %2752 = vmatpush2.msra.mxu0 0.0
    %2753 = vmatprep.subr.mxu0 0.0
    %2754 = vmatpush2.msra.mxu0 0.0
    %2755 = vmatprep.subr.mxu0 0.0
    %2756 = vmatpush2.msra.mxu0 0.0
    %2757 = vmatprep.subr.mxu0 0.0
    %2758 = vmatpush2.msra.mxu0 0.0
    %2759 = vmatprep.subr.mxu0 0.0
    %2760 = vmatpush2.msra.mxu0 0.0
    %2761 = vmatprep.subr.mxu0 0.0
    %2762 = vmatpush2.msra.mxu0 0.0
    %2763 = vmatprep.subr.mxu0 0.0
    %2764 = vmatpush2.msra.mxu0 0.0
    %2765 = vmatprep.subr.mxu0 0.0
    %2766 = vmatpush2.msra.mxu0 0.0
    %2767 = vmatprep.subr.mxu0 0.0
    %2768 = vmatpush2.msra.mxu0 0.0
    %2769 = vmatprep.subr.mxu0 0.0
    %2770 = vmatpush2.msra.mxu0 0.0
    %2771 = vmatprep.subr.mxu0 0.0
    %2772 = vmatpush2.msra.mxu0 0.0
    %2773 = vmatprep.mubr.f32.mxu0 0.0
    %2774 = vmatmul.mubr.f32.gmra.mxu0 %v2462
    %v2775 = vpop.f32.mrf.mxu0
    %v2776 = vadd.f32 %v912, %v2775
    %v2777 = vpop.f32.mrf.mxu0
    %2778 = vdwg.mxu0
    %v2779 = vadd.f32 %v2635, %v2705
    %v2780 = vxor.u32 %v2779, 2147483648
    %v2781 = vmul.f32 %v2780, 1.442695
    %v2782 = vpow.pop %v2781
    %v2783 = vadd.f32 %v2782, 1.0
    %v2784 = vrcp.pop %v2783
    %v2785 = vmul.f32 1.0, %v2784
    %v2786 = vadd.f32 %v2636, %v2707
    %v2787 = vxor.u32 %v2786, 2147483648
    %v2788 = vmul.f32 %v2787, 1.442695
    %v2789 = vpow.pop %v2788
    %v2790 = vadd.f32 %v2789, 1.0
    %v2791 = vrcp.pop %v2790
    %v2792 = vmul.f32 1.0, %v2791
    %v2793 = vmul.f32 %v2785, %v2776
    %v2794 = vadd.f32 %v2637, %v2793
    %v2795 = vtanh.pop %v2794
    %v2796 = vsub.f32 %v2462, %v2795
    %v2797 = vmul.f32 %v2792, %v2796
    %v2798 = vadd.f32 %v2795, %v2797
    %v2799 = vsel %vm1604, %v2798, 0.0
    %v2800 = vsel %vm1604, %v2798, %v2462
    %v2801 = vld [vmem:[%s1781] sm:$0xff]
    %v2802 = vadd.f32 %v2801, %v2633
    %2803 = vst [vmem:[%s1781] sm:$0xff] %v2802
    %v2804 = vld [vmem:[%s1779] sm:$0xff]
    %v2805 = vadd.f32 %v2804, %v2799
    %2806 = vst [vmem:[%s1779] sm:$0xff] %v2805
    %v2807 = vld [vmem:[#allocation2 + $0x120] sm:$0xff]
    %v2808 = vld [vmem:[#allocation2 + $0x128] sm:$0xff]
    %v2809 = vld [vmem:[#allocation2 + $0x130] sm:$0xff]
    %2810 = vmatprep.subr.mxu0 %v657
    %2811 = vmatpush1.msra.mxu0 %v656
    %2812 = vmatprep.subr.mxu0 %v654
    %2813 = vmatpush1.msra.mxu0 %v653
    %2814 = vmatprep.subr.mxu0 %v651
    %2815 = vmatpush1.msra.mxu0 %v650
    %2816 = vmatprep.subr.mxu0 %v648
    %2817 = vmatpush1.msra.mxu0 %v647
    %2818 = vmatprep.subr.mxu0 %v645
    %2819 = vmatpush1.msra.mxu0 %v644
    %2820 = vmatprep.subr.mxu0 %v642
    %2821 = vmatpush1.msra.mxu0 %v641
    %2822 = vmatprep.subr.mxu0 %v639
    %2823 = vmatpush1.msra.mxu0 %v638
    %2824 = vmatprep.subr.mxu0 %v636
    %2825 = vmatpush1.msra.mxu0 %v635
    %2826 = vmatprep.subr.mxu0 %v633
    %2827 = vmatpush1.msra.mxu0 %v632
    %2828 = vmatprep.subr.mxu0 %v630
    %2829 = vmatpush1.msra.mxu0 %v629
    %2830 = vmatprep.subr.mxu0 %v627
    %2831 = vmatpush1.msra.mxu0 %v626
    %2832 = vmatprep.subr.mxu0 %v624
    %2833 = vmatpush1.msra.mxu0 %v623
    %2834 = vmatprep.subr.mxu0 %v621
    %2835 = vmatpush1.msra.mxu0 %v620
    %2836 = vmatprep.subr.mxu0 %v618
    %2837 = vmatpush1.msra.mxu0 %v617
    %2838 = vmatprep.subr.mxu0 %v615
    %2839 = vmatpush1.msra.mxu0 %v614
    %2840 = vmatprep.subr.mxu0 %v612
    %2841 = vmatpush1.msra.mxu0 %v611
    %2842 = vmatprep.subr.mxu0 0.0
    %2843 = vmatpush2.msra.mxu0 0.0
    %2844 = vmatprep.subr.mxu0 0.0
    %2845 = vmatpush2.msra.mxu0 0.0
    %2846 = vmatprep.subr.mxu0 0.0
    %2847 = vmatpush2.msra.mxu0 0.0
    %2848 = vmatprep.subr.mxu0 0.0
    %2849 = vmatpush2.msra.mxu0 0.0
    %2850 = vmatprep.subr.mxu0 0.0
    %2851 = vmatpush2.msra.mxu0 0.0
    %2852 = vmatprep.subr.mxu0 0.0
    %2853 = vmatpush2.msra.mxu0 0.0
    %2854 = vmatprep.subr.mxu0 0.0
    %2855 = vmatpush2.msra.mxu0 0.0
    %2856 = vmatprep.subr.mxu0 0.0
    %2857 = vmatpush2.msra.mxu0 0.0
    %2858 = vmatprep.subr.mxu0 0.0
    %2859 = vmatpush2.msra.mxu0 0.0
    %2860 = vmatprep.subr.mxu0 0.0
    %2861 = vmatpush2.msra.mxu0 0.0
    %2862 = vmatprep.subr.mxu0 0.0
    %2863 = vmatpush2.msra.mxu0 0.0
    %2864 = vmatprep.subr.mxu0 0.0
    %2865 = vmatpush2.msra.mxu0 0.0
    %2866 = vmatprep.subr.mxu0 0.0
    %2867 = vmatpush2.msra.mxu0 0.0
    %2868 = vmatprep.subr.mxu0 0.0
    %2869 = vmatpush2.msra.mxu0 0.0
    %2870 = vmatprep.subr.mxu0 0.0
    %2871 = vmatpush2.msra.mxu0 0.0
    %2872 = vmatprep.subr.mxu0 0.0
    %2873 = vmatpush2.msra.mxu0 0.0
    %2874 = vmatprep.mubr.f32.mxu0 0.0
    %2875 = vmatmul.mubr.f32.gmra.mxu0 %v2634
    %v2876 = vpop.f32.mrf.mxu0
    %v2877 = vadd.f32 %v717, %v2876
    %v2878 = vpop.f32.mrf.mxu0
    %v2879 = vadd.f32 %v721, %v2878
    %2880 = vdwg.mxu0
    %2881 = vmatprep.subr.mxu0 0.0
    %2882 = vmatpush1.msra.mxu0 %v658
    %2883 = vmatprep.subr.mxu0 0.0
    %2884 = vmatpush1.msra.mxu0 %v655
    %2885 = vmatprep.subr.mxu0 0.0
    %2886 = vmatpush1.msra.mxu0 %v652
    %2887 = vmatprep.subr.mxu0 0.0
    %2888 = vmatpush1.msra.mxu0 %v649
    %2889 = vmatprep.subr.mxu0 0.0
    %2890 = vmatpush1.msra.mxu0 %v646
    %2891 = vmatprep.subr.mxu0 0.0
    %2892 = vmatpush1.msra.mxu0 %v643
    %2893 = vmatprep.subr.mxu0 0.0
    %2894 = vmatpush1.msra.mxu0 %v640
    %2895 = vmatprep.subr.mxu0 0.0
    %2896 = vmatpush1.msra.mxu0 %v637
    %2897 = vmatprep.subr.mxu0 0.0
    %2898 = vmatpush1.msra.mxu0 %v634
    %2899 = vmatprep.subr.mxu0 0.0
    %2900 = vmatpush1.msra.mxu0 %v631
    %2901 = vmatprep.subr.mxu0 0.0
    %2902 = vmatpush1.msra.mxu0 %v628
    %2903 = vmatprep.subr.mxu0 0.0
    %2904 = vmatpush1.msra.mxu0 %v625
    %2905 = vmatprep.subr.mxu0 0.0
    %2906 = vmatpush1.msra.mxu0 %v622
    %2907 = vmatprep.subr.mxu0 0.0
    %2908 = vmatpush1.msra.mxu0 %v619
    %2909 = vmatprep.subr.mxu0 0.0
    %2910 = vmatpush1.msra.mxu0 %v616
    %2911 = vmatprep.subr.mxu0 0.0
    %2912 = vmatpush1.msra.mxu0 %v613
    %2913 = vmatprep.subr.mxu0 0.0
    %2914 = vmatpush2.msra.mxu0 0.0
    %2915 = vmatprep.subr.mxu0 0.0
    %2916 = vmatpush2.msra.mxu0 0.0
    %2917 = vmatprep.subr.mxu0 0.0
    %2918 = vmatpush2.msra.mxu0 0.0
    %2919 = vmatprep.subr.mxu0 0.0
    %2920 = vmatpush2.msra.mxu0 0.0
    %2921 = vmatprep.subr.mxu0 0.0
    %2922 = vmatpush2.msra.mxu0 0.0
    %2923 = vmatprep.subr.mxu0 0.0
    %2924 = vmatpush2.msra.mxu0 0.0
    %2925 = vmatprep.subr.mxu0 0.0
    %2926 = vmatpush2.msra.mxu0 0.0
    %2927 = vmatprep.subr.mxu0 0.0
    %2928 = vmatpush2.msra.mxu0 0.0
    %2929 = vmatprep.subr.mxu0 0.0
    %2930 = vmatpush2.msra.mxu0 0.0
    %2931 = vmatprep.subr.mxu0 0.0
    %2932 = vmatpush2.msra.mxu0 0.0
    %2933 = vmatprep.subr.mxu0 0.0
    %2934 = vmatpush2.msra.mxu0 0.0
    %2935 = vmatprep.subr.mxu0 0.0
    %2936 = vmatpush2.msra.mxu0 0.0
    %2937 = vmatprep.subr.mxu0 0.0
    %2938 = vmatpush2.msra.mxu0 0.0
    %2939 = vmatprep.subr.mxu0 0.0
    %2940 = vmatpush2.msra.mxu0 0.0
    %2941 = vmatprep.subr.mxu0 0.0
    %2942 = vmatpush2.msra.mxu0 0.0
    %2943 = vmatprep.subr.mxu0 0.0
    %2944 = vmatpush2.msra.mxu0 0.0
    %2945 = vmatprep.mubr.f32.mxu0 0.0
    %2946 = vmatmul.mubr.f32.gmra.mxu0 %v2634
    %v2947 = vpop.f32.mrf.mxu0
    %v2948 = vadd.f32 %v725, %v2947
    %v2949 = vpop.f32.mrf.mxu0
    %2950 = vdwg.mxu0
    %v2951 = vadd.f32 %v2807, %v2877
    %v2952 = vxor.u32 %v2951, 2147483648
    %v2953 = vmul.f32 %v2952, 1.442695
    %v2954 = vpow.pop %v2953
    %v2955 = vadd.f32 %v2954, 1.0
    %v2956 = vrcp.pop %v2955
    %v2957 = vmul.f32 1.0, %v2956
    %v2958 = vadd.f32 %v2808, %v2879
    %v2959 = vxor.u32 %v2958, 2147483648
    %v2960 = vmul.f32 %v2959, 1.442695
    %v2961 = vpow.pop %v2960
    %v2962 = vadd.f32 %v2961, 1.0
    %v2963 = vrcp.pop %v2962
    %v2964 = vmul.f32 1.0, %v2963
    %v2965 = vmul.f32 %v2957, %v2948
    %v2966 = vadd.f32 %v2809, %v2965
    %v2967 = vtanh.pop %v2966
    %v2968 = vsub.f32 %v2634, %v2967
    %v2969 = vmul.f32 %v2964, %v2968
    %v2970 = vadd.f32 %v2967, %v2969
    %v2971 = vsel %vm1428, %v2970, 0.0
    %v2972 = vsel %vm1428, %v2970, %v2634
    %v2973 = vld [vmem:[#allocation2 + $0x48] sm:$0xff]
    %v2974 = vld [vmem:[#allocation2 + $0x50] sm:$0xff]
    %v2975 = vld [vmem:[#allocation2 + $0x58] sm:$0xff]
    %2976 = vmatprep.subr.mxu0 %v705
    %2977 = vmatpush1.msra.mxu0 %v704
    %2978 = vmatprep.subr.mxu0 %v702
    %2979 = vmatpush1.msra.mxu0 %v701
    %2980 = vmatprep.subr.mxu0 %v699
    %2981 = vmatpush1.msra.mxu0 %v698
    %2982 = vmatprep.subr.mxu0 %v696
    %2983 = vmatpush1.msra.mxu0 %v695
    %2984 = vmatprep.subr.mxu0 %v693
    %2985 = vmatpush1.msra.mxu0 %v692
    %2986 = vmatprep.subr.mxu0 %v690
    %2987 = vmatpush1.msra.mxu0 %v689
    %2988 = vmatprep.subr.mxu0 %v687
    %2989 = vmatpush1.msra.mxu0 %v686
    %2990 = vmatprep.subr.mxu0 %v684
    %2991 = vmatpush1.msra.mxu0 %v683
    %2992 = vmatprep.subr.mxu0 %v681
    %2993 = vmatpush1.msra.mxu0 %v680
    %2994 = vmatprep.subr.mxu0 %v678
    %2995 = vmatpush1.msra.mxu0 %v677
    %2996 = vmatprep.subr.mxu0 %v675
    %2997 = vmatpush1.msra.mxu0 %v674
    %2998 = vmatprep.subr.mxu0 %v672
    %2999 = vmatpush1.msra.mxu0 %v671
    %3000 = vmatprep.subr.mxu0 %v669
    %3001 = vmatpush1.msra.mxu0 %v668
    %3002 = vmatprep.subr.mxu0 %v666
    %3003 = vmatpush1.msra.mxu0 %v665
    %3004 = vmatprep.subr.mxu0 %v663
    %3005 = vmatpush1.msra.mxu0 %v662
    %3006 = vmatprep.subr.mxu0 %v660
    %3007 = vmatpush1.msra.mxu0 %v659
    %3008 = vmatprep.subr.mxu0 0.0
    %3009 = vmatpush2.msra.mxu0 0.0
    %3010 = vmatprep.subr.mxu0 0.0
    %3011 = vmatpush2.msra.mxu0 0.0
    %3012 = vmatprep.subr.mxu0 0.0
    %3013 = vmatpush2.msra.mxu0 0.0
    %3014 = vmatprep.subr.mxu0 0.0
    %3015 = vmatpush2.msra.mxu0 0.0
    %3016 = vmatprep.subr.mxu0 0.0
    %3017 = vmatpush2.msra.mxu0 0.0
    %3018 = vmatprep.subr.mxu0 0.0
    %3019 = vmatpush2.msra.mxu0 0.0
    %3020 = vmatprep.subr.mxu0 0.0
    %3021 = vmatpush2.msra.mxu0 0.0
    %3022 = vmatprep.subr.mxu0 0.0
    %3023 = vmatpush2.msra.mxu0 0.0
    %3024 = vmatprep.subr.mxu0 0.0
    %3025 = vmatpush2.msra.mxu0 0.0
    %3026 = vmatprep.subr.mxu0 0.0
    %3027 = vmatpush2.msra.mxu0 0.0
    %3028 = vmatprep.subr.mxu0 0.0
    %3029 = vmatpush2.msra.mxu0 0.0
    %3030 = vmatprep.subr.mxu0 0.0
    %3031 = vmatpush2.msra.mxu0 0.0
    %3032 = vmatprep.subr.mxu0 0.0
    %3033 = vmatpush2.msra.mxu0 0.0
    %3034 = vmatprep.subr.mxu0 0.0
    %3035 = vmatpush2.msra.mxu0 0.0
    %3036 = vmatprep.subr.mxu0 0.0
    %3037 = vmatpush2.msra.mxu0 0.0
    %3038 = vmatprep.subr.mxu0 0.0
    %3039 = vmatpush2.msra.mxu0 0.0
    %3040 = vmatprep.mubr.f32.mxu0 0.0
    %3041 = vmatmul.mubr.f32.gmra.mxu0 %v2800
    %v3042 = vpop.f32.mrf.mxu0
    %v3043 = vadd.f32 %v904, %v3042
    %v3044 = vpop.f32.mrf.mxu0
    %v3045 = vadd.f32 %v908, %v3044
    %3046 = vdwg.mxu0
    %3047 = vmatprep.subr.mxu0 0.0
    %3048 = vmatpush1.msra.mxu0 %v706
    %3049 = vmatprep.subr.mxu0 0.0
    %3050 = vmatpush1.msra.mxu0 %v703
    %3051 = vmatprep.subr.mxu0 0.0
    %3052 = vmatpush1.msra.mxu0 %v700
    %3053 = vmatprep.subr.mxu0 0.0
    %3054 = vmatpush1.msra.mxu0 %v697
    %3055 = vmatprep.subr.mxu0 0.0
    %3056 = vmatpush1.msra.mxu0 %v694
    %3057 = vmatprep.subr.mxu0 0.0
    %3058 = vmatpush1.msra.mxu0 %v691
    %3059 = vmatprep.subr.mxu0 0.0
    %3060 = vmatpush1.msra.mxu0 %v688
    %3061 = vmatprep.subr.mxu0 0.0
    %3062 = vmatpush1.msra.mxu0 %v685
    %3063 = vmatprep.subr.mxu0 0.0
    %3064 = vmatpush1.msra.mxu0 %v682
    %3065 = vmatprep.subr.mxu0 0.0
    %3066 = vmatpush1.msra.mxu0 %v679
    %3067 = vmatprep.subr.mxu0 0.0
    %3068 = vmatpush1.msra.mxu0 %v676
    %3069 = vmatprep.subr.mxu0 0.0
    %3070 = vmatpush1.msra.mxu0 %v673
    %3071 = vmatprep.subr.mxu0 0.0
    %3072 = vmatpush1.msra.mxu0 %v670
    %3073 = vmatprep.subr.mxu0 0.0
    %3074 = vmatpush1.msra.mxu0 %v667
    %3075 = vmatprep.subr.mxu0 0.0
    %3076 = vmatpush1.msra.mxu0 %v664
    %3077 = vmatprep.subr.mxu0 0.0
    %3078 = vmatpush1.msra.mxu0 %v661
    %3079 = vmatprep.subr.mxu0 0.0
    %3080 = vmatpush2.msra.mxu0 0.0
    %3081 = vmatprep.subr.mxu0 0.0
    %3082 = vmatpush2.msra.mxu0 0.0
    %3083 = vmatprep.subr.mxu0 0.0
    %3084 = vmatpush2.msra.mxu0 0.0
    %3085 = vmatprep.subr.mxu0 0.0
    %3086 = vmatpush2.msra.mxu0 0.0
    %3087 = vmatprep.subr.mxu0 0.0
    %3088 = vmatpush2.msra.mxu0 0.0
    %3089 = vmatprep.subr.mxu0 0.0
    %3090 = vmatpush2.msra.mxu0 0.0
    %3091 = vmatprep.subr.mxu0 0.0
    %3092 = vmatpush2.msra.mxu0 0.0
    %3093 = vmatprep.subr.mxu0 0.0
    %3094 = vmatpush2.msra.mxu0 0.0
    %3095 = vmatprep.subr.mxu0 0.0
    %3096 = vmatpush2.msra.mxu0 0.0
    %3097 = vmatprep.subr.mxu0 0.0
    %3098 = vmatpush2.msra.mxu0 0.0
    %3099 = vmatprep.subr.mxu0 0.0
    %3100 = vmatpush2.msra.mxu0 0.0
    %3101 = vmatprep.subr.mxu0 0.0
    %3102 = vmatpush2.msra.mxu0 0.0
    %3103 = vmatprep.subr.mxu0 0.0
    %3104 = vmatpush2.msra.mxu0 0.0
    %3105 = vmatprep.subr.mxu0 0.0
    %3106 = vmatpush2.msra.mxu0 0.0
    %3107 = vmatprep.subr.mxu0 0.0
    %3108 = vmatpush2.msra.mxu0 0.0
    %3109 = vmatprep.subr.mxu0 0.0
    %3110 = vmatpush2.msra.mxu0 0.0
    %3111 = vmatprep.mubr.f32.mxu0 0.0
    %3112 = vmatmul.mubr.f32.gmra.mxu0 %v2800
    %v3113 = vpop.f32.mrf.mxu0
    %v3114 = vadd.f32 %v912, %v3113
    %v3115 = vpop.f32.mrf.mxu0
    %3116 = vdwg.mxu0
    %v3117 = vadd.f32 %v2973, %v3043
    %v3118 = vxor.u32 %v3117, 2147483648
    %v3119 = vmul.f32 %v3118, 1.442695
    %v3120 = vpow.pop %v3119
    %v3121 = vadd.f32 %v3120, 1.0
    %v3122 = vrcp.pop %v3121
    %v3123 = vmul.f32 1.0, %v3122
    %v3124 = vadd.f32 %v2974, %v3045
    %v3125 = vxor.u32 %v3124, 2147483648
    %v3126 = vmul.f32 %v3125, 1.442695
    %v3127 = vpow.pop %v3126
    %v3128 = vadd.f32 %v3127, 1.0
    %v3129 = vrcp.pop %v3128
    %v3130 = vmul.f32 1.0, %v3129
    %v3131 = vmul.f32 %v3123, %v3114
    %v3132 = vadd.f32 %v2975, %v3131
    %v3133 = vtanh.pop %v3132
    %v3134 = vsub.f32 %v2800, %v3133
    %v3135 = vmul.f32 %v3130, %v3134
    %v3136 = vadd.f32 %v3133, %v3135
    %v3137 = vsel %vm1256, %v3136, 0.0
    %v3138 = vsel %vm1256, %v3136, %v2800
    %v3139 = vld [vmem:[%s1433] sm:$0xff]
    %v3140 = vadd.f32 %v3139, %v2971
    %3141 = vst [vmem:[%s1433] sm:$0xff] %v3140
    %v3142 = vld [vmem:[%s1431] sm:$0xff]
    %v3143 = vadd.f32 %v3142, %v3137
    %3144 = vst [vmem:[%s1431] sm:$0xff] %v3143
    %v3145 = vld [vmem:[#allocation2 + $0x150] sm:$0xff]
    %v3146 = vld [vmem:[#allocation2 + $0x158] sm:$0xff]
    %v3147 = vld [vmem:[#allocation2 + $0x160] sm:$0xff]
    %3148 = vmatprep.subr.mxu0 %v657
    %3149 = vmatpush1.msra.mxu0 %v656
    %3150 = vmatprep.subr.mxu0 %v654
    %3151 = vmatpush1.msra.mxu0 %v653
    %3152 = vmatprep.subr.mxu0 %v651
    %3153 = vmatpush1.msra.mxu0 %v650
    %3154 = vmatprep.subr.mxu0 %v648
    %3155 = vmatpush1.msra.mxu0 %v647
    %3156 = vmatprep.subr.mxu0 %v645
    %3157 = vmatpush1.msra.mxu0 %v644
    %3158 = vmatprep.subr.mxu0 %v642
    %3159 = vmatpush1.msra.mxu0 %v641
    %3160 = vmatprep.subr.mxu0 %v639
    %3161 = vmatpush1.msra.mxu0 %v638
    %3162 = vmatprep.subr.mxu0 %v636
    %3163 = vmatpush1.msra.mxu0 %v635
    %3164 = vmatprep.subr.mxu0 %v633
    %3165 = vmatpush1.msra.mxu0 %v632
    %3166 = vmatprep.subr.mxu0 %v630
    %3167 = vmatpush1.msra.mxu0 %v629
    %3168 = vmatprep.subr.mxu0 %v627
    %3169 = vmatpush1.msra.mxu0 %v626
    %3170 = vmatprep.subr.mxu0 %v624
    %3171 = vmatpush1.msra.mxu0 %v623
    %3172 = vmatprep.subr.mxu0 %v621
    %3173 = vmatpush1.msra.mxu0 %v620
    %3174 = vmatprep.subr.mxu0 %v618
    %3175 = vmatpush1.msra.mxu0 %v617
    %3176 = vmatprep.subr.mxu0 %v615
    %3177 = vmatpush1.msra.mxu0 %v614
    %3178 = vmatprep.subr.mxu0 %v612
    %3179 = vmatpush1.msra.mxu0 %v611
    %3180 = vmatprep.subr.mxu0 0.0
    %3181 = vmatpush2.msra.mxu0 0.0
    %3182 = vmatprep.subr.mxu0 0.0
    %3183 = vmatpush2.msra.mxu0 0.0
    %3184 = vmatprep.subr.mxu0 0.0
    %3185 = vmatpush2.msra.mxu0 0.0
    %3186 = vmatprep.subr.mxu0 0.0
    %3187 = vmatpush2.msra.mxu0 0.0
    %3188 = vmatprep.subr.mxu0 0.0
    %3189 = vmatpush2.msra.mxu0 0.0
    %3190 = vmatprep.subr.mxu0 0.0
    %3191 = vmatpush2.msra.mxu0 0.0
    %3192 = vmatprep.subr.mxu0 0.0
    %3193 = vmatpush2.msra.mxu0 0.0
    %3194 = vmatprep.subr.mxu0 0.0
    %3195 = vmatpush2.msra.mxu0 0.0
    %3196 = vmatprep.subr.mxu0 0.0
    %3197 = vmatpush2.msra.mxu0 0.0
    %3198 = vmatprep.subr.mxu0 0.0
    %3199 = vmatpush2.msra.mxu0 0.0
    %3200 = vmatprep.subr.mxu0 0.0
    %3201 = vmatpush2.msra.mxu0 0.0
    %3202 = vmatprep.subr.mxu0 0.0
    %3203 = vmatpush2.msra.mxu0 0.0
    %3204 = vmatprep.subr.mxu0 0.0
    %3205 = vmatpush2.msra.mxu0 0.0
    %3206 = vmatprep.subr.mxu0 0.0
    %3207 = vmatpush2.msra.mxu0 0.0
    %3208 = vmatprep.subr.mxu0 0.0
    %3209 = vmatpush2.msra.mxu0 0.0
    %3210 = vmatprep.subr.mxu0 0.0
    %3211 = vmatpush2.msra.mxu0 0.0
    %3212 = vmatprep.mubr.f32.mxu0 0.0
    %3213 = vmatmul.mubr.f32.gmra.mxu0 %v2972
    %v3214 = vpop.f32.mrf.mxu0
    %v3215 = vadd.f32 %v717, %v3214
    %v3216 = vpop.f32.mrf.mxu0
    %v3217 = vadd.f32 %v721, %v3216
    %3218 = vdwg.mxu0
    %3219 = vmatprep.subr.mxu0 0.0
    %3220 = vmatpush1.msra.mxu0 %v658
    %3221 = vmatprep.subr.mxu0 0.0
    %3222 = vmatpush1.msra.mxu0 %v655
    %3223 = vmatprep.subr.mxu0 0.0
    %3224 = vmatpush1.msra.mxu0 %v652
    %3225 = vmatprep.subr.mxu0 0.0
    %3226 = vmatpush1.msra.mxu0 %v649
    %3227 = vmatprep.subr.mxu0 0.0
    %3228 = vmatpush1.msra.mxu0 %v646
    %3229 = vmatprep.subr.mxu0 0.0
    %3230 = vmatpush1.msra.mxu0 %v643
    %3231 = vmatprep.subr.mxu0 0.0
    %3232 = vmatpush1.msra.mxu0 %v640
    %3233 = vmatprep.subr.mxu0 0.0
    %3234 = vmatpush1.msra.mxu0 %v637
    %3235 = vmatprep.subr.mxu0 0.0
    %3236 = vmatpush1.msra.mxu0 %v634
    %3237 = vmatprep.subr.mxu0 0.0
    %3238 = vmatpush1.msra.mxu0 %v631
    %3239 = vmatprep.subr.mxu0 0.0
    %3240 = vmatpush1.msra.mxu0 %v628
    %3241 = vmatprep.subr.mxu0 0.0
    %3242 = vmatpush1.msra.mxu0 %v625
    %3243 = vmatprep.subr.mxu0 0.0
    %3244 = vmatpush1.msra.mxu0 %v622
    %3245 = vmatprep.subr.mxu0 0.0
    %3246 = vmatpush1.msra.mxu0 %v619
    %3247 = vmatprep.subr.mxu0 0.0
    %3248 = vmatpush1.msra.mxu0 %v616
    %3249 = vmatprep.subr.mxu0 0.0
    %3250 = vmatpush1.msra.mxu0 %v613
    %3251 = vmatprep.subr.mxu0 0.0
    %3252 = vmatpush2.msra.mxu0 0.0
    %3253 = vmatprep.subr.mxu0 0.0
    %3254 = vmatpush2.msra.mxu0 0.0
    %3255 = vmatprep.subr.mxu0 0.0
    %3256 = vmatpush2.msra.mxu0 0.0
    %3257 = vmatprep.subr.mxu0 0.0
    %3258 = vmatpush2.msra.mxu0 0.0
    %3259 = vmatprep.subr.mxu0 0.0
    %3260 = vmatpush2.msra.mxu0 0.0
    %3261 = vmatprep.subr.mxu0 0.0
    %3262 = vmatpush2.msra.mxu0 0.0
    %3263 = vmatprep.subr.mxu0 0.0
    %3264 = vmatpush2.msra.mxu0 0.0
    %3265 = vmatprep.subr.mxu0 0.0
    %3266 = vmatpush2.msra.mxu0 0.0
    %3267 = vmatprep.subr.mxu0 0.0
    %3268 = vmatpush2.msra.mxu0 0.0
    %3269 = vmatprep.subr.mxu0 0.0
    %3270 = vmatpush2.msra.mxu0 0.0
    %3271 = vmatprep.subr.mxu0 0.0
    %3272 = vmatpush2.msra.mxu0 0.0
    %3273 = vmatprep.subr.mxu0 0.0
    %3274 = vmatpush2.msra.mxu0 0.0
    %3275 = vmatprep.subr.mxu0 0.0
    %3276 = vmatpush2.msra.mxu0 0.0
    %3277 = vmatprep.subr.mxu0 0.0
    %3278 = vmatpush2.msra.mxu0 0.0
    %3279 = vmatprep.subr.mxu0 0.0
    %3280 = vmatpush2.msra.mxu0 0.0
    %3281 = vmatprep.subr.mxu0 0.0
    %3282 = vmatpush2.msra.mxu0 0.0
    %3283 = vmatprep.mubr.f32.mxu0 0.0
    %3284 = vmatmul.mubr.f32.gmra.mxu0 %v2972
    %v3285 = vpop.f32.mrf.mxu0
    %v3286 = vadd.f32 %v725, %v3285
    %v3287 = vpop.f32.mrf.mxu0
    %3288 = vdwg.mxu0
    %v3289 = vadd.f32 %v3145, %v3215
    %v3290 = vxor.u32 %v3289, 2147483648
    %v3291 = vmul.f32 %v3290, 1.442695
    %v3292 = vpow.pop %v3291
    %v3293 = vadd.f32 %v3292, 1.0
    %v3294 = vrcp.pop %v3293
    %v3295 = vmul.f32 1.0, %v3294
    %v3296 = vadd.f32 %v3146, %v3217
    %v3297 = vxor.u32 %v3296, 2147483648
    %v3298 = vmul.f32 %v3297, 1.442695
    %v3299 = vpow.pop %v3298
    %v3300 = vadd.f32 %v3299, 1.0
    %v3301 = vrcp.pop %v3300
    %v3302 = vmul.f32 1.0, %v3301
    %v3303 = vmul.f32 %v3295, %v3286
    %v3304 = vadd.f32 %v3147, %v3303
    %v3305 = vtanh.pop %v3304
    %v3306 = vsub.f32 %v2972, %v3305
    %v3307 = vmul.f32 %v3302, %v3306
    %v3308 = vadd.f32 %v3305, %v3307
    %v3309 = vsel %vm1082, %v3308, 0.0
    %v3310 = vsel %vm1082, %v3308, %v2972
    %v3311 = vld [vmem:[#allocation2 + $0x18] sm:$0xff]
    %v3312 = vld [vmem:[#allocation2 + $0x20] sm:$0xff]
    %v3313 = vld [vmem:[#allocation2 + $0x28] sm:$0xff]
    %3314 = vmatprep.subr.mxu0 %v705
    %3315 = vmatpush1.msra.mxu0 %v704
    %3316 = vmatprep.subr.mxu0 %v702
    %3317 = vmatpush1.msra.mxu0 %v701
    %3318 = vmatprep.subr.mxu0 %v699
    %3319 = vmatpush1.msra.mxu0 %v698
    %3320 = vmatprep.subr.mxu0 %v696
    %3321 = vmatpush1.msra.mxu0 %v695
    %3322 = vmatprep.subr.mxu0 %v693
    %3323 = vmatpush1.msra.mxu0 %v692
    %3324 = vmatprep.subr.mxu0 %v690
    %3325 = vmatpush1.msra.mxu0 %v689
    %3326 = vmatprep.subr.mxu0 %v687
    %3327 = vmatpush1.msra.mxu0 %v686
    %3328 = vmatprep.subr.mxu0 %v684
    %3329 = vmatpush1.msra.mxu0 %v683
    %3330 = vmatprep.subr.mxu0 %v681
    %3331 = vmatpush1.msra.mxu0 %v680
    %3332 = vmatprep.subr.mxu0 %v678
    %3333 = vmatpush1.msra.mxu0 %v677
    %3334 = vmatprep.subr.mxu0 %v675
    %3335 = vmatpush1.msra.mxu0 %v674
    %3336 = vmatprep.subr.mxu0 %v672
    %3337 = vmatpush1.msra.mxu0 %v671
    %3338 = vmatprep.subr.mxu0 %v669
    %3339 = vmatpush1.msra.mxu0 %v668
    %3340 = vmatprep.subr.mxu0 %v666
    %3341 = vmatpush1.msra.mxu0 %v665
    %3342 = vmatprep.subr.mxu0 %v663
    %3343 = vmatpush1.msra.mxu0 %v662
    %3344 = vmatprep.subr.mxu0 %v660
    %3345 = vmatpush1.msra.mxu0 %v659
    %3346 = vmatprep.subr.mxu0 0.0
    %3347 = vmatpush2.msra.mxu0 0.0
    %3348 = vmatprep.subr.mxu0 0.0
    %3349 = vmatpush2.msra.mxu0 0.0
    %3350 = vmatprep.subr.mxu0 0.0
    %3351 = vmatpush2.msra.mxu0 0.0
    %3352 = vmatprep.subr.mxu0 0.0
    %3353 = vmatpush2.msra.mxu0 0.0
    %3354 = vmatprep.subr.mxu0 0.0
    %3355 = vmatpush2.msra.mxu0 0.0
    %3356 = vmatprep.subr.mxu0 0.0
    %3357 = vmatpush2.msra.mxu0 0.0
    %3358 = vmatprep.subr.mxu0 0.0
    %3359 = vmatpush2.msra.mxu0 0.0
    %3360 = vmatprep.subr.mxu0 0.0
    %3361 = vmatpush2.msra.mxu0 0.0
    %3362 = vmatprep.subr.mxu0 0.0
    %3363 = vmatpush2.msra.mxu0 0.0
    %3364 = vmatprep.subr.mxu0 0.0
    %3365 = vmatpush2.msra.mxu0 0.0
    %3366 = vmatprep.subr.mxu0 0.0
    %3367 = vmatpush2.msra.mxu0 0.0
    %3368 = vmatprep.subr.mxu0 0.0
    %3369 = vmatpush2.msra.mxu0 0.0
    %3370 = vmatprep.subr.mxu0 0.0
    %3371 = vmatpush2.msra.mxu0 0.0
    %3372 = vmatprep.subr.mxu0 0.0
    %3373 = vmatpush2.msra.mxu0 0.0
    %3374 = vmatprep.subr.mxu0 0.0
    %3375 = vmatpush2.msra.mxu0 0.0
    %3376 = vmatprep.subr.mxu0 0.0
    %3377 = vmatpush2.msra.mxu0 0.0
    %3378 = vmatprep.mubr.f32.mxu0 0.0
    %3379 = vmatmul.mubr.f32.gmra.mxu0 %v3138
    %v3380 = vpop.f32.mrf.mxu0
    %v3381 = vadd.f32 %v904, %v3380
    %v3382 = vpop.f32.mrf.mxu0
    %v3383 = vadd.f32 %v908, %v3382
    %3384 = vdwg.mxu0
    %3385 = vmatprep.subr.mxu0 0.0
    %3386 = vmatpush1.msra.mxu0 %v706
    %3387 = vmatprep.subr.mxu0 0.0
    %3388 = vmatpush1.msra.mxu0 %v703
    %3389 = vmatprep.subr.mxu0 0.0
    %3390 = vmatpush1.msra.mxu0 %v700
    %3391 = vmatprep.subr.mxu0 0.0
    %3392 = vmatpush1.msra.mxu0 %v697
    %3393 = vmatprep.subr.mxu0 0.0
    %3394 = vmatpush1.msra.mxu0 %v694
    %3395 = vmatprep.subr.mxu0 0.0
    %3396 = vmatpush1.msra.mxu0 %v691
    %3397 = vmatprep.subr.mxu0 0.0
    %3398 = vmatpush1.msra.mxu0 %v688
    %3399 = vmatprep.subr.mxu0 0.0
    %3400 = vmatpush1.msra.mxu0 %v685
    %3401 = vmatprep.subr.mxu0 0.0
    %3402 = vmatpush1.msra.mxu0 %v682
    %3403 = vmatprep.subr.mxu0 0.0
    %3404 = vmatpush1.msra.mxu0 %v679
    %3405 = vmatprep.subr.mxu0 0.0
    %3406 = vmatpush1.msra.mxu0 %v676
    %3407 = vmatprep.subr.mxu0 0.0
    %3408 = vmatpush1.msra.mxu0 %v673
    %3409 = vmatprep.subr.mxu0 0.0
    %3410 = vmatpush1.msra.mxu0 %v670
    %3411 = vmatprep.subr.mxu0 0.0
    %3412 = vmatpush1.msra.mxu0 %v667
    %3413 = vmatprep.subr.mxu0 0.0
    %3414 = vmatpush1.msra.mxu0 %v664
    %3415 = vmatprep.subr.mxu0 0.0
    %3416 = vmatpush1.msra.mxu0 %v661
    %3417 = vmatprep.subr.mxu0 0.0
    %3418 = vmatpush2.msra.mxu0 0.0
    %3419 = vmatprep.subr.mxu0 0.0
    %3420 = vmatpush2.msra.mxu0 0.0
    %3421 = vmatprep.subr.mxu0 0.0
    %3422 = vmatpush2.msra.mxu0 0.0
    %3423 = vmatprep.subr.mxu0 0.0
    %3424 = vmatpush2.msra.mxu0 0.0
    %3425 = vmatprep.subr.mxu0 0.0
    %3426 = vmatpush2.msra.mxu0 0.0
    %3427 = vmatprep.subr.mxu0 0.0
    %3428 = vmatpush2.msra.mxu0 0.0
    %3429 = vmatprep.subr.mxu0 0.0
    %3430 = vmatpush2.msra.mxu0 0.0
    %3431 = vmatprep.subr.mxu0 0.0
    %3432 = vmatpush2.msra.mxu0 0.0
    %3433 = vmatprep.subr.mxu0 0.0
    %3434 = vmatpush2.msra.mxu0 0.0
    %3435 = vmatprep.subr.mxu0 0.0
    %3436 = vmatpush2.msra.mxu0 0.0
    %3437 = vmatprep.subr.mxu0 0.0
    %3438 = vmatpush2.msra.mxu0 0.0
    %3439 = vmatprep.subr.mxu0 0.0
    %3440 = vmatpush2.msra.mxu0 0.0
    %3441 = vmatprep.subr.mxu0 0.0
    %3442 = vmatpush2.msra.mxu0 0.0
    %3443 = vmatprep.subr.mxu0 0.0
    %3444 = vmatpush2.msra.mxu0 0.0
    %3445 = vmatprep.subr.mxu0 0.0
    %3446 = vmatpush2.msra.mxu0 0.0
    %3447 = vmatprep.subr.mxu0 0.0
    %3448 = vmatpush2.msra.mxu0 0.0
    %3449 = vmatprep.mubr.f32.mxu0 0.0
    %3450 = vmatmul.mubr.f32.gmra.mxu0 %v3138
    %v3451 = vpop.f32.mrf.mxu0
    %v3452 = vadd.f32 %v912, %v3451
    %v3453 = vpop.f32.mrf.mxu0
    %3454 = vdwg.mxu0
    %v3455 = vadd.f32 %v3311, %v3381
    %v3456 = vxor.u32 %v3455, 2147483648
    %v3457 = vmul.f32 %v3456, 1.442695
    %v3458 = vpow.pop %v3457
    %v3459 = vadd.f32 %v3458, 1.0
    %v3460 = vrcp.pop %v3459
    %v3461 = vmul.f32 1.0, %v3460
    %v3462 = vadd.f32 %v3312, %v3383
    %v3463 = vxor.u32 %v3462, 2147483648
    %v3464 = vmul.f32 %v3463, 1.442695
    %v3465 = vpow.pop %v3464
    %v3466 = vadd.f32 %v3465, 1.0
    %v3467 = vrcp.pop %v3466
    %v3468 = vmul.f32 1.0, %v3467
    %v3469 = vmul.f32 %v3461, %v3452
    %v3470 = vadd.f32 %v3313, %v3469
    %v3471 = vtanh.pop %v3470
    %v3472 = vsub.f32 %v3138, %v3471
    %v3473 = vmul.f32 %v3468, %v3472
    %v3474 = vadd.f32 %v3471, %v3473
    %v3475 = vsel %vm895, %v3474, 0.0
    %v3476 = vsel %vm895, %v3474, %v3138
    %v3477 = vld [vmem:[%s1085] sm:$0xff]
    %v3478 = vadd.f32 %v3477, %v3309
    %3479 = vst [vmem:[%s1085] sm:$0xff] %v3478
    %v3480 = vld [vmem:[#allocation11] sm:$0xff]
    %v3481 = vadd.f32 %v3480, %v3475
    %3482 = vst [vmem:[#allocation11] sm:$0xff] %v3481
    %3483 = vst [vmem:[#allocation12] sm:$0xff] %v3310
    %s3484 = scalar_lea.vmem [#allocation12], 8
    %3485 = vst [vmem:[%s3484] sm:$0xff] %v3476
    // Predicated region
    $region50: #{tpu_custom_call.1} parent=1 // pred_check
      _
    $region51: #{tpu_custom_call.1} parent=1 // pred_check_branch
      %3487 = sbr.rel (0) target = $region53
    $region52: #{tpu_custom_call.1} parent=1 // pred_region
      %s3489 = ssub.s32 1024, 1024
      %3490 = vsyncadd [#allocation5], %s3489
      %s3491 = sshll.u32 [#allocation11], 4
      %s3492 = int_to_ptr.vmem [resolvable:$true] %s3491
      %3497 = dma.vmem_to_hbm [thread:$0]  %s3492, 1024, %s8, [#allocation5], 128, 128, 8
    $region53: #{tpu_custom_call.1} parent=1 // pred_fallthru
      _
    // Predicated region
    $region54: #{tpu_custom_call.1} parent=1 // pred_check
      _
    $region55: #{tpu_custom_call.1} parent=1 // pred_check_branch
      %3499 = sbr.rel (0) target = $region57
    $region56: #{tpu_custom_call.1} parent=1 // pred_region
      %s3501 = ssub.s32 256, 256
      %3502 = vsyncadd [#allocation13], %s3501
      %s3503 = sshll.u32 [#allocation12], 4
      %s3504 = int_to_ptr.vmem [resolvable:$true] %s3503
      %3509 = dma.vmem_to_hbm [thread:$0]  %s3504, 256, %s9, [#allocation13], 128, 128, 8
    $region57: #{tpu_custom_call.1} parent=1 // pred_fallthru
      _
    // Predicated region
    $region58: #{tpu_custom_call.1} parent=1 // pred_check
      _
    $region59: #{tpu_custom_call.1} parent=1 // pred_check_branch
      %3511 = sbr.rel (0) target = $region61
    $region60: #{tpu_custom_call.1} parent=1 // pred_region
      %3512 = dma.done [#allocation5], 1024
    $region61: #{tpu_custom_call.1} parent=1 // pred_fallthru
      _
    // Predicated region
    $region62: #{tpu_custom_call.1} parent=1 // pred_check
      _
    $region63: #{tpu_custom_call.1} parent=1 // pred_check_branch
      %3514 = sbr.rel (0) target = $region65
    $region64: #{tpu_custom_call.1} parent=1 // pred_region
      %3515 = dma.done [#allocation13], 256
    $region65: #{tpu_custom_call.1} parent=1 // pred_fallthru
      _
    %3516 = vsyncpa [#allocation4], 1
    %3517 = vsyncpa [#allocation7], 1
    %3518 = vsyncpa [#allocation10], 1
    %3519 = vsyncpa [#allocation5], 1
    %3520 = vsyncpa [#allocation13], 1

</llo_original>
